<compile_context>
chip_gen: v7x
topology: tpu7x:2x2x1
jax: 0.10.0
libtpu: 0.0.40
codegen_flags: <defaults>
</compile_context>

<pallas_src>
import math
import functools

import jax
import jax.numpy as jnp
from jax.experimental import pallas as pl
from jax.experimental.pallas import tpu as pltpu


# ---------------------------------------------------------------------------
# Fused kernel: positional encoding + nlayers x transformer-encoder layer
# ---------------------------------------------------------------------------
def _fused_encoder_kernel(
    src_ref,                # (B, S, D)  batch-major slab (relayout in wrapper)
    pe_ref,                 # (S, D)
    w_q_ref, b_q_ref,       # (D, D), (1, D)   q weights pre-scaled by 1/sqrt(hd)
    w_k_ref, b_k_ref,       # (D, D), (1, D)
    w_v_ref, b_v_ref,       # (D, D), (1, D)
    w_out_ref, b_out_ref,   # (D, D), (1, D)
    ln1_g_ref, ln1_b_ref,   # (1, D)
    w1_ref, b1_ref,         # (D, H), (1, H)
    w2_ref, b2_ref,         # (H, D), (1, D)
    ln2_g_ref, ln2_b_ref,   # (1, D)
    o_ref,                  # (B, S, D)
    *,
    nhead,
    nlayers,
    compute_dtype,
    approx_recip,
    eps=1e-5,
):
    B, S, D = src_ref.shape
    hd = D // nhead
    N = B * S
    cd = compute_dtype

    # ---- single lane-dense full-ref load + posenc ---------------------------
    # PE broadcasts over the leading batch dim; (B,S,D)->(B*S,D) is a free
    # leading-dim merge (no lane/sublane relayout).
    x = (src_ref[...].astype(jnp.float32) + pe_ref[...][None, :, :]).reshape(N, D)

    # Weights loaded once, cast once to the MXU operand dtype; identical for
    # every layer (PyTorch _get_clones deepcopy).
    w_q = w_q_ref[...].astype(cd)
    w_k = w_k_ref[...].astype(cd)
    w_v = w_v_ref[...].astype(cd)
    w_o = w_out_ref[...].astype(cd)
    w_1 = w1_ref[...].astype(cd)
    w_2 = w2_ref[...].astype(cd)
    b_q, b_k, b_v = b_q_ref[...], b_k_ref[...], b_v_ref[...]
    b_o = b_out_ref[...]
    b_1, b_2 = b1_ref[...], b2_ref[...]
    ln1_g, ln1_b = ln1_g_ref[...], ln1_b_ref[...]
    ln2_g, ln2_b = ln2_g_ref[...], ln2_b_ref[...]

    def mm(a, w):
        # MXU matmul: operands in compute dtype, fp32 accumulation.
        return jnp.dot(a.astype(cd), w, preferred_element_type=jnp.float32)

    def layer_norm(t, g, b):
        mu = jnp.mean(t, axis=-1, keepdims=True)
        var = jnp.mean((t - mu) ** 2, axis=-1, keepdims=True)   # biased var (PyTorch LN)
        return (t - mu) * jax.lax.rsqrt(var + eps) * g + b

    # nlayers is a small static int -> unrolled Python loop (scheduler visibility).
    # TODO(synk): switch to lax.fori_loop carrying x if nlayers grows past ~4.
    for _ in range(nlayers):
        # ---- multi-head self attention (q pre-scaled via folded weights) ----
        q = mm(x, w_q) + b_q                              # (N, D)
        k = mm(x, w_k) + b_k
        v = mm(x, w_v) + b_v
        q3 = q.reshape(B, S, D)                           # free leading split
        k3 = k.reshape(B, S, D)
        v3 = v.reshape(B, S, D)

        # TODO(synk): replace the per-head loop with one (B*nhead)-batched
        # dot_general when Mosaic supports non-leading batch dims and
        # minor-dim-splitting reshapes for these sub-(8,128) head widths.
        heads = []
        for h in range(nhead):
            lo = h * hd
            qh = q3[..., lo:lo + hd].astype(cd)
            kh = k3[..., lo:lo + hd].astype(cd)
            vh = v3[..., lo:lo + hd].astype(cd)
            s = jnp.einsum("bqe,bke->bqk", qh, kh,
                           preferred_element_type=jnp.float32)        # (B, S, S)
            s = s - jnp.max(s, axis=-1, keepdims=True)
            p = jnp.exp(s)
            denom = jnp.sum(p, axis=-1, keepdims=True)
            if approx_recip:
                p = p * pl.reciprocal(denom, approx=True)             # EUP slot
            else:
                p = p / denom
            heads.append(jnp.einsum("bqk,bke->bqe", p.astype(cd), vh,
                                    preferred_element_type=jnp.float32))
        attn = jnp.concatenate(heads, axis=-1).reshape(N, D)          # concat heads
        attn = mm(attn, w_o) + b_o

        # ---- residual + LayerNorm 1 -----------------------------------------
        y = layer_norm(x + attn, ln1_g, ln1_b)

        # ---- feed-forward (relu) ---------------------------------------------
        h1 = jnp.maximum(mm(y, w_1) + b_1, 0.0)
        ff = mm(h1, w_2) + b_2

        # ---- residual + LayerNorm 2 -----------------------------------------
        x = layer_norm(y + ff, ln2_g, ln2_b)

    # ---- single lane-dense full-ref store ------------------------------------
    o_ref[...] = x.reshape(B, S, D).astype(o_ref.dtype)


# ---------------------------------------------------------------------------
# Wrapper
# ---------------------------------------------------------------------------
@functools.partial(
    jax.jit,
    static_argnames=("nhead", "nlayers", "compute_dtype", "approx_softmax_recip"),
)
def transformer_model_encoder(src, params, *, nhead, nlayers,
                              compute_dtype=jnp.bfloat16,
                              approx_softmax_recip=True):
    """src: (S, B, D), dim 0 is the attention-sequence dim (PyTorch batch_first=False).

    Returns (S, B, D). Dropout = identity (eval mode). Set
    compute_dtype=jnp.float32 and approx_softmax_recip=False for a bit-faithful
    fp32 comparison against the PyTorch reference.
    """
    S, B, D = src.shape
    assert D % nhead == 0, "ninp must be divisible by nhead"
    hd = D // nhead
    pe = params["pe"][:S]                                  # (S, D)

    # Layout plumbing done once in XLA/HBM so the kernel does lane-dense,
    # contiguous full-ref loads/stores.
    src_bsd = jnp.transpose(src, (1, 0, 2))                # (B, S, D)

    # Split in_proj into q/k/v and fold the 1/sqrt(hd) scale into the q path.
    w_in, b_in = params["w_in"], params["b_in"]            # (D, 3D), (1, 3D)
    scale = 1.0 / math.sqrt(hd)
    w_q, w_k, w_v = w_in[:, :D] * scale, w_in[:, D:2 * D], w_in[:, 2 * D:]
    b_q, b_k, b_v = b_in[:, :D] * scale, b_in[:, D:2 * D], b_in[:, 2 * D:]

    kernel = functools.partial(
        _fused_encoder_kernel,
        nhead=nhead, nlayers=nlayers,
        compute_dtype=compute_dtype, approx_recip=approx_softmax_recip,
    )
    out_bsd = pl.pallas_call(
        kernel,
        out_shape=jax.ShapeDtypeStruct((B, S, D), src.dtype),
        # Toy sizes need < 1 MiB; when scaling D/H keep this well under the
        # v7x 64 MiB/TC physical VMEM (≈48–56 MiB ceiling).
        compiler_params=pltpu.CompilerParams(vmem_limit_bytes=32 * 1024 * 1024),
    )(
        src_bsd, pe,
        w_q, b_q, w_k, b_k, w_v, b_v,
        params["w_out"], params["b_out"],
        params["ln1_g"], params["ln1_b"],
        params["w1"], params["b1"], params["w2"], params["b2"],
        params["ln2_g"], params["ln2_b"],
    )
    return jnp.transpose(out_bsd, (1, 0, 2))               # back to (S, B, D)


# ---------------------------------------------------------------------------
# Pure-JAX reference of the PyTorch forward (for correctness check)
# ---------------------------------------------------------------------------
def _reference_forward(src, params, *, nhead, nlayers, eps=1e-5):
    S, B, D = src.shape
    hd = D // nhead
    x = jnp.transpose(src + params["pe"][:S][:, None, :], (1, 0, 2))   # (B,S,D)
    w_in, b_in = params["w_in"], params["b_in"][0]
    w_out, b_out = params["w_out"], params["b_out"][0]

    def ln(t, g, b):
        mu = t.mean(-1, keepdims=True)
        var = ((t - mu) ** 2).mean(-1, keepdims=True)
        return (t - mu) * jax.lax.rsqrt(var + eps) * g + b

    for _ in range(nlayers):
        qkv = x @ w_in + b_in
        q, k, v = qkv[..., :D], qkv[..., D:2 * D], qkv[..., 2 * D:]
        q = q.reshape(B, S, nhead, hd).transpose(0, 2, 1, 3) / math.sqrt(hd)
        k = k.reshape(B, S, nhead, hd).transpose(0, 2, 1, 3)
        v = v.reshape(B, S, nhead, hd).transpose(0, 2, 1, 3)
        s = jnp.einsum("bhqe,bhke->bhqk", q, k)
        p = jax.nn.softmax(s, axis=-1)
        o = jnp.einsum("bhqk,bhke->bhqe", p, v)
        o = o.transpose(0, 2, 1, 3).reshape(B, S, D)
        a = o @ w_out + b_out
        x = ln(x + a, params["ln1_g"][0], params["ln1_b"][0])
        f = jnp.maximum(x @ params["w1"] + params["b1"][0], 0.0)
        f = f @ params["w2"] + params["b2"][0]
        x = ln(x + f, params["ln2_g"][0], params["ln2_b"][0])
    return jnp.transpose(x, (1, 0, 2))                     # (S, B, D)


# ---------------------------------------------------------------------------
# Parameter setup (deterministic, synthetic)
# ---------------------------------------------------------------------------
def make_positional_encoding(max_len, d_model):
    position = jnp.arange(max_len, dtype=jnp.float32)[:, None]
    div_term = jnp.exp(
        jnp.arange(0, d_model, 2, dtype=jnp.float32) * (-math.log(10000.0) / d_model)
    )
    angles = position * div_term
    pe = jnp.zeros((max_len, d_model), jnp.float32)
    pe = pe.at[:, 0::2].set(jnp.sin(angles))
    pe = pe.at[:, 1::2].set(jnp.cos(angles))
    return pe                                              # (max_len, d_model)


def init_params(key, ninp, nhid, max_len=5000):
    D, H = ninp, nhid
    ks = jax.random.split(key, 6)
    scale_in = 1.0 / math.sqrt(D)
    scale_h = 1.0 / math.sqrt(H)
    # NOTE: _get_clones uses deepcopy -> every encoder layer shares identical
    # initial weights, so a single parameter set is reused for all layers.
    return {
        "pe": make_positional_encoding(max_len, D),
        "w_in": jax.random.normal(ks[0], (D, 3 * D), jnp.float32) * scale_in,
        "b_in": jnp.zeros((1, 3 * D), jnp.float32),
        "w_out": jax.random.normal(ks[1], (D, D), jnp.float32) * scale_in,
        "b_out": jnp.zeros((1, D), jnp.float32),
        "ln1_g": jnp.ones((1, D), jnp.float32),
        "ln1_b": jnp.zeros((1, D), jnp.float32),
        "w1": jax.random.normal(ks[2], (D, H), jnp.float32) * scale_in,
        "b1": jax.random.normal(ks[3], (1, H), jnp.float32) * 0.01,
        "w2": jax.random.normal(ks[4], (H, D), jnp.float32) * scale_h,
        "b2": jax.random.normal(ks[5], (1, D), jnp.float32) * 0.01,
        "ln2_g": jnp.ones((1, D), jnp.float32),
        "ln2_b": jnp.zeros((1, D), jnp.float32),
    }


if __name__ == "__main__":
    # Small shapes: ninp=32, nhead=4, nhid=64, nlayers=2; src (S=8, B=2, D=32)
    S, B, D = 8, 2, 32
    NHEAD, NHID, NLAYERS = 4, 64, 2

    key = jax.random.PRNGKey(0)
    k_src, k_par = jax.random.split(key)
    src = jax.random.normal(k_src, (S, B, D), jnp.float32)
    params = init_params(k_par, D, NHID)

    # Exact-math path (fp32 MXU operands, exact softmax division): tight check
    # against the pure-JAX reference of the PyTorch forward.
    out_exact = transformer_model_encoder(
        src, params, nhead=NHEAD, nlayers=NLAYERS,
        compute_dtype=jnp.float32, approx_softmax_recip=False)
    out_exact = jax.block_until_ready(out_exact)
    ref = jax.block_until_ready(
        _reference_forward(src, params, nhead=NHEAD, nlayers=NLAYERS))
    max_err = float(jnp.max(jnp.abs(out_exact - ref)))
    assert max_err < 2e-3, f"kernel/reference mismatch: max abs err = {max_err}"

    # Default fast path: bf16 MXU operands (fp32 accumulate), approx reciprocal.
    out = transformer_model_encoder(src, params, nhead=NHEAD, nlayers=NLAYERS)
    out = jax.block_until_ready(out)
    assert out.shape == (S, B, D), out.shape
    assert bool(jnp.all(jnp.isfinite(out)))
    print("KERNEL_OK")
</pallas_src>

<mosaic_0001>
module attributes {stable_mosaic.version = 11 : i64} {
  func.func @_fused_encoder_kernel(%arg0: memref<2x8x32xf32, #tpu.memory_space<vmem>>, %arg1: memref<8x32xf32, #tpu.memory_space<vmem>>, %arg2: memref<32x32xf32, #tpu.memory_space<vmem>>, %arg3: memref<1x32xf32, #tpu.memory_space<vmem>>, %arg4: memref<32x32xf32, #tpu.memory_space<vmem>>, %arg5: memref<1x32xf32, #tpu.memory_space<vmem>>, %arg6: memref<32x32xf32, #tpu.memory_space<vmem>>, %arg7: memref<1x32xf32, #tpu.memory_space<vmem>>, %arg8: memref<32x32xf32, #tpu.memory_space<vmem>>, %arg9: memref<1x32xf32, #tpu.memory_space<vmem>>, %arg10: memref<1x32xf32, #tpu.memory_space<vmem>>, %arg11: memref<1x32xf32, #tpu.memory_space<vmem>>, %arg12: memref<32x64xf32, #tpu.memory_space<vmem>>, %arg13: memref<1x64xf32, #tpu.memory_space<vmem>>, %arg14: memref<64x32xf32, #tpu.memory_space<vmem>>, %arg15: memref<1x32xf32, #tpu.memory_space<vmem>>, %arg16: memref<1x32xf32, #tpu.memory_space<vmem>>, %arg17: memref<1x32xf32, #tpu.memory_space<vmem>>, %arg18: memref<2x8x32xf32, #tpu.memory_space<vmem>>) attributes {dimension_semantics = [], scalar_prefetch = 0 : i64, scratch_operands = 0 : i64, tpu.core_type = #tpu.core_type<tc>} {
    %c0 = arith.constant 0 : index
    %c0_0 = arith.constant 0 : index
    %c0_1 = arith.constant 0 : index
    %0 = vector.load %arg0[%c0, %c0_0, %c0_1] : memref<2x8x32xf32, #tpu.memory_space<vmem>>, vector<2x8x32xf32>
    %c0_2 = arith.constant 0 : index
    %c0_3 = arith.constant 0 : index
    %1 = vector.load %arg1[%c0_2, %c0_3] : memref<8x32xf32, #tpu.memory_space<vmem>>, vector<8x32xf32>
    %2 = vector.shape_cast %1 : vector<8x32xf32> to vector<1x8x32xf32>
    %3 = vector.broadcast %2 : vector<1x8x32xf32> to vector<2x8x32xf32>
    %4 = arith.addf %0, %3 : vector<2x8x32xf32>
    %5 = vector.shape_cast %4 : vector<2x8x32xf32> to vector<16x32xf32>
    %c0_4 = arith.constant 0 : index
    %c0_5 = arith.constant 0 : index
    %6 = vector.load %arg2[%c0_4, %c0_5] : memref<32x32xf32, #tpu.memory_space<vmem>>, vector<32x32xf32>
    %c0_6 = arith.constant 0 : index
    %c0_7 = arith.constant 0 : index
    %7 = vector.load %arg4[%c0_6, %c0_7] : memref<32x32xf32, #tpu.memory_space<vmem>>, vector<32x32xf32>
    %c0_8 = arith.constant 0 : index
    %c0_9 = arith.constant 0 : index
    %8 = vector.load %arg6[%c0_8, %c0_9] : memref<32x32xf32, #tpu.memory_space<vmem>>, vector<32x32xf32>
    %c0_10 = arith.constant 0 : index
    %c0_11 = arith.constant 0 : index
    %9 = vector.load %arg8[%c0_10, %c0_11] : memref<32x32xf32, #tpu.memory_space<vmem>>, vector<32x32xf32>
    %c0_12 = arith.constant 0 : index
    %c0_13 = arith.constant 0 : index
    %10 = vector.load %arg12[%c0_12, %c0_13] : memref<32x64xf32, #tpu.memory_space<vmem>>, vector<32x64xf32>
    %c0_14 = arith.constant 0 : index
    %c0_15 = arith.constant 0 : index
    %11 = vector.load %arg14[%c0_14, %c0_15] : memref<64x32xf32, #tpu.memory_space<vmem>>, vector<64x32xf32>
    %c0_16 = arith.constant 0 : index
    %c0_17 = arith.constant 0 : index
    %12 = vector.load %arg3[%c0_16, %c0_17] : memref<1x32xf32, #tpu.memory_space<vmem>>, vector<1x32xf32>
    %c0_18 = arith.constant 0 : index
    %c0_19 = arith.constant 0 : index
    %13 = vector.load %arg5[%c0_18, %c0_19] : memref<1x32xf32, #tpu.memory_space<vmem>>, vector<1x32xf32>
    %c0_20 = arith.constant 0 : index
    %c0_21 = arith.constant 0 : index
    %14 = vector.load %arg7[%c0_20, %c0_21] : memref<1x32xf32, #tpu.memory_space<vmem>>, vector<1x32xf32>
    %c0_22 = arith.constant 0 : index
    %c0_23 = arith.constant 0 : index
    %15 = vector.load %arg9[%c0_22, %c0_23] : memref<1x32xf32, #tpu.memory_space<vmem>>, vector<1x32xf32>
    %c0_24 = arith.constant 0 : index
    %c0_25 = arith.constant 0 : index
    %16 = vector.load %arg13[%c0_24, %c0_25] : memref<1x64xf32, #tpu.memory_space<vmem>>, vector<1x64xf32>
    %c0_26 = arith.constant 0 : index
    %c0_27 = arith.constant 0 : index
    %17 = vector.load %arg15[%c0_26, %c0_27] : memref<1x32xf32, #tpu.memory_space<vmem>>, vector<1x32xf32>
    %c0_28 = arith.constant 0 : index
    %c0_29 = arith.constant 0 : index
    %18 = vector.load %arg10[%c0_28, %c0_29] : memref<1x32xf32, #tpu.memory_space<vmem>>, vector<1x32xf32>
    %c0_30 = arith.constant 0 : index
    %c0_31 = arith.constant 0 : index
    %19 = vector.load %arg11[%c0_30, %c0_31] : memref<1x32xf32, #tpu.memory_space<vmem>>, vector<1x32xf32>
    %c0_32 = arith.constant 0 : index
    %c0_33 = arith.constant 0 : index
    %20 = vector.load %arg16[%c0_32, %c0_33] : memref<1x32xf32, #tpu.memory_space<vmem>>, vector<1x32xf32>
    %c0_34 = arith.constant 0 : index
    %c0_35 = arith.constant 0 : index
    %21 = vector.load %arg17[%c0_34, %c0_35] : memref<1x32xf32, #tpu.memory_space<vmem>>, vector<1x32xf32>
    %cst = arith.constant dense<0.000000e+00> : vector<16x32xf32>
    %22 = tpu.matmul %5, %6, %cst {dimension_numbers = #tpu.dot_dimension_numbers<[1], [0], [0], [1], [0, 0, 1, 1], [], []>} : vector<16x32xf32>, vector<32x32xf32>, vector<16x32xf32> -> vector<16x32xf32>
    %23 = vector.broadcast %12 : vector<1x32xf32> to vector<16x32xf32>
    %24 = arith.addf %22, %23 : vector<16x32xf32>
    %cst_36 = arith.constant dense<0.000000e+00> : vector<16x32xf32>
    %25 = tpu.matmul %5, %7, %cst_36 {dimension_numbers = #tpu.dot_dimension_numbers<[1], [0], [0], [1], [0, 0, 1, 1], [], []>} : vector<16x32xf32>, vector<32x32xf32>, vector<16x32xf32> -> vector<16x32xf32>
    %26 = vector.broadcast %13 : vector<1x32xf32> to vector<16x32xf32>
    %27 = arith.addf %25, %26 : vector<16x32xf32>
    %cst_37 = arith.constant dense<0.000000e+00> : vector<16x32xf32>
    %28 = tpu.matmul %5, %8, %cst_37 {dimension_numbers = #tpu.dot_dimension_numbers<[1], [0], [0], [1], [0, 0, 1, 1], [], []>} : vector<16x32xf32>, vector<32x32xf32>, vector<16x32xf32> -> vector<16x32xf32>
    %29 = vector.broadcast %14 : vector<1x32xf32> to vector<16x32xf32>
    %30 = arith.addf %28, %29 : vector<16x32xf32>
    %31 = vector.shape_cast %24 : vector<16x32xf32> to vector<2x8x32xf32>
    %32 = vector.shape_cast %27 : vector<16x32xf32> to vector<2x8x32xf32>
    %33 = vector.shape_cast %30 : vector<16x32xf32> to vector<2x8x32xf32>
    %34 = vector.extract_strided_slice %31 {offsets = [0, 0, 0], sizes = [2, 8, 8], strides = [1, 1, 1]} : vector<2x8x32xf32> to vector<2x8x8xf32>
    %35 = vector.extract_strided_slice %32 {offsets = [0, 0, 0], sizes = [2, 8, 8], strides = [1, 1, 1]} : vector<2x8x32xf32> to vector<2x8x8xf32>
    %36 = vector.extract_strided_slice %33 {offsets = [0, 0, 0], sizes = [2, 8, 8], strides = [1, 1, 1]} : vector<2x8x32xf32> to vector<2x8x8xf32>
    "tpu.trace_start"() <{level = 10 : i32, message = "bqe,bke->bqk"}> : () -> ()
    %cst_38 = arith.constant dense<0.000000e+00> : vector<2x8x8xf32>
    %37 = tpu.matmul %34, %35, %cst_38 {dimension_numbers = #tpu.dot_dimension_numbers<[2], [2], [1], [1], [0, 0, 0, 1, 1, 1], [0], [0]>} : vector<2x8x8xf32>, vector<2x8x8xf32>, vector<2x8x8xf32> -> vector<2x8x8xf32>
    "tpu.trace_stop"() : () -> ()
    %cst_39 = arith.constant dense<0xFF800000> : vector<2x8xf32>
    %38 = vector.multi_reduction <maximumf>, %37, %cst_39 [2] : vector<2x8x8xf32> to vector<2x8xf32>
    %39 = vector.shape_cast %38 : vector<2x8xf32> to vector<2x8x1xf32>
    %40 = vector.broadcast %39 : vector<2x8x1xf32> to vector<2x8x8xf32>
    %41 = arith.subf %37, %40 : vector<2x8x8xf32>
    %42 = math.exp %41 : vector<2x8x8xf32>
    %cst_40 = arith.constant dense<0.000000e+00> : vector<2x8xf32>
    %43 = vector.multi_reduction <add>, %42, %cst_40 [2] : vector<2x8x8xf32> to vector<2x8xf32>
    %44 = vector.shape_cast %43 : vector<2x8xf32> to vector<2x8x1xf32>
    %45 = vector.broadcast %44 : vector<2x8x1xf32> to vector<2x8x8xf32>
    %46 = arith.divf %42, %45 : vector<2x8x8xf32>
    "tpu.trace_start"() <{level = 10 : i32, message = "bqk,bke->bqe"}> : () -> ()
    %cst_41 = arith.constant dense<0.000000e+00> : vector<2x8x8xf32>
    %47 = tpu.matmul %46, %36, %cst_41 {dimension_numbers = #tpu.dot_dimension_numbers<[2], [1], [1], [2], [0, 0, 0, 1, 1, 2], [0], [0]>} : vector<2x8x8xf32>, vector<2x8x8xf32>, vector<2x8x8xf32> -> vector<2x8x8xf32>
    "tpu.trace_stop"() : () -> ()
    %48 = vector.extract_strided_slice %31 {offsets = [0, 0, 8], sizes = [2, 8, 8], strides = [1, 1, 1]} : vector<2x8x32xf32> to vector<2x8x8xf32>
    %49 = vector.extract_strided_slice %32 {offsets = [0, 0, 8], sizes = [2, 8, 8], strides = [1, 1, 1]} : vector<2x8x32xf32> to vector<2x8x8xf32>
    %50 = vector.extract_strided_slice %33 {offsets = [0, 0, 8], sizes = [2, 8, 8], strides = [1, 1, 1]} : vector<2x8x32xf32> to vector<2x8x8xf32>
    "tpu.trace_start"() <{level = 10 : i32, message = "bqe,bke->bqk"}> : () -> ()
    %cst_42 = arith.constant dense<0.000000e+00> : vector<2x8x8xf32>
    %51 = tpu.matmul %48, %49, %cst_42 {dimension_numbers = #tpu.dot_dimension_numbers<[2], [2], [1], [1], [0, 0, 0, 1, 1, 1], [0], [0]>} : vector<2x8x8xf32>, vector<2x8x8xf32>, vector<2x8x8xf32> -> vector<2x8x8xf32>
    "tpu.trace_stop"() : () -> ()
    %cst_43 = arith.constant dense<0xFF800000> : vector<2x8xf32>
    %52 = vector.multi_reduction <maximumf>, %51, %cst_43 [2] : vector<2x8x8xf32> to vector<2x8xf32>
    %53 = vector.shape_cast %52 : vector<2x8xf32> to vector<2x8x1xf32>
    %54 = vector.broadcast %53 : vector<2x8x1xf32> to vector<2x8x8xf32>
    %55 = arith.subf %51, %54 : vector<2x8x8xf32>
    %56 = math.exp %55 : vector<2x8x8xf32>
    %cst_44 = arith.constant dense<0.000000e+00> : vector<2x8xf32>
    %57 = vector.multi_reduction <add>, %56, %cst_44 [2] : vector<2x8x8xf32> to vector<2x8xf32>
    %58 = vector.shape_cast %57 : vector<2x8xf32> to vector<2x8x1xf32>
    %59 = vector.broadcast %58 : vector<2x8x1xf32> to vector<2x8x8xf32>
    %60 = arith.divf %56, %59 : vector<2x8x8xf32>
    "tpu.trace_start"() <{level = 10 : i32, message = "bqk,bke->bqe"}> : () -> ()
    %cst_45 = arith.constant dense<0.000000e+00> : vector<2x8x8xf32>
    %61 = tpu.matmul %60, %50, %cst_45 {dimension_numbers = #tpu.dot_dimension_numbers<[2], [1], [1], [2], [0, 0, 0, 1, 1, 2], [0], [0]>} : vector<2x8x8xf32>, vector<2x8x8xf32>, vector<2x8x8xf32> -> vector<2x8x8xf32>
    "tpu.trace_stop"() : () -> ()
    %62 = vector.extract_strided_slice %31 {offsets = [0, 0, 16], sizes = [2, 8, 8], strides = [1, 1, 1]} : vector<2x8x32xf32> to vector<2x8x8xf32>
    %63 = vector.extract_strided_slice %32 {offsets = [0, 0, 16], sizes = [2, 8, 8], strides = [1, 1, 1]} : vector<2x8x32xf32> to vector<2x8x8xf32>
    %64 = vector.extract_strided_slice %33 {offsets = [0, 0, 16], sizes = [2, 8, 8], strides = [1, 1, 1]} : vector<2x8x32xf32> to vector<2x8x8xf32>
    "tpu.trace_start"() <{level = 10 : i32, message = "bqe,bke->bqk"}> : () -> ()
    %cst_46 = arith.constant dense<0.000000e+00> : vector<2x8x8xf32>
    %65 = tpu.matmul %62, %63, %cst_46 {dimension_numbers = #tpu.dot_dimension_numbers<[2], [2], [1], [1], [0, 0, 0, 1, 1, 1], [0], [0]>} : vector<2x8x8xf32>, vector<2x8x8xf32>, vector<2x8x8xf32> -> vector<2x8x8xf32>
    "tpu.trace_stop"() : () -> ()
    %cst_47 = arith.constant dense<0xFF800000> : vector<2x8xf32>
    %66 = vector.multi_reduction <maximumf>, %65, %cst_47 [2] : vector<2x8x8xf32> to vector<2x8xf32>
    %67 = vector.shape_cast %66 : vector<2x8xf32> to vector<2x8x1xf32>
    %68 = vector.broadcast %67 : vector<2x8x1xf32> to vector<2x8x8xf32>
    %69 = arith.subf %65, %68 : vector<2x8x8xf32>
    %70 = math.exp %69 : vector<2x8x8xf32>
    %cst_48 = arith.constant dense<0.000000e+00> : vector<2x8xf32>
    %71 = vector.multi_reduction <add>, %70, %cst_48 [2] : vector<2x8x8xf32> to vector<2x8xf32>
    %72 = vector.shape_cast %71 : vector<2x8xf32> to vector<2x8x1xf32>
    %73 = vector.broadcast %72 : vector<2x8x1xf32> to vector<2x8x8xf32>
    %74 = arith.divf %70, %73 : vector<2x8x8xf32>
    "tpu.trace_start"() <{level = 10 : i32, message = "bqk,bke->bqe"}> : () -> ()
    %cst_49 = arith.constant dense<0.000000e+00> : vector<2x8x8xf32>
    %75 = tpu.matmul %74, %64, %cst_49 {dimension_numbers = #tpu.dot_dimension_numbers<[2], [1], [1], [2], [0, 0, 0, 1, 1, 2], [0], [0]>} : vector<2x8x8xf32>, vector<2x8x8xf32>, vector<2x8x8xf32> -> vector<2x8x8xf32>
    "tpu.trace_stop"() : () -> ()
    %76 = vector.extract_strided_slice %31 {offsets = [0, 0, 24], sizes = [2, 8, 8], strides = [1, 1, 1]} : vector<2x8x32xf32> to vector<2x8x8xf32>
    %77 = vector.extract_strided_slice %32 {offsets = [0, 0, 24], sizes = [2, 8, 8], strides = [1, 1, 1]} : vector<2x8x32xf32> to vector<2x8x8xf32>
    %78 = vector.extract_strided_slice %33 {offsets = [0, 0, 24], sizes = [2, 8, 8], strides = [1, 1, 1]} : vector<2x8x32xf32> to vector<2x8x8xf32>
    "tpu.trace_start"() <{level = 10 : i32, message = "bqe,bke->bqk"}> : () -> ()
    %cst_50 = arith.constant dense<0.000000e+00> : vector<2x8x8xf32>
    %79 = tpu.matmul %76, %77, %cst_50 {dimension_numbers = #tpu.dot_dimension_numbers<[2], [2], [1], [1], [0, 0, 0, 1, 1, 1], [0], [0]>} : vector<2x8x8xf32>, vector<2x8x8xf32>, vector<2x8x8xf32> -> vector<2x8x8xf32>
    "tpu.trace_stop"() : () -> ()
    %cst_51 = arith.constant dense<0xFF800000> : vector<2x8xf32>
    %80 = vector.multi_reduction <maximumf>, %79, %cst_51 [2] : vector<2x8x8xf32> to vector<2x8xf32>
    %81 = vector.shape_cast %80 : vector<2x8xf32> to vector<2x8x1xf32>
    %82 = vector.broadcast %81 : vector<2x8x1xf32> to vector<2x8x8xf32>
    %83 = arith.subf %79, %82 : vector<2x8x8xf32>
    %84 = math.exp %83 : vector<2x8x8xf32>
    %cst_52 = arith.constant dense<0.000000e+00> : vector<2x8xf32>
    %85 = vector.multi_reduction <add>, %84, %cst_52 [2] : vector<2x8x8xf32> to vector<2x8xf32>
    %86 = vector.shape_cast %85 : vector<2x8xf32> to vector<2x8x1xf32>
    %87 = vector.broadcast %86 : vector<2x8x1xf32> to vector<2x8x8xf32>
    %88 = arith.divf %84, %87 : vector<2x8x8xf32>
    "tpu.trace_start"() <{level = 10 : i32, message = "bqk,bke->bqe"}> : () -> ()
    %cst_53 = arith.constant dense<0.000000e+00> : vector<2x8x8xf32>
    %89 = tpu.matmul %88, %78, %cst_53 {dimension_numbers = #tpu.dot_dimension_numbers<[2], [1], [1], [2], [0, 0, 0, 1, 1, 2], [0], [0]>} : vector<2x8x8xf32>, vector<2x8x8xf32>, vector<2x8x8xf32> -> vector<2x8x8xf32>
    "tpu.trace_stop"() : () -> ()
    %90 = tpu.concatenate %47, %61, %75, %89 in 2 : vector<2x8x8xf32>, vector<2x8x8xf32>, vector<2x8x8xf32>, vector<2x8x8xf32> -> vector<2x8x32xf32>
    %91 = vector.shape_cast %90 : vector<2x8x32xf32> to vector<16x32xf32>
    %cst_54 = arith.constant dense<0.000000e+00> : vector<16x32xf32>
    %92 = tpu.matmul %91, %9, %cst_54 {dimension_numbers = #tpu.dot_dimension_numbers<[1], [0], [0], [1], [0, 0, 1, 1], [], []>} : vector<16x32xf32>, vector<32x32xf32>, vector<16x32xf32> -> vector<16x32xf32>
    %93 = vector.broadcast %15 : vector<1x32xf32> to vector<16x32xf32>
    %94 = arith.addf %92, %93 : vector<16x32xf32>
    %95 = arith.addf %5, %94 : vector<16x32xf32>
    %cst_55 = arith.constant dense<0.000000e+00> : vector<16xf32>
    %96 = vector.multi_reduction <add>, %95, %cst_55 [1] : vector<16x32xf32> to vector<16xf32>
    %97 = vector.shape_cast %96 : vector<16xf32> to vector<16x1xf32>
    %cst_56 = arith.constant 3.200000e+01 : f32
    %98 = vector.broadcast %cst_56 : f32 to vector<16x1xf32>
    %99 = arith.divf %97, %98 : vector<16x1xf32>
    %100 = vector.broadcast %99 : vector<16x1xf32> to vector<16x32xf32>
    %101 = arith.subf %95, %100 : vector<16x32xf32>
    %102 = arith.mulf %101, %101 : vector<16x32xf32>
    %cst_57 = arith.constant dense<0.000000e+00> : vector<16xf32>
    %103 = vector.multi_reduction <add>, %102, %cst_57 [1] : vector<16x32xf32> to vector<16xf32>
    %104 = vector.shape_cast %103 : vector<16xf32> to vector<16x1xf32>
    %cst_58 = arith.constant 3.200000e+01 : f32
    %105 = vector.broadcast %cst_58 : f32 to vector<16x1xf32>
    %106 = arith.divf %104, %105 : vector<16x1xf32>
    %107 = vector.broadcast %99 : vector<16x1xf32> to vector<16x32xf32>
    %108 = arith.subf %95, %107 : vector<16x32xf32>
    %cst_59 = arith.constant 9.99999974E-6 : f32
    %109 = vector.broadcast %cst_59 : f32 to vector<16x1xf32>
    %110 = arith.addf %106, %109 : vector<16x1xf32>
    %111 = math.rsqrt %110 : vector<16x1xf32>
    %112 = vector.broadcast %111 : vector<16x1xf32> to vector<16x32xf32>
    %113 = arith.mulf %108, %112 : vector<16x32xf32>
    %114 = vector.broadcast %18 : vector<1x32xf32> to vector<16x32xf32>
    %115 = arith.mulf %113, %114 : vector<16x32xf32>
    %116 = vector.broadcast %19 : vector<1x32xf32> to vector<16x32xf32>
    %117 = arith.addf %115, %116 : vector<16x32xf32>
    %cst_60 = arith.constant dense<0.000000e+00> : vector<16x64xf32>
    %118 = tpu.matmul %117, %10, %cst_60 {dimension_numbers = #tpu.dot_dimension_numbers<[1], [0], [0], [1], [0, 0, 1, 1], [], []>} : vector<16x32xf32>, vector<32x64xf32>, vector<16x64xf32> -> vector<16x64xf32>
    %119 = vector.broadcast %16 : vector<1x64xf32> to vector<16x64xf32>
    %120 = arith.addf %118, %119 : vector<16x64xf32>
    %cst_61 = arith.constant 0.000000e+00 : f32
    %121 = vector.broadcast %cst_61 : f32 to vector<16x64xf32>
    %122 = arith.maximumf %120, %121 : vector<16x64xf32>
    %cst_62 = arith.constant dense<0.000000e+00> : vector<16x32xf32>
    %123 = tpu.matmul %122, %11, %cst_62 {dimension_numbers = #tpu.dot_dimension_numbers<[1], [0], [0], [1], [0, 0, 1, 1], [], []>} : vector<16x64xf32>, vector<64x32xf32>, vector<16x32xf32> -> vector<16x32xf32>
    %124 = vector.broadcast %17 : vector<1x32xf32> to vector<16x32xf32>
    %125 = arith.addf %123, %124 : vector<16x32xf32>
    %126 = arith.addf %117, %125 : vector<16x32xf32>
    %cst_63 = arith.constant dense<0.000000e+00> : vector<16xf32>
    %127 = vector.multi_reduction <add>, %126, %cst_63 [1] : vector<16x32xf32> to vector<16xf32>
    %128 = vector.shape_cast %127 : vector<16xf32> to vector<16x1xf32>
    %cst_64 = arith.constant 3.200000e+01 : f32
    %129 = vector.broadcast %cst_64 : f32 to vector<16x1xf32>
    %130 = arith.divf %128, %129 : vector<16x1xf32>
    %131 = vector.broadcast %130 : vector<16x1xf32> to vector<16x32xf32>
    %132 = arith.subf %126, %131 : vector<16x32xf32>
    %133 = arith.mulf %132, %132 : vector<16x32xf32>
    %cst_65 = arith.constant dense<0.000000e+00> : vector<16xf32>
    %134 = vector.multi_reduction <add>, %133, %cst_65 [1] : vector<16x32xf32> to vector<16xf32>
    %135 = vector.shape_cast %134 : vector<16xf32> to vector<16x1xf32>
    %cst_66 = arith.constant 3.200000e+01 : f32
    %136 = vector.broadcast %cst_66 : f32 to vector<16x1xf32>
    %137 = arith.divf %135, %136 : vector<16x1xf32>
    %138 = vector.broadcast %130 : vector<16x1xf32> to vector<16x32xf32>
    %139 = arith.subf %126, %138 : vector<16x32xf32>
    %cst_67 = arith.constant 9.99999974E-6 : f32
    %140 = vector.broadcast %cst_67 : f32 to vector<16x1xf32>
    %141 = arith.addf %137, %140 : vector<16x1xf32>
    %142 = math.rsqrt %141 : vector<16x1xf32>
    %143 = vector.broadcast %142 : vector<16x1xf32> to vector<16x32xf32>
    %144 = arith.mulf %139, %143 : vector<16x32xf32>
    %145 = vector.broadcast %20 : vector<1x32xf32> to vector<16x32xf32>
    %146 = arith.mulf %144, %145 : vector<16x32xf32>
    %147 = vector.broadcast %21 : vector<1x32xf32> to vector<16x32xf32>
    %148 = arith.addf %146, %147 : vector<16x32xf32>
    %cst_68 = arith.constant dense<0.000000e+00> : vector<16x32xf32>
    %149 = tpu.matmul %148, %6, %cst_68 {dimension_numbers = #tpu.dot_dimension_numbers<[1], [0], [0], [1], [0, 0, 1, 1], [], []>} : vector<16x32xf32>, vector<32x32xf32>, vector<16x32xf32> -> vector<16x32xf32>
    %150 = vector.broadcast %12 : vector<1x32xf32> to vector<16x32xf32>
    %151 = arith.addf %149, %150 : vector<16x32xf32>
    %cst_69 = arith.constant dense<0.000000e+00> : vector<16x32xf32>
    %152 = tpu.matmul %148, %7, %cst_69 {dimension_numbers = #tpu.dot_dimension_numbers<[1], [0], [0], [1], [0, 0, 1, 1], [], []>} : vector<16x32xf32>, vector<32x32xf32>, vector<16x32xf32> -> vector<16x32xf32>
    %153 = vector.broadcast %13 : vector<1x32xf32> to vector<16x32xf32>
    %154 = arith.addf %152, %153 : vector<16x32xf32>
    %cst_70 = arith.constant dense<0.000000e+00> : vector<16x32xf32>
    %155 = tpu.matmul %148, %8, %cst_70 {dimension_numbers = #tpu.dot_dimension_numbers<[1], [0], [0], [1], [0, 0, 1, 1], [], []>} : vector<16x32xf32>, vector<32x32xf32>, vector<16x32xf32> -> vector<16x32xf32>
    %156 = vector.broadcast %14 : vector<1x32xf32> to vector<16x32xf32>
    %157 = arith.addf %155, %156 : vector<16x32xf32>
    %158 = vector.shape_cast %151 : vector<16x32xf32> to vector<2x8x32xf32>
    %159 = vector.shape_cast %154 : vector<16x32xf32> to vector<2x8x32xf32>
    %160 = vector.shape_cast %157 : vector<16x32xf32> to vector<2x8x32xf32>
    %161 = vector.extract_strided_slice %158 {offsets = [0, 0, 0], sizes = [2, 8, 8], strides = [1, 1, 1]} : vector<2x8x32xf32> to vector<2x8x8xf32>
    %162 = vector.extract_strided_slice %159 {offsets = [0, 0, 0], sizes = [2, 8, 8], strides = [1, 1, 1]} : vector<2x8x32xf32> to vector<2x8x8xf32>
    %163 = vector.extract_strided_slice %160 {offsets = [0, 0, 0], sizes = [2, 8, 8], strides = [1, 1, 1]} : vector<2x8x32xf32> to vector<2x8x8xf32>
    "tpu.trace_start"() <{level = 10 : i32, message = "bqe,bke->bqk"}> : () -> ()
    %cst_71 = arith.constant dense<0.000000e+00> : vector<2x8x8xf32>
    %164 = tpu.matmul %161, %162, %cst_71 {dimension_numbers = #tpu.dot_dimension_numbers<[2], [2], [1], [1], [0, 0, 0, 1, 1, 1], [0], [0]>} : vector<2x8x8xf32>, vector<2x8x8xf32>, vector<2x8x8xf32> -> vector<2x8x8xf32>
    "tpu.trace_stop"() : () -> ()
    %cst_72 = arith.constant dense<0xFF800000> : vector<2x8xf32>
    %165 = vector.multi_reduction <maximumf>, %164, %cst_72 [2] : vector<2x8x8xf32> to vector<2x8xf32>
    %166 = vector.shape_cast %165 : vector<2x8xf32> to vector<2x8x1xf32>
    %167 = vector.broadcast %166 : vector<2x8x1xf32> to vector<2x8x8xf32>
    %168 = arith.subf %164, %167 : vector<2x8x8xf32>
    %169 = math.exp %168 : vector<2x8x8xf32>
    %cst_73 = arith.constant dense<0.000000e+00> : vector<2x8xf32>
    %170 = vector.multi_reduction <add>, %169, %cst_73 [2] : vector<2x8x8xf32> to vector<2x8xf32>
    %171 = vector.shape_cast %170 : vector<2x8xf32> to vector<2x8x1xf32>
    %172 = vector.broadcast %171 : vector<2x8x1xf32> to vector<2x8x8xf32>
    %173 = arith.divf %169, %172 : vector<2x8x8xf32>
    "tpu.trace_start"() <{level = 10 : i32, message = "bqk,bke->bqe"}> : () -> ()
    %cst_74 = arith.constant dense<0.000000e+00> : vector<2x8x8xf32>
    %174 = tpu.matmul %173, %163, %cst_74 {dimension_numbers = #tpu.dot_dimension_numbers<[2], [1], [1], [2], [0, 0, 0, 1, 1, 2], [0], [0]>} : vector<2x8x8xf32>, vector<2x8x8xf32>, vector<2x8x8xf32> -> vector<2x8x8xf32>
    "tpu.trace_stop"() : () -> ()
    %175 = vector.extract_strided_slice %158 {offsets = [0, 0, 8], sizes = [2, 8, 8], strides = [1, 1, 1]} : vector<2x8x32xf32> to vector<2x8x8xf32>
    %176 = vector.extract_strided_slice %159 {offsets = [0, 0, 8], sizes = [2, 8, 8], strides = [1, 1, 1]} : vector<2x8x32xf32> to vector<2x8x8xf32>
    %177 = vector.extract_strided_slice %160 {offsets = [0, 0, 8], sizes = [2, 8, 8], strides = [1, 1, 1]} : vector<2x8x32xf32> to vector<2x8x8xf32>
    "tpu.trace_start"() <{level = 10 : i32, message = "bqe,bke->bqk"}> : () -> ()
    %cst_75 = arith.constant dense<0.000000e+00> : vector<2x8x8xf32>
    %178 = tpu.matmul %175, %176, %cst_75 {dimension_numbers = #tpu.dot_dimension_numbers<[2], [2], [1], [1], [0, 0, 0, 1, 1, 1], [0], [0]>} : vector<2x8x8xf32>, vector<2x8x8xf32>, vector<2x8x8xf32> -> vector<2x8x8xf32>
    "tpu.trace_stop"() : () -> ()
    %cst_76 = arith.constant dense<0xFF800000> : vector<2x8xf32>
    %179 = vector.multi_reduction <maximumf>, %178, %cst_76 [2] : vector<2x8x8xf32> to vector<2x8xf32>
    %180 = vector.shape_cast %179 : vector<2x8xf32> to vector<2x8x1xf32>
    %181 = vector.broadcast %180 : vector<2x8x1xf32> to vector<2x8x8xf32>
    %182 = arith.subf %178, %181 : vector<2x8x8xf32>
    %183 = math.exp %182 : vector<2x8x8xf32>
    %cst_77 = arith.constant dense<0.000000e+00> : vector<2x8xf32>
    %184 = vector.multi_reduction <add>, %183, %cst_77 [2] : vector<2x8x8xf32> to vector<2x8xf32>
    %185 = vector.shape_cast %184 : vector<2x8xf32> to vector<2x8x1xf32>
    %186 = vector.broadcast %185 : vector<2x8x1xf32> to vector<2x8x8xf32>
    %187 = arith.divf %183, %186 : vector<2x8x8xf32>
    "tpu.trace_start"() <{level = 10 : i32, message = "bqk,bke->bqe"}> : () -> ()
    %cst_78 = arith.constant dense<0.000000e+00> : vector<2x8x8xf32>
    %188 = tpu.matmul %187, %177, %cst_78 {dimension_numbers = #tpu.dot_dimension_numbers<[2], [1], [1], [2], [0, 0, 0, 1, 1, 2], [0], [0]>} : vector<2x8x8xf32>, vector<2x8x8xf32>, vector<2x8x8xf32> -> vector<2x8x8xf32>
    "tpu.trace_stop"() : () -> ()
    %189 = vector.extract_strided_slice %158 {offsets = [0, 0, 16], sizes = [2, 8, 8], strides = [1, 1, 1]} : vector<2x8x32xf32> to vector<2x8x8xf32>
    %190 = vector.extract_strided_slice %159 {offsets = [0, 0, 16], sizes = [2, 8, 8], strides = [1, 1, 1]} : vector<2x8x32xf32> to vector<2x8x8xf32>
    %191 = vector.extract_strided_slice %160 {offsets = [0, 0, 16], sizes = [2, 8, 8], strides = [1, 1, 1]} : vector<2x8x32xf32> to vector<2x8x8xf32>
    "tpu.trace_start"() <{level = 10 : i32, message = "bqe,bke->bqk"}> : () -> ()
    %cst_79 = arith.constant dense<0.000000e+00> : vector<2x8x8xf32>
    %192 = tpu.matmul %189, %190, %cst_79 {dimension_numbers = #tpu.dot_dimension_numbers<[2], [2], [1], [1], [0, 0, 0, 1, 1, 1], [0], [0]>} : vector<2x8x8xf32>, vector<2x8x8xf32>, vector<2x8x8xf32> -> vector<2x8x8xf32>
    "tpu.trace_stop"() : () -> ()
    %cst_80 = arith.constant dense<0xFF800000> : vector<2x8xf32>
    %193 = vector.multi_reduction <maximumf>, %192, %cst_80 [2] : vector<2x8x8xf32> to vector<2x8xf32>
    %194 = vector.shape_cast %193 : vector<2x8xf32> to vector<2x8x1xf32>
    %195 = vector.broadcast %194 : vector<2x8x1xf32> to vector<2x8x8xf32>
    %196 = arith.subf %192, %195 : vector<2x8x8xf32>
    %197 = math.exp %196 : vector<2x8x8xf32>
    %cst_81 = arith.constant dense<0.000000e+00> : vector<2x8xf32>
    %198 = vector.multi_reduction <add>, %197, %cst_81 [2] : vector<2x8x8xf32> to vector<2x8xf32>
    %199 = vector.shape_cast %198 : vector<2x8xf32> to vector<2x8x1xf32>
    %200 = vector.broadcast %199 : vector<2x8x1xf32> to vector<2x8x8xf32>
    %201 = arith.divf %197, %200 : vector<2x8x8xf32>
    "tpu.trace_start"() <{level = 10 : i32, message = "bqk,bke->bqe"}> : () -> ()
    %cst_82 = arith.constant dense<0.000000e+00> : vector<2x8x8xf32>
    %202 = tpu.matmul %201, %191, %cst_82 {dimension_numbers = #tpu.dot_dimension_numbers<[2], [1], [1], [2], [0, 0, 0, 1, 1, 2], [0], [0]>} : vector<2x8x8xf32>, vector<2x8x8xf32>, vector<2x8x8xf32> -> vector<2x8x8xf32>
    "tpu.trace_stop"() : () -> ()
    %203 = vector.extract_strided_slice %158 {offsets = [0, 0, 24], sizes = [2, 8, 8], strides = [1, 1, 1]} : vector<2x8x32xf32> to vector<2x8x8xf32>
    %204 = vector.extract_strided_slice %159 {offsets = [0, 0, 24], sizes = [2, 8, 8], strides = [1, 1, 1]} : vector<2x8x32xf32> to vector<2x8x8xf32>
    %205 = vector.extract_strided_slice %160 {offsets = [0, 0, 24], sizes = [2, 8, 8], strides = [1, 1, 1]} : vector<2x8x32xf32> to vector<2x8x8xf32>
    "tpu.trace_start"() <{level = 10 : i32, message = "bqe,bke->bqk"}> : () -> ()
    %cst_83 = arith.constant dense<0.000000e+00> : vector<2x8x8xf32>
    %206 = tpu.matmul %203, %204, %cst_83 {dimension_numbers = #tpu.dot_dimension_numbers<[2], [2], [1], [1], [0, 0, 0, 1, 1, 1], [0], [0]>} : vector<2x8x8xf32>, vector<2x8x8xf32>, vector<2x8x8xf32> -> vector<2x8x8xf32>
    "tpu.trace_stop"() : () -> ()
    %cst_84 = arith.constant dense<0xFF800000> : vector<2x8xf32>
    %207 = vector.multi_reduction <maximumf>, %206, %cst_84 [2] : vector<2x8x8xf32> to vector<2x8xf32>
    %208 = vector.shape_cast %207 : vector<2x8xf32> to vector<2x8x1xf32>
    %209 = vector.broadcast %208 : vector<2x8x1xf32> to vector<2x8x8xf32>
    %210 = arith.subf %206, %209 : vector<2x8x8xf32>
    %211 = math.exp %210 : vector<2x8x8xf32>
    %cst_85 = arith.constant dense<0.000000e+00> : vector<2x8xf32>
    %212 = vector.multi_reduction <add>, %211, %cst_85 [2] : vector<2x8x8xf32> to vector<2x8xf32>
    %213 = vector.shape_cast %212 : vector<2x8xf32> to vector<2x8x1xf32>
    %214 = vector.broadcast %213 : vector<2x8x1xf32> to vector<2x8x8xf32>
    %215 = arith.divf %211, %214 : vector<2x8x8xf32>
    "tpu.trace_start"() <{level = 10 : i32, message = "bqk,bke->bqe"}> : () -> ()
    %cst_86 = arith.constant dense<0.000000e+00> : vector<2x8x8xf32>
    %216 = tpu.matmul %215, %205, %cst_86 {dimension_numbers = #tpu.dot_dimension_numbers<[2], [1], [1], [2], [0, 0, 0, 1, 1, 2], [0], [0]>} : vector<2x8x8xf32>, vector<2x8x8xf32>, vector<2x8x8xf32> -> vector<2x8x8xf32>
    "tpu.trace_stop"() : () -> ()
    %217 = tpu.concatenate %174, %188, %202, %216 in 2 : vector<2x8x8xf32>, vector<2x8x8xf32>, vector<2x8x8xf32>, vector<2x8x8xf32> -> vector<2x8x32xf32>
    %218 = vector.shape_cast %217 : vector<2x8x32xf32> to vector<16x32xf32>
    %cst_87 = arith.constant dense<0.000000e+00> : vector<16x32xf32>
    %219 = tpu.matmul %218, %9, %cst_87 {dimension_numbers = #tpu.dot_dimension_numbers<[1], [0], [0], [1], [0, 0, 1, 1], [], []>} : vector<16x32xf32>, vector<32x32xf32>, vector<16x32xf32> -> vector<16x32xf32>
    %220 = vector.broadcast %15 : vector<1x32xf32> to vector<16x32xf32>
    %221 = arith.addf %219, %220 : vector<16x32xf32>
    %222 = arith.addf %148, %221 : vector<16x32xf32>
    %cst_88 = arith.constant dense<0.000000e+00> : vector<16xf32>
    %223 = vector.multi_reduction <add>, %222, %cst_88 [1] : vector<16x32xf32> to vector<16xf32>
    %224 = vector.shape_cast %223 : vector<16xf32> to vector<16x1xf32>
    %cst_89 = arith.constant 3.200000e+01 : f32
    %225 = vector.broadcast %cst_89 : f32 to vector<16x1xf32>
    %226 = arith.divf %224, %225 : vector<16x1xf32>
    %227 = vector.broadcast %226 : vector<16x1xf32> to vector<16x32xf32>
    %228 = arith.subf %222, %227 : vector<16x32xf32>
    %229 = arith.mulf %228, %228 : vector<16x32xf32>
    %cst_90 = arith.constant dense<0.000000e+00> : vector<16xf32>
    %230 = vector.multi_reduction <add>, %229, %cst_90 [1] : vector<16x32xf32> to vector<16xf32>
    %231 = vector.shape_cast %230 : vector<16xf32> to vector<16x1xf32>
    %cst_91 = arith.constant 3.200000e+01 : f32
    %232 = vector.broadcast %cst_91 : f32 to vector<16x1xf32>
    %233 = arith.divf %231, %232 : vector<16x1xf32>
    %234 = vector.broadcast %226 : vector<16x1xf32> to vector<16x32xf32>
    %235 = arith.subf %222, %234 : vector<16x32xf32>
    %cst_92 = arith.constant 9.99999974E-6 : f32
    %236 = vector.broadcast %cst_92 : f32 to vector<16x1xf32>
    %237 = arith.addf %233, %236 : vector<16x1xf32>
    %238 = math.rsqrt %237 : vector<16x1xf32>
    %239 = vector.broadcast %238 : vector<16x1xf32> to vector<16x32xf32>
    %240 = arith.mulf %235, %239 : vector<16x32xf32>
    %241 = vector.broadcast %18 : vector<1x32xf32> to vector<16x32xf32>
    %242 = arith.mulf %240, %241 : vector<16x32xf32>
    %243 = vector.broadcast %19 : vector<1x32xf32> to vector<16x32xf32>
    %244 = arith.addf %242, %243 : vector<16x32xf32>
    %cst_93 = arith.constant dense<0.000000e+00> : vector<16x64xf32>
    %245 = tpu.matmul %244, %10, %cst_93 {dimension_numbers = #tpu.dot_dimension_numbers<[1], [0], [0], [1], [0, 0, 1, 1], [], []>} : vector<16x32xf32>, vector<32x64xf32>, vector<16x64xf32> -> vector<16x64xf32>
    %246 = vector.broadcast %16 : vector<1x64xf32> to vector<16x64xf32>
    %247 = arith.addf %245, %246 : vector<16x64xf32>
    %cst_94 = arith.constant 0.000000e+00 : f32
    %248 = vector.broadcast %cst_94 : f32 to vector<16x64xf32>
    %249 = arith.maximumf %247, %248 : vector<16x64xf32>
    %cst_95 = arith.constant dense<0.000000e+00> : vector<16x32xf32>
    %250 = tpu.matmul %249, %11, %cst_95 {dimension_numbers = #tpu.dot_dimension_numbers<[1], [0], [0], [1], [0, 0, 1, 1], [], []>} : vector<16x64xf32>, vector<64x32xf32>, vector<16x32xf32> -> vector<16x32xf32>
    %251 = vector.broadcast %17 : vector<1x32xf32> to vector<16x32xf32>
    %252 = arith.addf %250, %251 : vector<16x32xf32>
    %253 = arith.addf %244, %252 : vector<16x32xf32>
    %cst_96 = arith.constant dense<0.000000e+00> : vector<16xf32>
    %254 = vector.multi_reduction <add>, %253, %cst_96 [1] : vector<16x32xf32> to vector<16xf32>
    %255 = vector.shape_cast %254 : vector<16xf32> to vector<16x1xf32>
    %cst_97 = arith.constant 3.200000e+01 : f32
    %256 = vector.broadcast %cst_97 : f32 to vector<16x1xf32>
    %257 = arith.divf %255, %256 : vector<16x1xf32>
    %258 = vector.broadcast %257 : vector<16x1xf32> to vector<16x32xf32>
    %259 = arith.subf %253, %258 : vector<16x32xf32>
    %260 = arith.mulf %259, %259 : vector<16x32xf32>
    %cst_98 = arith.constant dense<0.000000e+00> : vector<16xf32>
    %261 = vector.multi_reduction <add>, %260, %cst_98 [1] : vector<16x32xf32> to vector<16xf32>
    %262 = vector.shape_cast %261 : vector<16xf32> to vector<16x1xf32>
    %cst_99 = arith.constant 3.200000e+01 : f32
    %263 = vector.broadcast %cst_99 : f32 to vector<16x1xf32>
    %264 = arith.divf %262, %263 : vector<16x1xf32>
    %265 = vector.broadcast %257 : vector<16x1xf32> to vector<16x32xf32>
    %266 = arith.subf %253, %265 : vector<16x32xf32>
    %cst_100 = arith.constant 9.99999974E-6 : f32
    %267 = vector.broadcast %cst_100 : f32 to vector<16x1xf32>
    %268 = arith.addf %264, %267 : vector<16x1xf32>
    %269 = math.rsqrt %268 : vector<16x1xf32>
    %270 = vector.broadcast %269 : vector<16x1xf32> to vector<16x32xf32>
    %271 = arith.mulf %266, %270 : vector<16x32xf32>
    %272 = vector.broadcast %20 : vector<1x32xf32> to vector<16x32xf32>
    %273 = arith.mulf %271, %272 : vector<16x32xf32>
    %274 = vector.broadcast %21 : vector<1x32xf32> to vector<16x32xf32>
    %275 = arith.addf %273, %274 : vector<16x32xf32>
    %276 = vector.shape_cast %275 : vector<16x32xf32> to vector<2x8x32xf32>
    %c0_101 = arith.constant 0 : index
    %c0_102 = arith.constant 0 : index
    %c0_103 = arith.constant 0 : index
    %277 = vector.load %arg18[%c0_101, %c0_102, %c0_103] : memref<2x8x32xf32, #tpu.memory_space<vmem>>, vector<2x8x32xf32>
    tpu.vector_store %arg18[%c0_101, %c0_102, %c0_103], %276 {strides = array<i32>} : memref<2x8x32xf32, #tpu.memory_space<vmem>>, vector<2x8x32xf32>,
    return
  }
}

</mosaic_0001>

<llo_original>
// kernel: transformer_model_encoder.1
$region0: #{transformer_model_encoder.1}
  #allocation0 [shape = 'u32[]', space=smem, size = 0x4, offset = 0x4, fixed_abs, tag = 'smem constant byte address 0x4 - core index']
  #allocation1 [shape = 'u32[144,128]{1,0:T(1,128)}', space=vmem, size = 0x12000, scoped, tag = 'internal scratch']
  %s0 = inlined_call_operand.vmem [shape: f32[2,8,32], index: 0, kind: input, shape index: {}]
  %s1 = inlined_call_operand.vmem [shape: f32[8,32], index: 1, kind: input, shape index: {}]
  %s2 = inlined_call_operand.vmem [shape: f32[32,32], index: 2, kind: input, shape index: {}]
  %s3 = inlined_call_operand.vmem [shape: f32[1,32], index: 3, kind: input, shape index: {}]
  %s4 = inlined_call_operand.vmem [shape: f32[32,32], index: 4, kind: input, shape index: {}]
  %s5 = inlined_call_operand.vmem [shape: f32[1,32], index: 5, kind: input, shape index: {}]
  %s6 = inlined_call_operand.vmem [shape: f32[32,32], index: 6, kind: input, shape index: {}]
  %s7 = inlined_call_operand.vmem [shape: f32[1,32], index: 7, kind: input, shape index: {}]
  %s8 = inlined_call_operand.vmem [shape: f32[32,32], index: 8, kind: input, shape index: {}]
  %s9 = inlined_call_operand.vmem [shape: f32[1,32], index: 9, kind: input, shape index: {}]
  %s10 = inlined_call_operand.vmem [shape: f32[1,32], index: 10, kind: input, shape index: {}]
  %s11 = inlined_call_operand.vmem [shape: f32[1,32], index: 11, kind: input, shape index: {}]
  %s12 = inlined_call_operand.vmem [shape: f32[32,64], index: 12, kind: input, shape index: {}]
  %s13 = inlined_call_operand.vmem [shape: f32[1,64], index: 13, kind: input, shape index: {}]
  %s14 = inlined_call_operand.vmem [shape: f32[64,32], index: 14, kind: input, shape index: {}]
  %s15 = inlined_call_operand.vmem [shape: f32[1,32], index: 15, kind: input, shape index: {}]
  %s16 = inlined_call_operand.vmem [shape: f32[1,32], index: 16, kind: input, shape index: {}]
  %s17 = inlined_call_operand.vmem [shape: f32[1,32], index: 17, kind: input, shape index: {}]
  %s18 = inlined_call_operand.vmem [shape: f32[2,8,32], index: 18, kind: output, shape index: {}]
  %s19 = sld [smem:[#allocation0]]
  $region82: #{transformer_model_encoder.1} parent=0
    _
  %s21 = ssub.s32 1, %s19
  %s22 = scalar_select 0, %s21, %s19
  // Predicated region
  $region2: #{transformer_model_encoder.1} parent=0 // pred_check
    _
  $region3: #{transformer_model_encoder.1} parent=0 // pred_check_branch
    %24 = sbr.rel (0) target = $region5
  $region4: #{transformer_model_encoder.1} parent=0 // pred_region
    _
  $region5: #{transformer_model_encoder.1} parent=0 // pred_fallthru
    _
  // Predicated region
  $region6: #{transformer_model_encoder.1} parent=0 // pred_check
    _
  $region7: #{transformer_model_encoder.1} parent=0 // pred_check_branch
    %26 = sbr.rel (0) target = $region9
  $region8: #{transformer_model_encoder.1} parent=0 // pred_region
    _
  $region9: #{transformer_model_encoder.1} parent=0 // pred_fallthru
    _
  // Predicated region
  $region10: #{transformer_model_encoder.1} parent=0 // pred_check
    _
  $region11: #{transformer_model_encoder.1} parent=0 // pred_check_branch
    %28 = sbr.rel (0) target = $region13
  $region12: #{transformer_model_encoder.1} parent=0 // pred_region
    _
  $region13: #{transformer_model_encoder.1} parent=0 // pred_fallthru
    _
  // Predicated region
  $region14: #{transformer_model_encoder.1} parent=0 // pred_check
    _
  $region15: #{transformer_model_encoder.1} parent=0 // pred_check_branch
    %30 = sbr.rel (0) target = $region17
  $region16: #{transformer_model_encoder.1} parent=0 // pred_region
    _
  $region17: #{transformer_model_encoder.1} parent=0 // pred_fallthru
    _
  // Predicated region
  $region18: #{transformer_model_encoder.1} parent=0 // pred_check
    _
  $region19: #{transformer_model_encoder.1} parent=0 // pred_check_branch
    %32 = sbr.rel (0) target = $region21
  $region20: #{transformer_model_encoder.1} parent=0 // pred_region
    _
  $region21: #{transformer_model_encoder.1} parent=0 // pred_fallthru
    _
  // Predicated region
  $region22: #{transformer_model_encoder.1} parent=0 // pred_check
    _
  $region23: #{transformer_model_encoder.1} parent=0 // pred_check_branch
    %34 = sbr.rel (0) target = $region25
  $region24: #{transformer_model_encoder.1} parent=0 // pred_region
    _
  $region25: #{transformer_model_encoder.1} parent=0 // pred_fallthru
    _
  // Predicated region
  $region26: #{transformer_model_encoder.1} parent=0 // pred_check
    _
  $region27: #{transformer_model_encoder.1} parent=0 // pred_check_branch
    %36 = sbr.rel (0) target = $region29
  $region28: #{transformer_model_encoder.1} parent=0 // pred_region
    _
  $region29: #{transformer_model_encoder.1} parent=0 // pred_fallthru
    _
  // Predicated region
  $region30: #{transformer_model_encoder.1} parent=0 // pred_check
    _
  $region31: #{transformer_model_encoder.1} parent=0 // pred_check_branch
    %38 = sbr.rel (0) target = $region33
  $region32: #{transformer_model_encoder.1} parent=0 // pred_region
    _
  $region33: #{transformer_model_encoder.1} parent=0 // pred_fallthru
    _
  // Predicated region
  $region34: #{transformer_model_encoder.1} parent=0 // pred_check
    _
  $region35: #{transformer_model_encoder.1} parent=0 // pred_check_branch
    %40 = sbr.rel (0) target = $region37
  $region36: #{transformer_model_encoder.1} parent=0 // pred_region
    _
  $region37: #{transformer_model_encoder.1} parent=0 // pred_fallthru
    _
  // Predicated region
  $region38: #{transformer_model_encoder.1} parent=0 // pred_check
    _
  $region39: #{transformer_model_encoder.1} parent=0 // pred_check_branch
    %42 = sbr.rel (0) target = $region41
  $region40: #{transformer_model_encoder.1} parent=0 // pred_region
    _
  $region41: #{transformer_model_encoder.1} parent=0 // pred_fallthru
    _
  // Predicated region
  $region42: #{transformer_model_encoder.1} parent=0 // pred_check
    _
  $region43: #{transformer_model_encoder.1} parent=0 // pred_check_branch
    %44 = sbr.rel (0) target = $region45
  $region44: #{transformer_model_encoder.1} parent=0 // pred_region
    _
  $region45: #{transformer_model_encoder.1} parent=0 // pred_fallthru
    _
  // Predicated region
  $region46: #{transformer_model_encoder.1} parent=0 // pred_check
    _
  $region47: #{transformer_model_encoder.1} parent=0 // pred_check_branch
    %46 = sbr.rel (0) target = $region49
  $region48: #{transformer_model_encoder.1} parent=0 // pred_region
    _
  $region49: #{transformer_model_encoder.1} parent=0 // pred_fallthru
    _
  // Predicated region
  $region50: #{transformer_model_encoder.1} parent=0 // pred_check
    _
  $region51: #{transformer_model_encoder.1} parent=0 // pred_check_branch
    %48 = sbr.rel (0) target = $region53
  $region52: #{transformer_model_encoder.1} parent=0 // pred_region
    _
  $region53: #{transformer_model_encoder.1} parent=0 // pred_fallthru
    _
  // Predicated region
  $region54: #{transformer_model_encoder.1} parent=0 // pred_check
    _
  $region55: #{transformer_model_encoder.1} parent=0 // pred_check_branch
    %50 = sbr.rel (0) target = $region57
  $region56: #{transformer_model_encoder.1} parent=0 // pred_region
    _
  $region57: #{transformer_model_encoder.1} parent=0 // pred_fallthru
    _
  // Predicated region
  $region58: #{transformer_model_encoder.1} parent=0 // pred_check
    _
  $region59: #{transformer_model_encoder.1} parent=0 // pred_check_branch
    %52 = sbr.rel (0) target = $region61
  $region60: #{transformer_model_encoder.1} parent=0 // pred_region
    _
  $region61: #{transformer_model_encoder.1} parent=0 // pred_fallthru
    _
  // Predicated region
  $region62: #{transformer_model_encoder.1} parent=0 // pred_check
    _
  $region63: #{transformer_model_encoder.1} parent=0 // pred_check_branch
    %54 = sbr.rel (0) target = $region65
  $region64: #{transformer_model_encoder.1} parent=0 // pred_region
    _
  $region65: #{transformer_model_encoder.1} parent=0 // pred_fallthru
    _
  // Predicated region
  $region66: #{transformer_model_encoder.1} parent=0 // pred_check
    _
  $region67: #{transformer_model_encoder.1} parent=0 // pred_check_branch
    %56 = sbr.rel (0) target = $region69
  $region68: #{transformer_model_encoder.1} parent=0 // pred_region
    _
  $region69: #{transformer_model_encoder.1} parent=0 // pred_fallthru
    _
  // Predicated region
  $region70: #{transformer_model_encoder.1} parent=0 // pred_check
    _
  $region71: #{transformer_model_encoder.1} parent=0 // pred_check_branch
    %58 = sbr.rel (0) target = $region73
  $region72: #{transformer_model_encoder.1} parent=0 // pred_region
    _
  $region73: #{transformer_model_encoder.1} parent=0 // pred_fallthru
    _
  %v59 = vld [vmem:[%s0] sm:$0xff]
  %v60 = vld [vmem:[%s0 + $0x8] sm:$0xff]
  %v61 = vld [vmem:[%s1] sm:$0xff]
  %v62 = vadd.f32 %v59, %v61
  %v63 = vadd.f32 %v60, %v61
  %v64 = vld [vmem:[%s2] sm:$0xff]
  %v65 = vld [vmem:[%s2 + $0x8] sm:$0xff]
  %v66 = vld [vmem:[%s2 + $0x10] sm:$0xff]
  %v67 = vld [vmem:[%s2 + $0x18] sm:$0xff]
  %v68 = vld [vmem:[%s4] sm:$0xff]
  %v69 = vld [vmem:[%s4 + $0x8] sm:$0xff]
  %v70 = vld [vmem:[%s4 + $0x10] sm:$0xff]
  %v71 = vld [vmem:[%s4 + $0x18] sm:$0xff]
  %v72 = vld [vmem:[%s6] sm:$0xff]
  %v73 = vld [vmem:[%s6 + $0x8] sm:$0xff]
  %v74 = vld [vmem:[%s6 + $0x10] sm:$0xff]
  %v75 = vld [vmem:[%s6 + $0x18] sm:$0xff]
  %v76 = vld [vmem:[%s8] sm:$0xff]
  %v77 = vld [vmem:[%s8 + $0x8] sm:$0xff]
  %v78 = vld [vmem:[%s8 + $0x10] sm:$0xff]
  %v79 = vld [vmem:[%s8 + $0x18] sm:$0xff]
  %v80 = vld [vmem:[%s12] sm:$0xff]
  %v81 = vld [vmem:[%s12 + $0x8] sm:$0xff]
  %v82 = vld [vmem:[%s12 + $0x10] sm:$0xff]
  %v83 = vld [vmem:[%s12 + $0x18] sm:$0xff]
  %v84 = vld [vmem:[%s14] sm:$0xff]
  %v85 = vld [vmem:[%s14 + $0x8] sm:$0xff]
  %v86 = vld [vmem:[%s14 + $0x10] sm:$0xff]
  %v87 = vld [vmem:[%s14 + $0x18] sm:$0xff]
  %v88 = vld [vmem:[%s14 + $0x20] sm:$0xff]
  %v89 = vld [vmem:[%s14 + $0x28] sm:$0xff]
  %v90 = vld [vmem:[%s14 + $0x30] sm:$0xff]
  %v91 = vld [vmem:[%s14 + $0x38] sm:$0xff]
  %v92 = vld [vmem:[%s3] sm:$0x1]
  %v93 = vld [vmem:[%s5] sm:$0x1]
  %v94 = vld [vmem:[%s7] sm:$0x1]
  %v95 = vld [vmem:[%s9] sm:$0x1]
  %v96 = vld [vmem:[%s13] sm:$0x1]
  %v97 = vld [vmem:[%s15] sm:$0x1]
  %v98 = vld [vmem:[%s10] sm:$0x1]
  %v99 = vld [vmem:[%s11] sm:$0x1]
  %v100 = vld [vmem:[%s16] sm:$0x1]
  %v101 = vld [vmem:[%s17] sm:$0x1]
  %v103 = vlaneseq
  %v104 = vshrl.u32 %v103, 7
  %v105 = vsub.s32 0, %v104
  %v106 = vrot.slane %v92, %v105
  %vm108 = vcmask 261120
  %v110 = vsel %vm108, %v62, 0
  %v113 = vsel %vm108, %v63, 0
  %115 = vmatprep.subr.mxu0 0.0
  %116 = vmatpush1.msra.mxu0 %v64
  %117 = vmatprep.subr.mxu0 0.0
  %118 = vmatpush1.msra.mxu0 %v65
  %119 = vmatprep.subr.mxu0 0.0
  %120 = vmatpush1.msra.mxu0 %v66
  %121 = vmatprep.subr.mxu0 0.0
  %122 = vmatpush1.msra.mxu0 %v67
  %123 = vmatprep.subr.mxu0 0.0
  %124 = vmatpush1.msra.mxu0 0.0
  %125 = vmatprep.subr.mxu0 0.0
  %126 = vmatpush1.msra.mxu0 0.0
  %127 = vmatprep.subr.mxu0 0.0
  %128 = vmatpush1.msra.mxu0 0.0
  %129 = vmatprep.subr.mxu0 0.0
  %130 = vmatpush1.msra.mxu0 0.0
  %131 = vmatprep.subr.mxu0 0.0
  %132 = vmatpush1.msra.mxu0 0.0
  %133 = vmatprep.subr.mxu0 0.0
  %134 = vmatpush1.msra.mxu0 0.0
  %135 = vmatprep.subr.mxu0 0.0
  %136 = vmatpush1.msra.mxu0 0.0
  %137 = vmatprep.subr.mxu0 0.0
  %138 = vmatpush1.msra.mxu0 0.0
  %139 = vmatprep.subr.mxu0 0.0
  %140 = vmatpush1.msra.mxu0 0.0
  %141 = vmatprep.subr.mxu0 0.0
  %142 = vmatpush1.msra.mxu0 0.0
  %143 = vmatprep.subr.mxu0 0.0
  %144 = vmatpush1.msra.mxu0 0.0
  %145 = vmatprep.subr.mxu0 0.0
  %146 = vmatpush1.msra.mxu0 0.0
  %147 = vmatprep.subr.mxu0 0.0
  %148 = vmatpush1.msra.mxu0 0.0
  %149 = vmatprep.subr.mxu0 0.0
  %150 = vmatpush1.msra.mxu0 0.0
  %151 = vmatprep.subr.mxu0 0.0
  %152 = vmatpush1.msra.mxu0 0.0
  %153 = vmatprep.subr.mxu0 0.0
  %154 = vmatpush1.msra.mxu0 0.0
  %155 = vmatprep.subr.mxu0 0.0
  %156 = vmatpush1.msra.mxu0 0.0
  %157 = vmatprep.subr.mxu0 0.0
  %158 = vmatpush1.msra.mxu0 0.0
  %159 = vmatprep.subr.mxu0 0.0
  %160 = vmatpush1.msra.mxu0 0.0
  %161 = vmatprep.subr.mxu0 0.0
  %162 = vmatpush1.msra.mxu0 0.0
  %163 = vmatprep.subr.mxu0 0.0
  %164 = vmatpush1.msra.mxu0 0.0
  %165 = vmatprep.subr.mxu0 0.0
  %166 = vmatpush1.msra.mxu0 0.0
  %167 = vmatprep.subr.mxu0 0.0
  %168 = vmatpush1.msra.mxu0 0.0
  %169 = vmatprep.subr.mxu0 0.0
  %170 = vmatpush1.msra.mxu0 0.0
  %171 = vmatprep.subr.mxu0 0.0
  %172 = vmatpush1.msra.mxu0 0.0
  %173 = vmatprep.subr.mxu0 0.0
  %174 = vmatpush1.msra.mxu0 0.0
  %175 = vmatprep.subr.mxu0 0.0
  %176 = vmatpush1.msra.mxu0 0.0
  %177 = vmatprep.subr.mxu0 0.0
  %178 = vmatpush1.msra.mxu0 0.0
  %179 = vmatprep.mubr.f32.mxu0 0.0
  %180 = vmatmul.mubr.f32.gmra.mrb[0].mxu0 %v110
  %v181 = vpop.f32.mrb[0].mxu0
  %v182 = vadd.f32 %v106, %v181
  %v183 = vpop.f32.mrb[0].mxu0
  %184 = vmatprep.mubr.f32.mxu0 0.0
  %185 = vmatmul.mubr.f32.gmra.mrb[0].mxu0 %v113
  %v186 = vpop.f32.mrb[0].mxu0
  %v187 = vadd.f32 %v106, %v186
  %v188 = vpop.f32.mrb[0].mxu0
  %189 = vdwg.mxu0
  %v191 = vlaneseq
  %v192 = vshrl.u32 %v191, 7
  %v193 = vsub.s32 0, %v192
  %v194 = vrot.slane %v93, %v193
  %196 = vmatprep.subr.mxu0 0.0
  %197 = vmatpush1.msra.mxu0 %v68
  %198 = vmatprep.subr.mxu0 0.0
  %199 = vmatpush1.msra.mxu0 %v69
  %200 = vmatprep.subr.mxu0 0.0
  %201 = vmatpush1.msra.mxu0 %v70
  %202 = vmatprep.subr.mxu0 0.0
  %203 = vmatpush1.msra.mxu0 %v71
  %204 = vmatprep.subr.mxu0 0.0
  %205 = vmatpush1.msra.mxu0 0.0
  %206 = vmatprep.subr.mxu0 0.0
  %207 = vmatpush1.msra.mxu0 0.0
  %208 = vmatprep.subr.mxu0 0.0
  %209 = vmatpush1.msra.mxu0 0.0
  %210 = vmatprep.subr.mxu0 0.0
  %211 = vmatpush1.msra.mxu0 0.0
  %212 = vmatprep.subr.mxu0 0.0
  %213 = vmatpush1.msra.mxu0 0.0
  %214 = vmatprep.subr.mxu0 0.0
  %215 = vmatpush1.msra.mxu0 0.0
  %216 = vmatprep.subr.mxu0 0.0
  %217 = vmatpush1.msra.mxu0 0.0
  %218 = vmatprep.subr.mxu0 0.0
  %219 = vmatpush1.msra.mxu0 0.0
  %220 = vmatprep.subr.mxu0 0.0
  %221 = vmatpush1.msra.mxu0 0.0
  %222 = vmatprep.subr.mxu0 0.0
  %223 = vmatpush1.msra.mxu0 0.0
  %224 = vmatprep.subr.mxu0 0.0
  %225 = vmatpush1.msra.mxu0 0.0
  %226 = vmatprep.subr.mxu0 0.0
  %227 = vmatpush1.msra.mxu0 0.0
  %228 = vmatprep.subr.mxu0 0.0
  %229 = vmatpush1.msra.mxu0 0.0
  %230 = vmatprep.subr.mxu0 0.0
  %231 = vmatpush1.msra.mxu0 0.0
  %232 = vmatprep.subr.mxu0 0.0
  %233 = vmatpush1.msra.mxu0 0.0
  %234 = vmatprep.subr.mxu0 0.0
  %235 = vmatpush1.msra.mxu0 0.0
  %236 = vmatprep.subr.mxu0 0.0
  %237 = vmatpush1.msra.mxu0 0.0
  %238 = vmatprep.subr.mxu0 0.0
  %239 = vmatpush1.msra.mxu0 0.0
  %240 = vmatprep.subr.mxu0 0.0
  %241 = vmatpush1.msra.mxu0 0.0
  %242 = vmatprep.subr.mxu0 0.0
  %243 = vmatpush1.msra.mxu0 0.0
  %244 = vmatprep.subr.mxu0 0.0
  %245 = vmatpush1.msra.mxu0 0.0
  %246 = vmatprep.subr.mxu0 0.0
  %247 = vmatpush1.msra.mxu0 0.0
  %248 = vmatprep.subr.mxu0 0.0
  %249 = vmatpush1.msra.mxu0 0.0
  %250 = vmatprep.subr.mxu0 0.0
  %251 = vmatpush1.msra.mxu0 0.0
  %252 = vmatprep.subr.mxu0 0.0
  %253 = vmatpush1.msra.mxu0 0.0
  %254 = vmatprep.subr.mxu0 0.0
  %255 = vmatpush1.msra.mxu0 0.0
  %256 = vmatprep.subr.mxu0 0.0
  %257 = vmatpush1.msra.mxu0 0.0
  %258 = vmatprep.subr.mxu0 0.0
  %259 = vmatpush1.msra.mxu0 0.0
  %260 = vmatprep.mubr.f32.mxu0 0.0
  %261 = vmatmul.mubr.f32.gmra.mrb[0].mxu0 %v110
  %v262 = vpop.f32.mrb[0].mxu0
  %v263 = vadd.f32 %v194, %v262
  %v264 = vpop.f32.mrb[0].mxu0
  %265 = vmatprep.mubr.f32.mxu0 0.0
  %266 = vmatmul.mubr.f32.gmra.mrb[0].mxu0 %v113
  %v267 = vpop.f32.mrb[0].mxu0
  %v268 = vadd.f32 %v194, %v267
  %v269 = vpop.f32.mrb[0].mxu0
  %270 = vdwg.mxu0
  %v272 = vlaneseq
  %v273 = vshrl.u32 %v272, 7
  %v274 = vsub.s32 0, %v273
  %v275 = vrot.slane %v94, %v274
  %277 = vmatprep.subr.mxu0 0.0
  %278 = vmatpush1.msra.mxu0 %v72
  %279 = vmatprep.subr.mxu0 0.0
  %280 = vmatpush1.msra.mxu0 %v73
  %281 = vmatprep.subr.mxu0 0.0
  %282 = vmatpush1.msra.mxu0 %v74
  %283 = vmatprep.subr.mxu0 0.0
  %284 = vmatpush1.msra.mxu0 %v75
  %285 = vmatprep.subr.mxu0 0.0
  %286 = vmatpush1.msra.mxu0 0.0
  %287 = vmatprep.subr.mxu0 0.0
  %288 = vmatpush1.msra.mxu0 0.0
  %289 = vmatprep.subr.mxu0 0.0
  %290 = vmatpush1.msra.mxu0 0.0
  %291 = vmatprep.subr.mxu0 0.0
  %292 = vmatpush1.msra.mxu0 0.0
  %293 = vmatprep.subr.mxu0 0.0
  %294 = vmatpush1.msra.mxu0 0.0
  %295 = vmatprep.subr.mxu0 0.0
  %296 = vmatpush1.msra.mxu0 0.0
  %297 = vmatprep.subr.mxu0 0.0
  %298 = vmatpush1.msra.mxu0 0.0
  %299 = vmatprep.subr.mxu0 0.0
  %300 = vmatpush1.msra.mxu0 0.0
  %301 = vmatprep.subr.mxu0 0.0
  %302 = vmatpush1.msra.mxu0 0.0
  %303 = vmatprep.subr.mxu0 0.0
  %304 = vmatpush1.msra.mxu0 0.0
  %305 = vmatprep.subr.mxu0 0.0
  %306 = vmatpush1.msra.mxu0 0.0
  %307 = vmatprep.subr.mxu0 0.0
  %308 = vmatpush1.msra.mxu0 0.0
  %309 = vmatprep.subr.mxu0 0.0
  %310 = vmatpush1.msra.mxu0 0.0
  %311 = vmatprep.subr.mxu0 0.0
  %312 = vmatpush1.msra.mxu0 0.0
  %313 = vmatprep.subr.mxu0 0.0
  %314 = vmatpush1.msra.mxu0 0.0
  %315 = vmatprep.subr.mxu0 0.0
  %316 = vmatpush1.msra.mxu0 0.0
  %317 = vmatprep.subr.mxu0 0.0
  %318 = vmatpush1.msra.mxu0 0.0
  %319 = vmatprep.subr.mxu0 0.0
  %320 = vmatpush1.msra.mxu0 0.0
  %321 = vmatprep.subr.mxu0 0.0
  %322 = vmatpush1.msra.mxu0 0.0
  %323 = vmatprep.subr.mxu0 0.0
  %324 = vmatpush1.msra.mxu0 0.0
  %325 = vmatprep.subr.mxu0 0.0
  %326 = vmatpush1.msra.mxu0 0.0
  %327 = vmatprep.subr.mxu0 0.0
  %328 = vmatpush1.msra.mxu0 0.0
  %329 = vmatprep.subr.mxu0 0.0
  %330 = vmatpush1.msra.mxu0 0.0
  %331 = vmatprep.subr.mxu0 0.0
  %332 = vmatpush1.msra.mxu0 0.0
  %333 = vmatprep.subr.mxu0 0.0
  %334 = vmatpush1.msra.mxu0 0.0
  %335 = vmatprep.subr.mxu0 0.0
  %336 = vmatpush1.msra.mxu0 0.0
  %337 = vmatprep.subr.mxu0 0.0
  %338 = vmatpush1.msra.mxu0 0.0
  %339 = vmatprep.subr.mxu0 0.0
  %340 = vmatpush1.msra.mxu0 0.0
  %341 = vmatprep.mubr.f32.mxu0 0.0
  %342 = vmatmul.mubr.f32.gmra.mrb[0].mxu0 %v110
  %v343 = vpop.f32.mrb[0].mxu0
  %v344 = vadd.f32 %v275, %v343
  %v345 = vpop.f32.mrb[0].mxu0
  %346 = vmatprep.mubr.f32.mxu0 0.0
  %347 = vmatmul.mubr.f32.gmra.mrb[0].mxu0 %v113
  %v348 = vpop.f32.mrb[0].mxu0
  %v349 = vadd.f32 %v275, %v348
  %v350 = vpop.f32.mrb[0].mxu0
  %351 = vdwg.mxu0
  %vm352 = vcmask 64512
  %v354 = vsel %vm352, %v182, 0
  %v357 = vsel %vm352, %v263, 0
  %359 = vmatprep.subr.mxu0 0.0
  %360 = vmatpush1.xpose.msra.mxu0 %v357
  %361 = vmatprep.subr.mxu0 0.0
  %362 = vmatpush1.xpose.msra.mxu0 0.0
  %363 = vmatprep.subr.mxu0 0.0
  %364 = vmatpush1.xpose.msra.mxu0 0.0
  %365 = vmatprep.subr.mxu0 0.0
  %366 = vmatpush1.xpose.msra.mxu0 0.0
  %367 = vmatprep.subr.mxu0 0.0
  %368 = vmatpush1.xpose.msra.mxu0 0.0
  %369 = vmatprep.subr.mxu0 0.0
  %370 = vmatpush1.xpose.msra.mxu0 0.0
  %371 = vmatprep.subr.mxu0 0.0
  %372 = vmatpush1.xpose.msra.mxu0 0.0
  %373 = vmatprep.subr.mxu0 0.0
  %374 = vmatpush1.xpose.msra.mxu0 0.0
  %375 = vmatprep.subr.mxu0 0.0
  %376 = vmatpush1.xpose.msra.mxu0 0.0
  %377 = vmatprep.subr.mxu0 0.0
  %378 = vmatpush1.xpose.msra.mxu0 0.0
  %379 = vmatprep.subr.mxu0 0.0
  %380 = vmatpush1.xpose.msra.mxu0 0.0
  %381 = vmatprep.subr.mxu0 0.0
  %382 = vmatpush1.xpose.msra.mxu0 0.0
  %383 = vmatprep.subr.mxu0 0.0
  %384 = vmatpush1.xpose.msra.mxu0 0.0
  %385 = vmatprep.subr.mxu0 0.0
  %386 = vmatpush1.xpose.msra.mxu0 0.0
  %387 = vmatprep.subr.mxu0 0.0
  %388 = vmatpush1.xpose.msra.mxu0 0.0
  %389 = vmatprep.subr.mxu0 0.0
  %390 = vmatpush1.xpose.msra.mxu0 0.0
  %391 = vmatprep.subr.mxu0 0.0
  %392 = vmatpush1.xpose.msra.mxu0 0.0
  %393 = vmatprep.subr.mxu0 0.0
  %394 = vmatpush1.xpose.msra.mxu0 0.0
  %395 = vmatprep.subr.mxu0 0.0
  %396 = vmatpush1.xpose.msra.mxu0 0.0
  %397 = vmatprep.subr.mxu0 0.0
  %398 = vmatpush1.xpose.msra.mxu0 0.0
  %399 = vmatprep.subr.mxu0 0.0
  %400 = vmatpush1.xpose.msra.mxu0 0.0
  %401 = vmatprep.subr.mxu0 0.0
  %402 = vmatpush1.xpose.msra.mxu0 0.0
  %403 = vmatprep.subr.mxu0 0.0
  %404 = vmatpush1.xpose.msra.mxu0 0.0
  %405 = vmatprep.subr.mxu0 0.0
  %406 = vmatpush1.xpose.msra.mxu0 0.0
  %407 = vmatprep.subr.mxu0 0.0
  %408 = vmatpush1.xpose.msra.mxu0 0.0
  %409 = vmatprep.subr.mxu0 0.0
  %410 = vmatpush1.xpose.msra.mxu0 0.0
  %411 = vmatprep.subr.mxu0 0.0
  %412 = vmatpush1.xpose.msra.mxu0 0.0
  %413 = vmatprep.subr.mxu0 0.0
  %414 = vmatpush1.xpose.msra.mxu0 0.0
  %415 = vmatprep.subr.mxu0 0.0
  %416 = vmatpush1.xpose.msra.mxu0 0.0
  %417 = vmatprep.subr.mxu0 0.0
  %418 = vmatpush1.xpose.msra.mxu0 0.0
  %419 = vmatprep.subr.mxu0 0.0
  %420 = vmatpush1.xpose.msra.mxu0 0.0
  %421 = vmatprep.subr.mxu0 0.0
  %422 = vmatpush1.xpose.msra.mxu0 0.0
  %423 = vmatprep.mubr.f32.mxu0 0.0
  %424 = vmatmul.mubr.f32.gmra.mrb[0].mxu0 %v354
  %v425 = vpop.f32.mrb[0].mxu0
  %v426 = vadd.f32 0.0, %v425
  %v427 = vpop.f32.mrb[0].mxu0
  %428 = vdwg.mxu0
  %v430 = vsel %vm352, %v187, 0
  %v433 = vsel %vm352, %v268, 0
  %435 = vmatprep.subr.mxu0 0.0
  %436 = vmatpush1.xpose.msra.mxu0 %v433
  %437 = vmatprep.subr.mxu0 0.0
  %438 = vmatpush1.xpose.msra.mxu0 0.0
  %439 = vmatprep.subr.mxu0 0.0
  %440 = vmatpush1.xpose.msra.mxu0 0.0
  %441 = vmatprep.subr.mxu0 0.0
  %442 = vmatpush1.xpose.msra.mxu0 0.0
  %443 = vmatprep.subr.mxu0 0.0
  %444 = vmatpush1.xpose.msra.mxu0 0.0
  %445 = vmatprep.subr.mxu0 0.0
  %446 = vmatpush1.xpose.msra.mxu0 0.0
  %447 = vmatprep.subr.mxu0 0.0
  %448 = vmatpush1.xpose.msra.mxu0 0.0
  %449 = vmatprep.subr.mxu0 0.0
  %450 = vmatpush1.xpose.msra.mxu0 0.0
  %451 = vmatprep.subr.mxu0 0.0
  %452 = vmatpush1.xpose.msra.mxu0 0.0
  %453 = vmatprep.subr.mxu0 0.0
  %454 = vmatpush1.xpose.msra.mxu0 0.0
  %455 = vmatprep.subr.mxu0 0.0
  %456 = vmatpush1.xpose.msra.mxu0 0.0
  %457 = vmatprep.subr.mxu0 0.0
  %458 = vmatpush1.xpose.msra.mxu0 0.0
  %459 = vmatprep.subr.mxu0 0.0
  %460 = vmatpush1.xpose.msra.mxu0 0.0
  %461 = vmatprep.subr.mxu0 0.0
  %462 = vmatpush1.xpose.msra.mxu0 0.0
  %463 = vmatprep.subr.mxu0 0.0
  %464 = vmatpush1.xpose.msra.mxu0 0.0
  %465 = vmatprep.subr.mxu0 0.0
  %466 = vmatpush1.xpose.msra.mxu0 0.0
  %467 = vmatprep.subr.mxu0 0.0
  %468 = vmatpush1.xpose.msra.mxu0 0.0
  %469 = vmatprep.subr.mxu0 0.0
  %470 = vmatpush1.xpose.msra.mxu0 0.0
  %471 = vmatprep.subr.mxu0 0.0
  %472 = vmatpush1.xpose.msra.mxu0 0.0
  %473 = vmatprep.subr.mxu0 0.0
  %474 = vmatpush1.xpose.msra.mxu0 0.0
  %475 = vmatprep.subr.mxu0 0.0
  %476 = vmatpush1.xpose.msra.mxu0 0.0
  %477 = vmatprep.subr.mxu0 0.0
  %478 = vmatpush1.xpose.msra.mxu0 0.0
  %479 = vmatprep.subr.mxu0 0.0
  %480 = vmatpush1.xpose.msra.mxu0 0.0
  %481 = vmatprep.subr.mxu0 0.0
  %482 = vmatpush1.xpose.msra.mxu0 0.0
  %483 = vmatprep.subr.mxu0 0.0
  %484 = vmatpush1.xpose.msra.mxu0 0.0
  %485 = vmatprep.subr.mxu0 0.0
  %486 = vmatpush1.xpose.msra.mxu0 0.0
  %487 = vmatprep.subr.mxu0 0.0
  %488 = vmatpush1.xpose.msra.mxu0 0.0
  %489 = vmatprep.subr.mxu0 0.0
  %490 = vmatpush1.xpose.msra.mxu0 0.0
  %491 = vmatprep.subr.mxu0 0.0
  %492 = vmatpush1.xpose.msra.mxu0 0.0
  %493 = vmatprep.subr.mxu0 0.0
  %494 = vmatpush1.xpose.msra.mxu0 0.0
  %495 = vmatprep.subr.mxu0 0.0
  %496 = vmatpush1.xpose.msra.mxu0 0.0
  %497 = vmatprep.subr.mxu0 0.0
  %498 = vmatpush1.xpose.msra.mxu0 0.0
  %499 = vmatprep.mubr.f32.mxu0 0.0
  %500 = vmatmul.mubr.f32.gmra.mrb[0].mxu0 %v430
  %v501 = vpop.f32.mrb[0].mxu0
  %v502 = vadd.f32 0.0, %v501
  %v503 = vpop.f32.mrb[0].mxu0
  %504 = vdwg.mxu0
  %v505 = vsel %vm352, %v426, -inf
  %506 = vmax.xlane.f32.xlu0 %v505
  %v507 = vpop.xlane.xlu0 %506
  %v508 = vsel %vm352, %v502, -inf
  %509 = vmax.xlane.f32.xlu0 %v508
  %v510 = vpop.xlane.xlu0 %509
  %v511 = vsub.f32 %v426, %v507
  %v512 = vsub.f32 %v502, %v510
  %v513 = vmul.f32 %v511, 1.442695
  %v514 = vpow.pop %v513
  %v515 = vmul.f32 %v512, 1.442695
  %v516 = vpow.pop %v515
  %v517 = vsel %vm352, %v514, 0.0
  %518 = vadd.xlane.f32.xlu0 %v517
  %v519 = vpop.xlane.xlu0 %518
  %v520 = vsel %vm352, %v516, 0.0
  %521 = vadd.xlane.f32.xlu0 %v520
  %v522 = vpop.xlane.xlu0 %521
  %v523 = vrcp.pop %v519
  %v524 = vmul.f32 %v514, %v523
  %v525 = vrcp.pop %v522
  %v526 = vmul.f32 %v516, %v525
  %v528 = vsel %vm352, %v524, 0
  %530 = vmatprep.subr.mxu0 0.0
  %531 = vmatpush1.msra.mxu0 %v344
  %532 = vmatprep.subr.mxu0 0.0
  %533 = vmatpush1.msra.mxu0 0.0
  %534 = vmatprep.subr.mxu0 0.0
  %535 = vmatpush1.msra.mxu0 0.0
  %536 = vmatprep.subr.mxu0 0.0
  %537 = vmatpush1.msra.mxu0 0.0
  %538 = vmatprep.subr.mxu0 0.0
  %539 = vmatpush1.msra.mxu0 0.0
  %540 = vmatprep.subr.mxu0 0.0
  %541 = vmatpush1.msra.mxu0 0.0
  %542 = vmatprep.subr.mxu0 0.0
  %543 = vmatpush1.msra.mxu0 0.0
  %544 = vmatprep.subr.mxu0 0.0
  %545 = vmatpush1.msra.mxu0 0.0
  %546 = vmatprep.subr.mxu0 0.0
  %547 = vmatpush1.msra.mxu0 0.0
  %548 = vmatprep.subr.mxu0 0.0
  %549 = vmatpush1.msra.mxu0 0.0
  %550 = vmatprep.subr.mxu0 0.0
  %551 = vmatpush1.msra.mxu0 0.0
  %552 = vmatprep.subr.mxu0 0.0
  %553 = vmatpush1.msra.mxu0 0.0
  %554 = vmatprep.subr.mxu0 0.0
  %555 = vmatpush1.msra.mxu0 0.0
  %556 = vmatprep.subr.mxu0 0.0
  %557 = vmatpush1.msra.mxu0 0.0
  %558 = vmatprep.subr.mxu0 0.0
  %559 = vmatpush1.msra.mxu0 0.0
  %560 = vmatprep.subr.mxu0 0.0
  %561 = vmatpush1.msra.mxu0 0.0
  %562 = vmatprep.subr.mxu0 0.0
  %563 = vmatpush1.msra.mxu0 0.0
  %564 = vmatprep.subr.mxu0 0.0
  %565 = vmatpush1.msra.mxu0 0.0
  %566 = vmatprep.subr.mxu0 0.0
  %567 = vmatpush1.msra.mxu0 0.0
  %568 = vmatprep.subr.mxu0 0.0
  %569 = vmatpush1.msra.mxu0 0.0
  %570 = vmatprep.subr.mxu0 0.0
  %571 = vmatpush1.msra.mxu0 0.0
  %572 = vmatprep.subr.mxu0 0.0
  %573 = vmatpush1.msra.mxu0 0.0
  %574 = vmatprep.subr.mxu0 0.0
  %575 = vmatpush1.msra.mxu0 0.0
  %576 = vmatprep.subr.mxu0 0.0
  %577 = vmatpush1.msra.mxu0 0.0
  %578 = vmatprep.subr.mxu0 0.0
  %579 = vmatpush1.msra.mxu0 0.0
  %580 = vmatprep.subr.mxu0 0.0
  %581 = vmatpush1.msra.mxu0 0.0
  %582 = vmatprep.subr.mxu0 0.0
  %583 = vmatpush1.msra.mxu0 0.0
  %584 = vmatprep.subr.mxu0 0.0
  %585 = vmatpush1.msra.mxu0 0.0
  %586 = vmatprep.subr.mxu0 0.0
  %587 = vmatpush1.msra.mxu0 0.0
  %588 = vmatprep.subr.mxu0 0.0
  %589 = vmatpush1.msra.mxu0 0.0
  %590 = vmatprep.subr.mxu0 0.0
  %591 = vmatpush1.msra.mxu0 0.0
  %592 = vmatprep.subr.mxu0 0.0
  %593 = vmatpush1.msra.mxu0 0.0
  %594 = vmatprep.mubr.f32.mxu0 0.0
  %595 = vmatmul.mubr.f32.gmra.mrb[0].mxu0 %v528
  %v596 = vpop.f32.mrb[0].mxu0
  %v597 = vadd.f32 0.0, %v596
  %v598 = vpop.f32.mrb[0].mxu0
  %599 = vdwg.mxu0
  %v601 = vsel %vm352, %v526, 0
  %603 = vmatprep.subr.mxu0 0.0
  %604 = vmatpush1.msra.mxu0 %v349
  %605 = vmatprep.subr.mxu0 0.0
  %606 = vmatpush1.msra.mxu0 0.0
  %607 = vmatprep.subr.mxu0 0.0
  %608 = vmatpush1.msra.mxu0 0.0
  %609 = vmatprep.subr.mxu0 0.0
  %610 = vmatpush1.msra.mxu0 0.0
  %611 = vmatprep.subr.mxu0 0.0
  %612 = vmatpush1.msra.mxu0 0.0
  %613 = vmatprep.subr.mxu0 0.0
  %614 = vmatpush1.msra.mxu0 0.0
  %615 = vmatprep.subr.mxu0 0.0
  %616 = vmatpush1.msra.mxu0 0.0
  %617 = vmatprep.subr.mxu0 0.0
  %618 = vmatpush1.msra.mxu0 0.0
  %619 = vmatprep.subr.mxu0 0.0
  %620 = vmatpush1.msra.mxu0 0.0
  %621 = vmatprep.subr.mxu0 0.0
  %622 = vmatpush1.msra.mxu0 0.0
  %623 = vmatprep.subr.mxu0 0.0
  %624 = vmatpush1.msra.mxu0 0.0
  %625 = vmatprep.subr.mxu0 0.0
  %626 = vmatpush1.msra.mxu0 0.0
  %627 = vmatprep.subr.mxu0 0.0
  %628 = vmatpush1.msra.mxu0 0.0
  %629 = vmatprep.subr.mxu0 0.0
  %630 = vmatpush1.msra.mxu0 0.0
  %631 = vmatprep.subr.mxu0 0.0
  %632 = vmatpush1.msra.mxu0 0.0
  %633 = vmatprep.subr.mxu0 0.0
  %634 = vmatpush1.msra.mxu0 0.0
  %635 = vmatprep.subr.mxu0 0.0
  %636 = vmatpush1.msra.mxu0 0.0
  %637 = vmatprep.subr.mxu0 0.0
  %638 = vmatpush1.msra.mxu0 0.0
  %639 = vmatprep.subr.mxu0 0.0
  %640 = vmatpush1.msra.mxu0 0.0
  %641 = vmatprep.subr.mxu0 0.0
  %642 = vmatpush1.msra.mxu0 0.0
  %643 = vmatprep.subr.mxu0 0.0
  %644 = vmatpush1.msra.mxu0 0.0
  %645 = vmatprep.subr.mxu0 0.0
  %646 = vmatpush1.msra.mxu0 0.0
  %647 = vmatprep.subr.mxu0 0.0
  %648 = vmatpush1.msra.mxu0 0.0
  %649 = vmatprep.subr.mxu0 0.0
  %650 = vmatpush1.msra.mxu0 0.0
  %651 = vmatprep.subr.mxu0 0.0
  %652 = vmatpush1.msra.mxu0 0.0
  %653 = vmatprep.subr.mxu0 0.0
  %654 = vmatpush1.msra.mxu0 0.0
  %655 = vmatprep.subr.mxu0 0.0
  %656 = vmatpush1.msra.mxu0 0.0
  %657 = vmatprep.subr.mxu0 0.0
  %658 = vmatpush1.msra.mxu0 0.0
  %659 = vmatprep.subr.mxu0 0.0
  %660 = vmatpush1.msra.mxu0 0.0
  %661 = vmatprep.subr.mxu0 0.0
  %662 = vmatpush1.msra.mxu0 0.0
  %663 = vmatprep.subr.mxu0 0.0
  %664 = vmatpush1.msra.mxu0 0.0
  %665 = vmatprep.subr.mxu0 0.0
  %666 = vmatpush1.msra.mxu0 0.0
  %667 = vmatprep.mubr.f32.mxu0 0.0
  %668 = vmatmul.mubr.f32.gmra.mrb[0].mxu0 %v601
  %v669 = vpop.f32.mrb[0].mxu0
  %v670 = vadd.f32 0.0, %v669
  %v671 = vpop.f32.mrb[0].mxu0
  %672 = vdwg.mxu0
  %673 = vrot.lane.b32.xlu0 %v182, 120
  %v674 = vpop.permute.xlu0 %673
  %675 = vrot.lane.b32.xlu0 %v263, 120
  %v676 = vpop.permute.xlu0 %675
  %v677 = vsel %vm352, %v674, 0
  %v679 = vsel %vm352, %v676, 0
  %681 = vmatprep.subr.mxu0 0.0
  %682 = vmatpush1.xpose.msra.mxu0 %v679
  %683 = vmatprep.subr.mxu0 0.0
  %684 = vmatpush1.xpose.msra.mxu0 0.0
  %685 = vmatprep.subr.mxu0 0.0
  %686 = vmatpush1.xpose.msra.mxu0 0.0
  %687 = vmatprep.subr.mxu0 0.0
  %688 = vmatpush1.xpose.msra.mxu0 0.0
  %689 = vmatprep.subr.mxu0 0.0
  %690 = vmatpush1.xpose.msra.mxu0 0.0
  %691 = vmatprep.subr.mxu0 0.0
  %692 = vmatpush1.xpose.msra.mxu0 0.0
  %693 = vmatprep.subr.mxu0 0.0
  %694 = vmatpush1.xpose.msra.mxu0 0.0
  %695 = vmatprep.subr.mxu0 0.0
  %696 = vmatpush1.xpose.msra.mxu0 0.0
  %697 = vmatprep.subr.mxu0 0.0
  %698 = vmatpush1.xpose.msra.mxu0 0.0
  %699 = vmatprep.subr.mxu0 0.0
  %700 = vmatpush1.xpose.msra.mxu0 0.0
  %701 = vmatprep.subr.mxu0 0.0
  %702 = vmatpush1.xpose.msra.mxu0 0.0
  %703 = vmatprep.subr.mxu0 0.0
  %704 = vmatpush1.xpose.msra.mxu0 0.0
  %705 = vmatprep.subr.mxu0 0.0
  %706 = vmatpush1.xpose.msra.mxu0 0.0
  %707 = vmatprep.subr.mxu0 0.0
  %708 = vmatpush1.xpose.msra.mxu0 0.0
  %709 = vmatprep.subr.mxu0 0.0
  %710 = vmatpush1.xpose.msra.mxu0 0.0
  %711 = vmatprep.subr.mxu0 0.0
  %712 = vmatpush1.xpose.msra.mxu0 0.0
  %713 = vmatprep.subr.mxu0 0.0
  %714 = vmatpush1.xpose.msra.mxu0 0.0
  %715 = vmatprep.subr.mxu0 0.0
  %716 = vmatpush1.xpose.msra.mxu0 0.0
  %717 = vmatprep.subr.mxu0 0.0
  %718 = vmatpush1.xpose.msra.mxu0 0.0
  %719 = vmatprep.subr.mxu0 0.0
  %720 = vmatpush1.xpose.msra.mxu0 0.0
  %721 = vmatprep.subr.mxu0 0.0
  %722 = vmatpush1.xpose.msra.mxu0 0.0
  %723 = vmatprep.subr.mxu0 0.0
  %724 = vmatpush1.xpose.msra.mxu0 0.0
  %725 = vmatprep.subr.mxu0 0.0
  %726 = vmatpush1.xpose.msra.mxu0 0.0
  %727 = vmatprep.subr.mxu0 0.0
  %728 = vmatpush1.xpose.msra.mxu0 0.0
  %729 = vmatprep.subr.mxu0 0.0
  %730 = vmatpush1.xpose.msra.mxu0 0.0
  %731 = vmatprep.subr.mxu0 0.0
  %732 = vmatpush1.xpose.msra.mxu0 0.0
  %733 = vmatprep.subr.mxu0 0.0
  %734 = vmatpush1.xpose.msra.mxu0 0.0
  %735 = vmatprep.subr.mxu0 0.0
  %736 = vmatpush1.xpose.msra.mxu0 0.0
  %737 = vmatprep.subr.mxu0 0.0
  %738 = vmatpush1.xpose.msra.mxu0 0.0
  %739 = vmatprep.subr.mxu0 0.0
  %740 = vmatpush1.xpose.msra.mxu0 0.0
  %741 = vmatprep.subr.mxu0 0.0
  %742 = vmatpush1.xpose.msra.mxu0 0.0
  %743 = vmatprep.subr.mxu0 0.0
  %744 = vmatpush1.xpose.msra.mxu0 0.0
  %745 = vmatprep.mubr.f32.mxu0 0.0
  %746 = vmatmul.mubr.f32.gmra.mrb[0].mxu0 %v677
  %v747 = vpop.f32.mrb[0].mxu0
  %v748 = vadd.f32 0.0, %v747
  %v749 = vpop.f32.mrb[0].mxu0
  %750 = vdwg.mxu0
  %751 = vrot.lane.b32.xlu0 %v187, 120
  %v752 = vpop.permute.xlu0 %751
  %753 = vrot.lane.b32.xlu0 %v268, 120
  %v754 = vpop.permute.xlu0 %753
  %v755 = vsel %vm352, %v752, 0
  %v757 = vsel %vm352, %v754, 0
  %759 = vmatprep.subr.mxu0 0.0
  %760 = vmatpush1.xpose.msra.mxu0 %v757
  %761 = vmatprep.subr.mxu0 0.0
  %762 = vmatpush1.xpose.msra.mxu0 0.0
  %763 = vmatprep.subr.mxu0 0.0
  %764 = vmatpush1.xpose.msra.mxu0 0.0
  %765 = vmatprep.subr.mxu0 0.0
  %766 = vmatpush1.xpose.msra.mxu0 0.0
  %767 = vmatprep.subr.mxu0 0.0
  %768 = vmatpush1.xpose.msra.mxu0 0.0
  %769 = vmatprep.subr.mxu0 0.0
  %770 = vmatpush1.xpose.msra.mxu0 0.0
  %771 = vmatprep.subr.mxu0 0.0
  %772 = vmatpush1.xpose.msra.mxu0 0.0
  %773 = vmatprep.subr.mxu0 0.0
  %774 = vmatpush1.xpose.msra.mxu0 0.0
  %775 = vmatprep.subr.mxu0 0.0
  %776 = vmatpush1.xpose.msra.mxu0 0.0
  %777 = vmatprep.subr.mxu0 0.0
  %778 = vmatpush1.xpose.msra.mxu0 0.0
  %779 = vmatprep.subr.mxu0 0.0
  %780 = vmatpush1.xpose.msra.mxu0 0.0
  %781 = vmatprep.subr.mxu0 0.0
  %782 = vmatpush1.xpose.msra.mxu0 0.0
  %783 = vmatprep.subr.mxu0 0.0
  %784 = vmatpush1.xpose.msra.mxu0 0.0
  %785 = vmatprep.subr.mxu0 0.0
  %786 = vmatpush1.xpose.msra.mxu0 0.0
  %787 = vmatprep.subr.mxu0 0.0
  %788 = vmatpush1.xpose.msra.mxu0 0.0
  %789 = vmatprep.subr.mxu0 0.0
  %790 = vmatpush1.xpose.msra.mxu0 0.0
  %791 = vmatprep.subr.mxu0 0.0
  %792 = vmatpush1.xpose.msra.mxu0 0.0
  %793 = vmatprep.subr.mxu0 0.0
  %794 = vmatpush1.xpose.msra.mxu0 0.0
  %795 = vmatprep.subr.mxu0 0.0
  %796 = vmatpush1.xpose.msra.mxu0 0.0
  %797 = vmatprep.subr.mxu0 0.0
  %798 = vmatpush1.xpose.msra.mxu0 0.0
  %799 = vmatprep.subr.mxu0 0.0
  %800 = vmatpush1.xpose.msra.mxu0 0.0
  %801 = vmatprep.subr.mxu0 0.0
  %802 = vmatpush1.xpose.msra.mxu0 0.0
  %803 = vmatprep.subr.mxu0 0.0
  %804 = vmatpush1.xpose.msra.mxu0 0.0
  %805 = vmatprep.subr.mxu0 0.0
  %806 = vmatpush1.xpose.msra.mxu0 0.0
  %807 = vmatprep.subr.mxu0 0.0
  %808 = vmatpush1.xpose.msra.mxu0 0.0
  %809 = vmatprep.subr.mxu0 0.0
  %810 = vmatpush1.xpose.msra.mxu0 0.0
  %811 = vmatprep.subr.mxu0 0.0
  %812 = vmatpush1.xpose.msra.mxu0 0.0
  %813 = vmatprep.subr.mxu0 0.0
  %814 = vmatpush1.xpose.msra.mxu0 0.0
  %815 = vmatprep.subr.mxu0 0.0
  %816 = vmatpush1.xpose.msra.mxu0 0.0
  %817 = vmatprep.subr.mxu0 0.0
  %818 = vmatpush1.xpose.msra.mxu0 0.0
  %819 = vmatprep.subr.mxu0 0.0
  %820 = vmatpush1.xpose.msra.mxu0 0.0
  %821 = vmatprep.subr.mxu0 0.0
  %822 = vmatpush1.xpose.msra.mxu0 0.0
  %823 = vmatprep.mubr.f32.mxu0 0.0
  %824 = vmatmul.mubr.f32.gmra.mrb[0].mxu0 %v755
  %v825 = vpop.f32.mrb[0].mxu0
  %v826 = vadd.f32 0.0, %v825
  %v827 = vpop.f32.mrb[0].mxu0
  %828 = vdwg.mxu0
  %v829 = vsel %vm352, %v748, -inf
  %830 = vmax.xlane.f32.xlu0 %v829
  %v831 = vpop.xlane.xlu0 %830
  %v832 = vsel %vm352, %v826, -inf
  %833 = vmax.xlane.f32.xlu0 %v832
  %v834 = vpop.xlane.xlu0 %833
  %v835 = vsub.f32 %v748, %v831
  %v836 = vsub.f32 %v826, %v834
  %v837 = vmul.f32 %v835, 1.442695
  %v838 = vpow.pop %v837
  %v839 = vmul.f32 %v836, 1.442695
  %v840 = vpow.pop %v839
  %v841 = vsel %vm352, %v838, 0.0
  %842 = vadd.xlane.f32.xlu0 %v841
  %v843 = vpop.xlane.xlu0 %842
  %v844 = vsel %vm352, %v840, 0.0
  %845 = vadd.xlane.f32.xlu0 %v844
  %v846 = vpop.xlane.xlu0 %845
  %v847 = vrcp.pop %v843
  %v848 = vmul.f32 %v838, %v847
  %v849 = vrcp.pop %v846
  %v850 = vmul.f32 %v840, %v849
  %852 = vrot.lane.b32.xlu0 %v344, 120
  %v853 = vpop.permute.xlu0 %852
  %v856 = vsel %vm352, %v848, 0
  %858 = vmatprep.subr.mxu0 0.0
  %859 = vmatpush1.msra.mxu0 %v853
  %860 = vmatprep.subr.mxu0 0.0
  %861 = vmatpush1.msra.mxu0 0.0
  %862 = vmatprep.subr.mxu0 0.0
  %863 = vmatpush1.msra.mxu0 0.0
  %864 = vmatprep.subr.mxu0 0.0
  %865 = vmatpush1.msra.mxu0 0.0
  %866 = vmatprep.subr.mxu0 0.0
  %867 = vmatpush1.msra.mxu0 0.0
  %868 = vmatprep.subr.mxu0 0.0
  %869 = vmatpush1.msra.mxu0 0.0
  %870 = vmatprep.subr.mxu0 0.0
  %871 = vmatpush1.msra.mxu0 0.0
  %872 = vmatprep.subr.mxu0 0.0
  %873 = vmatpush1.msra.mxu0 0.0
  %874 = vmatprep.subr.mxu0 0.0
  %875 = vmatpush1.msra.mxu0 0.0
  %876 = vmatprep.subr.mxu0 0.0
  %877 = vmatpush1.msra.mxu0 0.0
  %878 = vmatprep.subr.mxu0 0.0
  %879 = vmatpush1.msra.mxu0 0.0
  %880 = vmatprep.subr.mxu0 0.0
  %881 = vmatpush1.msra.mxu0 0.0
  %882 = vmatprep.subr.mxu0 0.0
  %883 = vmatpush1.msra.mxu0 0.0
  %884 = vmatprep.subr.mxu0 0.0
  %885 = vmatpush1.msra.mxu0 0.0
  %886 = vmatprep.subr.mxu0 0.0
  %887 = vmatpush1.msra.mxu0 0.0
  %888 = vmatprep.subr.mxu0 0.0
  %889 = vmatpush1.msra.mxu0 0.0
  %890 = vmatprep.subr.mxu0 0.0
  %891 = vmatpush1.msra.mxu0 0.0
  %892 = vmatprep.subr.mxu0 0.0
  %893 = vmatpush1.msra.mxu0 0.0
  %894 = vmatprep.subr.mxu0 0.0
  %895 = vmatpush1.msra.mxu0 0.0
  %896 = vmatprep.subr.mxu0 0.0
  %897 = vmatpush1.msra.mxu0 0.0
  %898 = vmatprep.subr.mxu0 0.0
  %899 = vmatpush1.msra.mxu0 0.0
  %900 = vmatprep.subr.mxu0 0.0
  %901 = vmatpush1.msra.mxu0 0.0
  %902 = vmatprep.subr.mxu0 0.0
  %903 = vmatpush1.msra.mxu0 0.0
  %904 = vmatprep.subr.mxu0 0.0
  %905 = vmatpush1.msra.mxu0 0.0
  %906 = vmatprep.subr.mxu0 0.0
  %907 = vmatpush1.msra.mxu0 0.0
  %908 = vmatprep.subr.mxu0 0.0
  %909 = vmatpush1.msra.mxu0 0.0
  %910 = vmatprep.subr.mxu0 0.0
  %911 = vmatpush1.msra.mxu0 0.0
  %912 = vmatprep.subr.mxu0 0.0
  %913 = vmatpush1.msra.mxu0 0.0
  %914 = vmatprep.subr.mxu0 0.0
  %915 = vmatpush1.msra.mxu0 0.0
  %916 = vmatprep.subr.mxu0 0.0
  %917 = vmatpush1.msra.mxu0 0.0
  %918 = vmatprep.subr.mxu0 0.0
  %919 = vmatpush1.msra.mxu0 0.0
  %920 = vmatprep.subr.mxu0 0.0
  %921 = vmatpush1.msra.mxu0 0.0
  %922 = vmatprep.mubr.f32.mxu0 0.0
  %923 = vmatmul.mubr.f32.gmra.mrb[0].mxu0 %v856
  %v924 = vpop.f32.mrb[0].mxu0
  %v925 = vadd.f32 0.0, %v924
  %v926 = vpop.f32.mrb[0].mxu0
  %927 = vdwg.mxu0
  %929 = vrot.lane.b32.xlu0 %v349, 120
  %v930 = vpop.permute.xlu0 %929
  %v933 = vsel %vm352, %v850, 0
  %935 = vmatprep.subr.mxu0 0.0
  %936 = vmatpush1.msra.mxu0 %v930
  %937 = vmatprep.subr.mxu0 0.0
  %938 = vmatpush1.msra.mxu0 0.0
  %939 = vmatprep.subr.mxu0 0.0
  %940 = vmatpush1.msra.mxu0 0.0
  %941 = vmatprep.subr.mxu0 0.0
  %942 = vmatpush1.msra.mxu0 0.0
  %943 = vmatprep.subr.mxu0 0.0
  %944 = vmatpush1.msra.mxu0 0.0
  %945 = vmatprep.subr.mxu0 0.0
  %946 = vmatpush1.msra.mxu0 0.0
  %947 = vmatprep.subr.mxu0 0.0
  %948 = vmatpush1.msra.mxu0 0.0
  %949 = vmatprep.subr.mxu0 0.0
  %950 = vmatpush1.msra.mxu0 0.0
  %951 = vmatprep.subr.mxu0 0.0
  %952 = vmatpush1.msra.mxu0 0.0
  %953 = vmatprep.subr.mxu0 0.0
  %954 = vmatpush1.msra.mxu0 0.0
  %955 = vmatprep.subr.mxu0 0.0
  %956 = vmatpush1.msra.mxu0 0.0
  %957 = vmatprep.subr.mxu0 0.0
  %958 = vmatpush1.msra.mxu0 0.0
  %959 = vmatprep.subr.mxu0 0.0
  %960 = vmatpush1.msra.mxu0 0.0
  %961 = vmatprep.subr.mxu0 0.0
  %962 = vmatpush1.msra.mxu0 0.0
  %963 = vmatprep.subr.mxu0 0.0
  %964 = vmatpush1.msra.mxu0 0.0
  %965 = vmatprep.subr.mxu0 0.0
  %966 = vmatpush1.msra.mxu0 0.0
  %967 = vmatprep.subr.mxu0 0.0
  %968 = vmatpush1.msra.mxu0 0.0
  %969 = vmatprep.subr.mxu0 0.0
  %970 = vmatpush1.msra.mxu0 0.0
  %971 = vmatprep.subr.mxu0 0.0
  %972 = vmatpush1.msra.mxu0 0.0
  %973 = vmatprep.subr.mxu0 0.0
  %974 = vmatpush1.msra.mxu0 0.0
  %975 = vmatprep.subr.mxu0 0.0
  %976 = vmatpush1.msra.mxu0 0.0
  %977 = vmatprep.subr.mxu0 0.0
  %978 = vmatpush1.msra.mxu0 0.0
  %979 = vmatprep.subr.mxu0 0.0
  %980 = vmatpush1.msra.mxu0 0.0
  %981 = vmatprep.subr.mxu0 0.0
  %982 = vmatpush1.msra.mxu0 0.0
  %983 = vmatprep.subr.mxu0 0.0
  %984 = vmatpush1.msra.mxu0 0.0
  %985 = vmatprep.subr.mxu0 0.0
  %986 = vmatpush1.msra.mxu0 0.0
  %987 = vmatprep.subr.mxu0 0.0
  %988 = vmatpush1.msra.mxu0 0.0
  %989 = vmatprep.subr.mxu0 0.0
  %990 = vmatpush1.msra.mxu0 0.0
  %991 = vmatprep.subr.mxu0 0.0
  %992 = vmatpush1.msra.mxu0 0.0
  %993 = vmatprep.subr.mxu0 0.0
  %994 = vmatpush1.msra.mxu0 0.0
  %995 = vmatprep.subr.mxu0 0.0
  %996 = vmatpush1.msra.mxu0 0.0
  %997 = vmatprep.subr.mxu0 0.0
  %998 = vmatpush1.msra.mxu0 0.0
  %999 = vmatprep.mubr.f32.mxu0 0.0
  %1000 = vmatmul.mubr.f32.gmra.mrb[0].mxu0 %v933
  %v1001 = vpop.f32.mrb[0].mxu0
  %v1002 = vadd.f32 0.0, %v1001
  %v1003 = vpop.f32.mrb[0].mxu0
  %1004 = vdwg.mxu0
  %1005 = vrot.lane.b32.xlu0 %v182, 112
  %v1006 = vpop.permute.xlu0 %1005
  %1007 = vrot.lane.b32.xlu0 %v263, 112
  %v1008 = vpop.permute.xlu0 %1007
  %v1009 = vsel %vm352, %v1006, 0
  %v1011 = vsel %vm352, %v1008, 0
  %1013 = vmatprep.subr.mxu0 0.0
  %1014 = vmatpush1.xpose.msra.mxu0 %v1011
  %1015 = vmatprep.subr.mxu0 0.0
  %1016 = vmatpush1.xpose.msra.mxu0 0.0
  %1017 = vmatprep.subr.mxu0 0.0
  %1018 = vmatpush1.xpose.msra.mxu0 0.0
  %1019 = vmatprep.subr.mxu0 0.0
  %1020 = vmatpush1.xpose.msra.mxu0 0.0
  %1021 = vmatprep.subr.mxu0 0.0
  %1022 = vmatpush1.xpose.msra.mxu0 0.0
  %1023 = vmatprep.subr.mxu0 0.0
  %1024 = vmatpush1.xpose.msra.mxu0 0.0
  %1025 = vmatprep.subr.mxu0 0.0
  %1026 = vmatpush1.xpose.msra.mxu0 0.0
  %1027 = vmatprep.subr.mxu0 0.0
  %1028 = vmatpush1.xpose.msra.mxu0 0.0
  %1029 = vmatprep.subr.mxu0 0.0
  %1030 = vmatpush1.xpose.msra.mxu0 0.0
  %1031 = vmatprep.subr.mxu0 0.0
  %1032 = vmatpush1.xpose.msra.mxu0 0.0
  %1033 = vmatprep.subr.mxu0 0.0
  %1034 = vmatpush1.xpose.msra.mxu0 0.0
  %1035 = vmatprep.subr.mxu0 0.0
  %1036 = vmatpush1.xpose.msra.mxu0 0.0
  %1037 = vmatprep.subr.mxu0 0.0
  %1038 = vmatpush1.xpose.msra.mxu0 0.0
  %1039 = vmatprep.subr.mxu0 0.0
  %1040 = vmatpush1.xpose.msra.mxu0 0.0
  %1041 = vmatprep.subr.mxu0 0.0
  %1042 = vmatpush1.xpose.msra.mxu0 0.0
  %1043 = vmatprep.subr.mxu0 0.0
  %1044 = vmatpush1.xpose.msra.mxu0 0.0
  %1045 = vmatprep.subr.mxu0 0.0
  %1046 = vmatpush1.xpose.msra.mxu0 0.0
  %1047 = vmatprep.subr.mxu0 0.0
  %1048 = vmatpush1.xpose.msra.mxu0 0.0
  %1049 = vmatprep.subr.mxu0 0.0
  %1050 = vmatpush1.xpose.msra.mxu0 0.0
  %1051 = vmatprep.subr.mxu0 0.0
  %1052 = vmatpush1.xpose.msra.mxu0 0.0
  %1053 = vmatprep.subr.mxu0 0.0
  %1054 = vmatpush1.xpose.msra.mxu0 0.0
  %1055 = vmatprep.subr.mxu0 0.0
  %1056 = vmatpush1.xpose.msra.mxu0 0.0
  %1057 = vmatprep.subr.mxu0 0.0
  %1058 = vmatpush1.xpose.msra.mxu0 0.0
  %1059 = vmatprep.subr.mxu0 0.0
  %1060 = vmatpush1.xpose.msra.mxu0 0.0
  %1061 = vmatprep.subr.mxu0 0.0
  %1062 = vmatpush1.xpose.msra.mxu0 0.0
  %1063 = vmatprep.subr.mxu0 0.0
  %1064 = vmatpush1.xpose.msra.mxu0 0.0
  %1065 = vmatprep.subr.mxu0 0.0
  %1066 = vmatpush1.xpose.msra.mxu0 0.0
  %1067 = vmatprep.subr.mxu0 0.0
  %1068 = vmatpush1.xpose.msra.mxu0 0.0
  %1069 = vmatprep.subr.mxu0 0.0
  %1070 = vmatpush1.xpose.msra.mxu0 0.0
  %1071 = vmatprep.subr.mxu0 0.0
  %1072 = vmatpush1.xpose.msra.mxu0 0.0
  %1073 = vmatprep.subr.mxu0 0.0
  %1074 = vmatpush1.xpose.msra.mxu0 0.0
  %1075 = vmatprep.subr.mxu0 0.0
  %1076 = vmatpush1.xpose.msra.mxu0 0.0
  %1077 = vmatprep.mubr.f32.mxu0 0.0
  %1078 = vmatmul.mubr.f32.gmra.mrb[0].mxu0 %v1009
  %v1079 = vpop.f32.mrb[0].mxu0
  %v1080 = vadd.f32 0.0, %v1079
  %v1081 = vpop.f32.mrb[0].mxu0
  %1082 = vdwg.mxu0
  %1083 = vrot.lane.b32.xlu0 %v187, 112
  %v1084 = vpop.permute.xlu0 %1083
  %1085 = vrot.lane.b32.xlu0 %v268, 112
  %v1086 = vpop.permute.xlu0 %1085
  %v1087 = vsel %vm352, %v1084, 0
  %v1089 = vsel %vm352, %v1086, 0
  %1091 = vmatprep.subr.mxu0 0.0
  %1092 = vmatpush1.xpose.msra.mxu0 %v1089
  %1093 = vmatprep.subr.mxu0 0.0
  %1094 = vmatpush1.xpose.msra.mxu0 0.0
  %1095 = vmatprep.subr.mxu0 0.0
  %1096 = vmatpush1.xpose.msra.mxu0 0.0
  %1097 = vmatprep.subr.mxu0 0.0
  %1098 = vmatpush1.xpose.msra.mxu0 0.0
  %1099 = vmatprep.subr.mxu0 0.0
  %1100 = vmatpush1.xpose.msra.mxu0 0.0
  %1101 = vmatprep.subr.mxu0 0.0
  %1102 = vmatpush1.xpose.msra.mxu0 0.0
  %1103 = vmatprep.subr.mxu0 0.0
  %1104 = vmatpush1.xpose.msra.mxu0 0.0
  %1105 = vmatprep.subr.mxu0 0.0
  %1106 = vmatpush1.xpose.msra.mxu0 0.0
  %1107 = vmatprep.subr.mxu0 0.0
  %1108 = vmatpush1.xpose.msra.mxu0 0.0
  %1109 = vmatprep.subr.mxu0 0.0
  %1110 = vmatpush1.xpose.msra.mxu0 0.0
  %1111 = vmatprep.subr.mxu0 0.0
  %1112 = vmatpush1.xpose.msra.mxu0 0.0
  %1113 = vmatprep.subr.mxu0 0.0
  %1114 = vmatpush1.xpose.msra.mxu0 0.0
  %1115 = vmatprep.subr.mxu0 0.0
  %1116 = vmatpush1.xpose.msra.mxu0 0.0
  %1117 = vmatprep.subr.mxu0 0.0
  %1118 = vmatpush1.xpose.msra.mxu0 0.0
  %1119 = vmatprep.subr.mxu0 0.0
  %1120 = vmatpush1.xpose.msra.mxu0 0.0
  %1121 = vmatprep.subr.mxu0 0.0
  %1122 = vmatpush1.xpose.msra.mxu0 0.0
  %1123 = vmatprep.subr.mxu0 0.0
  %1124 = vmatpush1.xpose.msra.mxu0 0.0
  %1125 = vmatprep.subr.mxu0 0.0
  %1126 = vmatpush1.xpose.msra.mxu0 0.0
  %1127 = vmatprep.subr.mxu0 0.0
  %1128 = vmatpush1.xpose.msra.mxu0 0.0
  %1129 = vmatprep.subr.mxu0 0.0
  %1130 = vmatpush1.xpose.msra.mxu0 0.0
  %1131 = vmatprep.subr.mxu0 0.0
  %1132 = vmatpush1.xpose.msra.mxu0 0.0
  %1133 = vmatprep.subr.mxu0 0.0
  %1134 = vmatpush1.xpose.msra.mxu0 0.0
  %1135 = vmatprep.subr.mxu0 0.0
  %1136 = vmatpush1.xpose.msra.mxu0 0.0
  %1137 = vmatprep.subr.mxu0 0.0
  %1138 = vmatpush1.xpose.msra.mxu0 0.0
  %1139 = vmatprep.subr.mxu0 0.0
  %1140 = vmatpush1.xpose.msra.mxu0 0.0
  %1141 = vmatprep.subr.mxu0 0.0
  %1142 = vmatpush1.xpose.msra.mxu0 0.0
  %1143 = vmatprep.subr.mxu0 0.0
  %1144 = vmatpush1.xpose.msra.mxu0 0.0
  %1145 = vmatprep.subr.mxu0 0.0
  %1146 = vmatpush1.xpose.msra.mxu0 0.0
  %1147 = vmatprep.subr.mxu0 0.0
  %1148 = vmatpush1.xpose.msra.mxu0 0.0
  %1149 = vmatprep.subr.mxu0 0.0
  %1150 = vmatpush1.xpose.msra.mxu0 0.0
  %1151 = vmatprep.subr.mxu0 0.0
  %1152 = vmatpush1.xpose.msra.mxu0 0.0
  %1153 = vmatprep.subr.mxu0 0.0
  %1154 = vmatpush1.xpose.msra.mxu0 0.0
  %1155 = vmatprep.mubr.f32.mxu0 0.0
  %1156 = vmatmul.mubr.f32.gmra.mrb[0].mxu0 %v1087
  %v1157 = vpop.f32.mrb[0].mxu0
  %v1158 = vadd.f32 0.0, %v1157
  %v1159 = vpop.f32.mrb[0].mxu0
  %1160 = vdwg.mxu0
  %v1161 = vsel %vm352, %v1080, -inf
  %1162 = vmax.xlane.f32.xlu0 %v1161
  %v1163 = vpop.xlane.xlu0 %1162
  %v1164 = vsel %vm352, %v1158, -inf
  %1165 = vmax.xlane.f32.xlu0 %v1164
  %v1166 = vpop.xlane.xlu0 %1165
  %v1167 = vsub.f32 %v1080, %v1163
  %v1168 = vsub.f32 %v1158, %v1166
  %v1169 = vmul.f32 %v1167, 1.442695
  %v1170 = vpow.pop %v1169
  %v1171 = vmul.f32 %v1168, 1.442695
  %v1172 = vpow.pop %v1171
  %v1173 = vsel %vm352, %v1170, 0.0
  %1174 = vadd.xlane.f32.xlu0 %v1173
  %v1175 = vpop.xlane.xlu0 %1174
  %v1176 = vsel %vm352, %v1172, 0.0
  %1177 = vadd.xlane.f32.xlu0 %v1176
  %v1178 = vpop.xlane.xlu0 %1177
  %v1179 = vrcp.pop %v1175
  %v1180 = vmul.f32 %v1170, %v1179
  %v1181 = vrcp.pop %v1178
  %v1182 = vmul.f32 %v1172, %v1181
  %1183 = vrot.lane.b32.xlu0 %v344, 112
  %v1184 = vpop.permute.xlu0 %1183
  %v1187 = vsel %vm352, %v1180, 0
  %1189 = vmatprep.subr.mxu0 0.0
  %1190 = vmatpush1.msra.mxu0 %v1184
  %1191 = vmatprep.subr.mxu0 0.0
  %1192 = vmatpush1.msra.mxu0 0.0
  %1193 = vmatprep.subr.mxu0 0.0
  %1194 = vmatpush1.msra.mxu0 0.0
  %1195 = vmatprep.subr.mxu0 0.0
  %1196 = vmatpush1.msra.mxu0 0.0
  %1197 = vmatprep.subr.mxu0 0.0
  %1198 = vmatpush1.msra.mxu0 0.0
  %1199 = vmatprep.subr.mxu0 0.0
  %1200 = vmatpush1.msra.mxu0 0.0
  %1201 = vmatprep.subr.mxu0 0.0
  %1202 = vmatpush1.msra.mxu0 0.0
  %1203 = vmatprep.subr.mxu0 0.0
  %1204 = vmatpush1.msra.mxu0 0.0
  %1205 = vmatprep.subr.mxu0 0.0
  %1206 = vmatpush1.msra.mxu0 0.0
  %1207 = vmatprep.subr.mxu0 0.0
  %1208 = vmatpush1.msra.mxu0 0.0
  %1209 = vmatprep.subr.mxu0 0.0
  %1210 = vmatpush1.msra.mxu0 0.0
  %1211 = vmatprep.subr.mxu0 0.0
  %1212 = vmatpush1.msra.mxu0 0.0
  %1213 = vmatprep.subr.mxu0 0.0
  %1214 = vmatpush1.msra.mxu0 0.0
  %1215 = vmatprep.subr.mxu0 0.0
  %1216 = vmatpush1.msra.mxu0 0.0
  %1217 = vmatprep.subr.mxu0 0.0
  %1218 = vmatpush1.msra.mxu0 0.0
  %1219 = vmatprep.subr.mxu0 0.0
  %1220 = vmatpush1.msra.mxu0 0.0
  %1221 = vmatprep.subr.mxu0 0.0
  %1222 = vmatpush1.msra.mxu0 0.0
  %1223 = vmatprep.subr.mxu0 0.0
  %1224 = vmatpush1.msra.mxu0 0.0
  %1225 = vmatprep.subr.mxu0 0.0
  %1226 = vmatpush1.msra.mxu0 0.0
  %1227 = vmatprep.subr.mxu0 0.0
  %1228 = vmatpush1.msra.mxu0 0.0
  %1229 = vmatprep.subr.mxu0 0.0
  %1230 = vmatpush1.msra.mxu0 0.0
  %1231 = vmatprep.subr.mxu0 0.0
  %1232 = vmatpush1.msra.mxu0 0.0
  %1233 = vmatprep.subr.mxu0 0.0
  %1234 = vmatpush1.msra.mxu0 0.0
  %1235 = vmatprep.subr.mxu0 0.0
  %1236 = vmatpush1.msra.mxu0 0.0
  %1237 = vmatprep.subr.mxu0 0.0
  %1238 = vmatpush1.msra.mxu0 0.0
  %1239 = vmatprep.subr.mxu0 0.0
  %1240 = vmatpush1.msra.mxu0 0.0
  %1241 = vmatprep.subr.mxu0 0.0
  %1242 = vmatpush1.msra.mxu0 0.0
  %1243 = vmatprep.subr.mxu0 0.0
  %1244 = vmatpush1.msra.mxu0 0.0
  %1245 = vmatprep.subr.mxu0 0.0
  %1246 = vmatpush1.msra.mxu0 0.0
  %1247 = vmatprep.subr.mxu0 0.0
  %1248 = vmatpush1.msra.mxu0 0.0
  %1249 = vmatprep.subr.mxu0 0.0
  %1250 = vmatpush1.msra.mxu0 0.0
  %1251 = vmatprep.subr.mxu0 0.0
  %1252 = vmatpush1.msra.mxu0 0.0
  %1253 = vmatprep.mubr.f32.mxu0 0.0
  %1254 = vmatmul.mubr.f32.gmra.mrb[0].mxu0 %v1187
  %v1255 = vpop.f32.mrb[0].mxu0
  %v1256 = vadd.f32 0.0, %v1255
  %v1257 = vpop.f32.mrb[0].mxu0
  %1258 = vdwg.mxu0
  %1259 = vrot.lane.b32.xlu0 %v349, 112
  %v1260 = vpop.permute.xlu0 %1259
  %v1263 = vsel %vm352, %v1182, 0
  %1265 = vmatprep.subr.mxu0 0.0
  %1266 = vmatpush1.msra.mxu0 %v1260
  %1267 = vmatprep.subr.mxu0 0.0
  %1268 = vmatpush1.msra.mxu0 0.0
  %1269 = vmatprep.subr.mxu0 0.0
  %1270 = vmatpush1.msra.mxu0 0.0
  %1271 = vmatprep.subr.mxu0 0.0
  %1272 = vmatpush1.msra.mxu0 0.0
  %1273 = vmatprep.subr.mxu0 0.0
  %1274 = vmatpush1.msra.mxu0 0.0
  %1275 = vmatprep.subr.mxu0 0.0
  %1276 = vmatpush1.msra.mxu0 0.0
  %1277 = vmatprep.subr.mxu0 0.0
  %1278 = vmatpush1.msra.mxu0 0.0
  %1279 = vmatprep.subr.mxu0 0.0
  %1280 = vmatpush1.msra.mxu0 0.0
  %1281 = vmatprep.subr.mxu0 0.0
  %1282 = vmatpush1.msra.mxu0 0.0
  %1283 = vmatprep.subr.mxu0 0.0
  %1284 = vmatpush1.msra.mxu0 0.0
  %1285 = vmatprep.subr.mxu0 0.0
  %1286 = vmatpush1.msra.mxu0 0.0
  %1287 = vmatprep.subr.mxu0 0.0
  %1288 = vmatpush1.msra.mxu0 0.0
  %1289 = vmatprep.subr.mxu0 0.0
  %1290 = vmatpush1.msra.mxu0 0.0
  %1291 = vmatprep.subr.mxu0 0.0
  %1292 = vmatpush1.msra.mxu0 0.0
  %1293 = vmatprep.subr.mxu0 0.0
  %1294 = vmatpush1.msra.mxu0 0.0
  %1295 = vmatprep.subr.mxu0 0.0
  %1296 = vmatpush1.msra.mxu0 0.0
  %1297 = vmatprep.subr.mxu0 0.0
  %1298 = vmatpush1.msra.mxu0 0.0
  %1299 = vmatprep.subr.mxu0 0.0
  %1300 = vmatpush1.msra.mxu0 0.0
  %1301 = vmatprep.subr.mxu0 0.0
  %1302 = vmatpush1.msra.mxu0 0.0
  %1303 = vmatprep.subr.mxu0 0.0
  %1304 = vmatpush1.msra.mxu0 0.0
  %1305 = vmatprep.subr.mxu0 0.0
  %1306 = vmatpush1.msra.mxu0 0.0
  %1307 = vmatprep.subr.mxu0 0.0
  %1308 = vmatpush1.msra.mxu0 0.0
  %1309 = vmatprep.subr.mxu0 0.0
  %1310 = vmatpush1.msra.mxu0 0.0
  %1311 = vmatprep.subr.mxu0 0.0
  %1312 = vmatpush1.msra.mxu0 0.0
  %1313 = vmatprep.subr.mxu0 0.0
  %1314 = vmatpush1.msra.mxu0 0.0
  %1315 = vmatprep.subr.mxu0 0.0
  %1316 = vmatpush1.msra.mxu0 0.0
  %1317 = vmatprep.subr.mxu0 0.0
  %1318 = vmatpush1.msra.mxu0 0.0
  %1319 = vmatprep.subr.mxu0 0.0
  %1320 = vmatpush1.msra.mxu0 0.0
  %1321 = vmatprep.subr.mxu0 0.0
  %1322 = vmatpush1.msra.mxu0 0.0
  %1323 = vmatprep.subr.mxu0 0.0
  %1324 = vmatpush1.msra.mxu0 0.0
  %1325 = vmatprep.subr.mxu0 0.0
  %1326 = vmatpush1.msra.mxu0 0.0
  %1327 = vmatprep.subr.mxu0 0.0
  %1328 = vmatpush1.msra.mxu0 0.0
  %1329 = vmatprep.mubr.f32.mxu0 0.0
  %1330 = vmatmul.mubr.f32.gmra.mrb[0].mxu0 %v1263
  %v1331 = vpop.f32.mrb[0].mxu0
  %v1332 = vadd.f32 0.0, %v1331
  %v1333 = vpop.f32.mrb[0].mxu0
  %1334 = vdwg.mxu0
  %1335 = vrot.lane.b32.xlu0 %v182, 104
  %v1336 = vpop.permute.xlu0 %1335
  %1337 = vrot.lane.b32.xlu0 %v263, 104
  %v1338 = vpop.permute.xlu0 %1337
  %v1339 = vsel %vm352, %v1336, 0
  %v1341 = vsel %vm352, %v1338, 0
  %1343 = vmatprep.subr.mxu0 0.0
  %1344 = vmatpush1.xpose.msra.mxu0 %v1341
  %1345 = vmatprep.subr.mxu0 0.0
  %1346 = vmatpush1.xpose.msra.mxu0 0.0
  %1347 = vmatprep.subr.mxu0 0.0
  %1348 = vmatpush1.xpose.msra.mxu0 0.0
  %1349 = vmatprep.subr.mxu0 0.0
  %1350 = vmatpush1.xpose.msra.mxu0 0.0
  %1351 = vmatprep.subr.mxu0 0.0
  %1352 = vmatpush1.xpose.msra.mxu0 0.0
  %1353 = vmatprep.subr.mxu0 0.0
  %1354 = vmatpush1.xpose.msra.mxu0 0.0
  %1355 = vmatprep.subr.mxu0 0.0
  %1356 = vmatpush1.xpose.msra.mxu0 0.0
  %1357 = vmatprep.subr.mxu0 0.0
  %1358 = vmatpush1.xpose.msra.mxu0 0.0
  %1359 = vmatprep.subr.mxu0 0.0
  %1360 = vmatpush1.xpose.msra.mxu0 0.0
  %1361 = vmatprep.subr.mxu0 0.0
  %1362 = vmatpush1.xpose.msra.mxu0 0.0
  %1363 = vmatprep.subr.mxu0 0.0
  %1364 = vmatpush1.xpose.msra.mxu0 0.0
  %1365 = vmatprep.subr.mxu0 0.0
  %1366 = vmatpush1.xpose.msra.mxu0 0.0
  %1367 = vmatprep.subr.mxu0 0.0
  %1368 = vmatpush1.xpose.msra.mxu0 0.0
  %1369 = vmatprep.subr.mxu0 0.0
  %1370 = vmatpush1.xpose.msra.mxu0 0.0
  %1371 = vmatprep.subr.mxu0 0.0
  %1372 = vmatpush1.xpose.msra.mxu0 0.0
  %1373 = vmatprep.subr.mxu0 0.0
  %1374 = vmatpush1.xpose.msra.mxu0 0.0
  %1375 = vmatprep.subr.mxu0 0.0
  %1376 = vmatpush1.xpose.msra.mxu0 0.0
  %1377 = vmatprep.subr.mxu0 0.0
  %1378 = vmatpush1.xpose.msra.mxu0 0.0
  %1379 = vmatprep.subr.mxu0 0.0
  %1380 = vmatpush1.xpose.msra.mxu0 0.0
  %1381 = vmatprep.subr.mxu0 0.0
  %1382 = vmatpush1.xpose.msra.mxu0 0.0
  %1383 = vmatprep.subr.mxu0 0.0
  %1384 = vmatpush1.xpose.msra.mxu0 0.0
  %1385 = vmatprep.subr.mxu0 0.0
  %1386 = vmatpush1.xpose.msra.mxu0 0.0
  %1387 = vmatprep.subr.mxu0 0.0
  %1388 = vmatpush1.xpose.msra.mxu0 0.0
  %1389 = vmatprep.subr.mxu0 0.0
  %1390 = vmatpush1.xpose.msra.mxu0 0.0
  %1391 = vmatprep.subr.mxu0 0.0
  %1392 = vmatpush1.xpose.msra.mxu0 0.0
  %1393 = vmatprep.subr.mxu0 0.0
  %1394 = vmatpush1.xpose.msra.mxu0 0.0
  %1395 = vmatprep.subr.mxu0 0.0
  %1396 = vmatpush1.xpose.msra.mxu0 0.0
  %1397 = vmatprep.subr.mxu0 0.0
  %1398 = vmatpush1.xpose.msra.mxu0 0.0
  %1399 = vmatprep.subr.mxu0 0.0
  %1400 = vmatpush1.xpose.msra.mxu0 0.0
  %1401 = vmatprep.subr.mxu0 0.0
  %1402 = vmatpush1.xpose.msra.mxu0 0.0
  %1403 = vmatprep.subr.mxu0 0.0
  %1404 = vmatpush1.xpose.msra.mxu0 0.0
  %1405 = vmatprep.subr.mxu0 0.0
  %1406 = vmatpush1.xpose.msra.mxu0 0.0
  %1407 = vmatprep.mubr.f32.mxu0 0.0
  %1408 = vmatmul.mubr.f32.gmra.mrb[0].mxu0 %v1339
  %v1409 = vpop.f32.mrb[0].mxu0
  %v1410 = vadd.f32 0.0, %v1409
  %v1411 = vpop.f32.mrb[0].mxu0
  %1412 = vdwg.mxu0
  %1413 = vrot.lane.b32.xlu0 %v187, 104
  %v1414 = vpop.permute.xlu0 %1413
  %1415 = vrot.lane.b32.xlu0 %v268, 104
  %v1416 = vpop.permute.xlu0 %1415
  %v1417 = vsel %vm352, %v1414, 0
  %v1419 = vsel %vm352, %v1416, 0
  %1421 = vmatprep.subr.mxu0 0.0
  %1422 = vmatpush1.xpose.msra.mxu0 %v1419
  %1423 = vmatprep.subr.mxu0 0.0
  %1424 = vmatpush1.xpose.msra.mxu0 0.0
  %1425 = vmatprep.subr.mxu0 0.0
  %1426 = vmatpush1.xpose.msra.mxu0 0.0
  %1427 = vmatprep.subr.mxu0 0.0
  %1428 = vmatpush1.xpose.msra.mxu0 0.0
  %1429 = vmatprep.subr.mxu0 0.0
  %1430 = vmatpush1.xpose.msra.mxu0 0.0
  %1431 = vmatprep.subr.mxu0 0.0
  %1432 = vmatpush1.xpose.msra.mxu0 0.0
  %1433 = vmatprep.subr.mxu0 0.0
  %1434 = vmatpush1.xpose.msra.mxu0 0.0
  %1435 = vmatprep.subr.mxu0 0.0
  %1436 = vmatpush1.xpose.msra.mxu0 0.0
  %1437 = vmatprep.subr.mxu0 0.0
  %1438 = vmatpush1.xpose.msra.mxu0 0.0
  %1439 = vmatprep.subr.mxu0 0.0
  %1440 = vmatpush1.xpose.msra.mxu0 0.0
  %1441 = vmatprep.subr.mxu0 0.0
  %1442 = vmatpush1.xpose.msra.mxu0 0.0
  %1443 = vmatprep.subr.mxu0 0.0
  %1444 = vmatpush1.xpose.msra.mxu0 0.0
  %1445 = vmatprep.subr.mxu0 0.0
  %1446 = vmatpush1.xpose.msra.mxu0 0.0
  %1447 = vmatprep.subr.mxu0 0.0
  %1448 = vmatpush1.xpose.msra.mxu0 0.0
  %1449 = vmatprep.subr.mxu0 0.0
  %1450 = vmatpush1.xpose.msra.mxu0 0.0
  %1451 = vmatprep.subr.mxu0 0.0
  %1452 = vmatpush1.xpose.msra.mxu0 0.0
  %1453 = vmatprep.subr.mxu0 0.0
  %1454 = vmatpush1.xpose.msra.mxu0 0.0
  %1455 = vmatprep.subr.mxu0 0.0
  %1456 = vmatpush1.xpose.msra.mxu0 0.0
  %1457 = vmatprep.subr.mxu0 0.0
  %1458 = vmatpush1.xpose.msra.mxu0 0.0
  %1459 = vmatprep.subr.mxu0 0.0
  %1460 = vmatpush1.xpose.msra.mxu0 0.0
  %1461 = vmatprep.subr.mxu0 0.0
  %1462 = vmatpush1.xpose.msra.mxu0 0.0
  %1463 = vmatprep.subr.mxu0 0.0
  %1464 = vmatpush1.xpose.msra.mxu0 0.0
  %1465 = vmatprep.subr.mxu0 0.0
  %1466 = vmatpush1.xpose.msra.mxu0 0.0
  %1467 = vmatprep.subr.mxu0 0.0
  %1468 = vmatpush1.xpose.msra.mxu0 0.0
  %1469 = vmatprep.subr.mxu0 0.0
  %1470 = vmatpush1.xpose.msra.mxu0 0.0
  %1471 = vmatprep.subr.mxu0 0.0
  %1472 = vmatpush1.xpose.msra.mxu0 0.0
  %1473 = vmatprep.subr.mxu0 0.0
  %1474 = vmatpush1.xpose.msra.mxu0 0.0
  %1475 = vmatprep.subr.mxu0 0.0
  %1476 = vmatpush1.xpose.msra.mxu0 0.0
  %1477 = vmatprep.subr.mxu0 0.0
  %1478 = vmatpush1.xpose.msra.mxu0 0.0
  %1479 = vmatprep.subr.mxu0 0.0
  %1480 = vmatpush1.xpose.msra.mxu0 0.0
  %1481 = vmatprep.subr.mxu0 0.0
  %1482 = vmatpush1.xpose.msra.mxu0 0.0
  %1483 = vmatprep.subr.mxu0 0.0
  %1484 = vmatpush1.xpose.msra.mxu0 0.0
  %1485 = vmatprep.mubr.f32.mxu0 0.0
  %1486 = vmatmul.mubr.f32.gmra.mrb[0].mxu0 %v1417
  %v1487 = vpop.f32.mrb[0].mxu0
  %v1488 = vadd.f32 0.0, %v1487
  %v1489 = vpop.f32.mrb[0].mxu0
  %1490 = vdwg.mxu0
  %v1491 = vsel %vm352, %v1410, -inf
  %1492 = vmax.xlane.f32.xlu0 %v1491
  %v1493 = vpop.xlane.xlu0 %1492
  %v1494 = vsel %vm352, %v1488, -inf
  %1495 = vmax.xlane.f32.xlu0 %v1494
  %v1496 = vpop.xlane.xlu0 %1495
  %v1497 = vsub.f32 %v1410, %v1493
  %v1498 = vsub.f32 %v1488, %v1496
  %v1499 = vmul.f32 %v1497, 1.442695
  %v1500 = vpow.pop %v1499
  %v1501 = vmul.f32 %v1498, 1.442695
  %v1502 = vpow.pop %v1501
  %v1503 = vsel %vm352, %v1500, 0.0
  %1504 = vadd.xlane.f32.xlu0 %v1503
  %v1505 = vpop.xlane.xlu0 %1504
  %v1506 = vsel %vm352, %v1502, 0.0
  %1507 = vadd.xlane.f32.xlu0 %v1506
  %v1508 = vpop.xlane.xlu0 %1507
  %v1509 = vrcp.pop %v1505
  %v1510 = vmul.f32 %v1500, %v1509
  %v1511 = vrcp.pop %v1508
  %v1512 = vmul.f32 %v1502, %v1511
  %1513 = vrot.lane.b32.xlu0 %v344, 104
  %v1514 = vpop.permute.xlu0 %1513
  %v1517 = vsel %vm352, %v1510, 0
  %1519 = vmatprep.subr.mxu0 0.0
  %1520 = vmatpush1.msra.mxu0 %v1514
  %1521 = vmatprep.subr.mxu0 0.0
  %1522 = vmatpush1.msra.mxu0 0.0
  %1523 = vmatprep.subr.mxu0 0.0
  %1524 = vmatpush1.msra.mxu0 0.0
  %1525 = vmatprep.subr.mxu0 0.0
  %1526 = vmatpush1.msra.mxu0 0.0
  %1527 = vmatprep.subr.mxu0 0.0
  %1528 = vmatpush1.msra.mxu0 0.0
  %1529 = vmatprep.subr.mxu0 0.0
  %1530 = vmatpush1.msra.mxu0 0.0
  %1531 = vmatprep.subr.mxu0 0.0
  %1532 = vmatpush1.msra.mxu0 0.0
  %1533 = vmatprep.subr.mxu0 0.0
  %1534 = vmatpush1.msra.mxu0 0.0
  %1535 = vmatprep.subr.mxu0 0.0
  %1536 = vmatpush1.msra.mxu0 0.0
  %1537 = vmatprep.subr.mxu0 0.0
  %1538 = vmatpush1.msra.mxu0 0.0
  %1539 = vmatprep.subr.mxu0 0.0
  %1540 = vmatpush1.msra.mxu0 0.0
  %1541 = vmatprep.subr.mxu0 0.0
  %1542 = vmatpush1.msra.mxu0 0.0
  %1543 = vmatprep.subr.mxu0 0.0
  %1544 = vmatpush1.msra.mxu0 0.0
  %1545 = vmatprep.subr.mxu0 0.0
  %1546 = vmatpush1.msra.mxu0 0.0
  %1547 = vmatprep.subr.mxu0 0.0
  %1548 = vmatpush1.msra.mxu0 0.0
  %1549 = vmatprep.subr.mxu0 0.0
  %1550 = vmatpush1.msra.mxu0 0.0
  %1551 = vmatprep.subr.mxu0 0.0
  %1552 = vmatpush1.msra.mxu0 0.0
  %1553 = vmatprep.subr.mxu0 0.0
  %1554 = vmatpush1.msra.mxu0 0.0
  %1555 = vmatprep.subr.mxu0 0.0
  %1556 = vmatpush1.msra.mxu0 0.0
  %1557 = vmatprep.subr.mxu0 0.0
  %1558 = vmatpush1.msra.mxu0 0.0
  %1559 = vmatprep.subr.mxu0 0.0
  %1560 = vmatpush1.msra.mxu0 0.0
  %1561 = vmatprep.subr.mxu0 0.0
  %1562 = vmatpush1.msra.mxu0 0.0
  %1563 = vmatprep.subr.mxu0 0.0
  %1564 = vmatpush1.msra.mxu0 0.0
  %1565 = vmatprep.subr.mxu0 0.0
  %1566 = vmatpush1.msra.mxu0 0.0
  %1567 = vmatprep.subr.mxu0 0.0
  %1568 = vmatpush1.msra.mxu0 0.0
  %1569 = vmatprep.subr.mxu0 0.0
  %1570 = vmatpush1.msra.mxu0 0.0
  %1571 = vmatprep.subr.mxu0 0.0
  %1572 = vmatpush1.msra.mxu0 0.0
  %1573 = vmatprep.subr.mxu0 0.0
  %1574 = vmatpush1.msra.mxu0 0.0
  %1575 = vmatprep.subr.mxu0 0.0
  %1576 = vmatpush1.msra.mxu0 0.0
  %1577 = vmatprep.subr.mxu0 0.0
  %1578 = vmatpush1.msra.mxu0 0.0
  %1579 = vmatprep.subr.mxu0 0.0
  %1580 = vmatpush1.msra.mxu0 0.0
  %1581 = vmatprep.subr.mxu0 0.0
  %1582 = vmatpush1.msra.mxu0 0.0
  %1583 = vmatprep.mubr.f32.mxu0 0.0
  %1584 = vmatmul.mubr.f32.gmra.mrb[0].mxu0 %v1517
  %v1585 = vpop.f32.mrb[0].mxu0
  %v1586 = vadd.f32 0.0, %v1585
  %v1587 = vpop.f32.mrb[0].mxu0
  %1588 = vdwg.mxu0
  %1589 = vrot.lane.b32.xlu0 %v349, 104
  %v1590 = vpop.permute.xlu0 %1589
  %v1593 = vsel %vm352, %v1512, 0
  %1595 = vmatprep.subr.mxu0 0.0
  %1596 = vmatpush1.msra.mxu0 %v1590
  %1597 = vmatprep.subr.mxu0 0.0
  %1598 = vmatpush1.msra.mxu0 0.0
  %1599 = vmatprep.subr.mxu0 0.0
  %1600 = vmatpush1.msra.mxu0 0.0
  %1601 = vmatprep.subr.mxu0 0.0
  %1602 = vmatpush1.msra.mxu0 0.0
  %1603 = vmatprep.subr.mxu0 0.0
  %1604 = vmatpush1.msra.mxu0 0.0
  %1605 = vmatprep.subr.mxu0 0.0
  %1606 = vmatpush1.msra.mxu0 0.0
  %1607 = vmatprep.subr.mxu0 0.0
  %1608 = vmatpush1.msra.mxu0 0.0
  %1609 = vmatprep.subr.mxu0 0.0
  %1610 = vmatpush1.msra.mxu0 0.0
  %1611 = vmatprep.subr.mxu0 0.0
  %1612 = vmatpush1.msra.mxu0 0.0
  %1613 = vmatprep.subr.mxu0 0.0
  %1614 = vmatpush1.msra.mxu0 0.0
  %1615 = vmatprep.subr.mxu0 0.0
  %1616 = vmatpush1.msra.mxu0 0.0
  %1617 = vmatprep.subr.mxu0 0.0
  %1618 = vmatpush1.msra.mxu0 0.0
  %1619 = vmatprep.subr.mxu0 0.0
  %1620 = vmatpush1.msra.mxu0 0.0
  %1621 = vmatprep.subr.mxu0 0.0
  %1622 = vmatpush1.msra.mxu0 0.0
  %1623 = vmatprep.subr.mxu0 0.0
  %1624 = vmatpush1.msra.mxu0 0.0
  %1625 = vmatprep.subr.mxu0 0.0
  %1626 = vmatpush1.msra.mxu0 0.0
  %1627 = vmatprep.subr.mxu0 0.0
  %1628 = vmatpush1.msra.mxu0 0.0
  %1629 = vmatprep.subr.mxu0 0.0
  %1630 = vmatpush1.msra.mxu0 0.0
  %1631 = vmatprep.subr.mxu0 0.0
  %1632 = vmatpush1.msra.mxu0 0.0
  %1633 = vmatprep.subr.mxu0 0.0
  %1634 = vmatpush1.msra.mxu0 0.0
  %1635 = vmatprep.subr.mxu0 0.0
  %1636 = vmatpush1.msra.mxu0 0.0
  %1637 = vmatprep.subr.mxu0 0.0
  %1638 = vmatpush1.msra.mxu0 0.0
  %1639 = vmatprep.subr.mxu0 0.0
  %1640 = vmatpush1.msra.mxu0 0.0
  %1641 = vmatprep.subr.mxu0 0.0
  %1642 = vmatpush1.msra.mxu0 0.0
  %1643 = vmatprep.subr.mxu0 0.0
  %1644 = vmatpush1.msra.mxu0 0.0
  %1645 = vmatprep.subr.mxu0 0.0
  %1646 = vmatpush1.msra.mxu0 0.0
  %1647 = vmatprep.subr.mxu0 0.0
  %1648 = vmatpush1.msra.mxu0 0.0
  %1649 = vmatprep.subr.mxu0 0.0
  %1650 = vmatpush1.msra.mxu0 0.0
  %1651 = vmatprep.subr.mxu0 0.0
  %1652 = vmatpush1.msra.mxu0 0.0
  %1653 = vmatprep.subr.mxu0 0.0
  %1654 = vmatpush1.msra.mxu0 0.0
  %1655 = vmatprep.subr.mxu0 0.0
  %1656 = vmatpush1.msra.mxu0 0.0
  %1657 = vmatprep.subr.mxu0 0.0
  %1658 = vmatpush1.msra.mxu0 0.0
  %1659 = vmatprep.mubr.f32.mxu0 0.0
  %1660 = vmatmul.mubr.f32.gmra.mrb[0].mxu0 %v1593
  %v1661 = vpop.f32.mrb[0].mxu0
  %v1662 = vadd.f32 0.0, %v1661
  %v1663 = vpop.f32.mrb[0].mxu0
  %1664 = vdwg.mxu0
  %1667 = vrot.lane.b32.xlu0 %v925, 8
  %v1668 = vpop.permute.xlu0 %1667
  %1669 = vrot.lane.b32.xlu0 %v1002, 8
  %v1670 = vpop.permute.xlu0 %1669
  %1675 = vrot.lane.b32.xlu0 %v1256, 16
  %v1676 = vpop.permute.xlu0 %1675
  %1677 = vrot.lane.b32.xlu0 %v1332, 16
  %v1678 = vpop.permute.xlu0 %1677
  %1683 = vrot.lane.b32.xlu0 %v1586, 24
  %v1684 = vpop.permute.xlu0 %1683
  %1685 = vrot.lane.b32.xlu0 %v1662, 24
  %v1686 = vpop.permute.xlu0 %1685
  %v1689 = vsel %vm352, %v597, %v1668
  %v1690 = vsel %vm352, %v670, %v1670
  %vm1691 = vcmask 130048
  %v1692 = vsel %vm1691, %v1689, %v1676
  %v1693 = vsel %vm1691, %v1690, %v1678
  %vm1694 = vcmask 195584
  %v1695 = vsel %vm1694, %v1692, %v1684
  %v1696 = vsel %vm1694, %v1693, %v1686
  %v1698 = vlaneseq
  %v1699 = vshrl.u32 %v1698, 7
  %v1700 = vsub.s32 0, %v1699
  %v1701 = vrot.slane %v95, %v1700
  %v1704 = vsel %vm108, %v1695, 0
  %v1707 = vsel %vm108, %v1696, 0
  %1709 = vmatprep.subr.mxu0 0.0
  %1710 = vmatpush1.msra.mxu0 %v76
  %1711 = vmatprep.subr.mxu0 0.0
  %1712 = vmatpush1.msra.mxu0 %v77
  %1713 = vmatprep.subr.mxu0 0.0
  %1714 = vmatpush1.msra.mxu0 %v78
  %1715 = vmatprep.subr.mxu0 0.0
  %1716 = vmatpush1.msra.mxu0 %v79
  %1717 = vmatprep.subr.mxu0 0.0
  %1718 = vmatpush1.msra.mxu0 0.0
  %1719 = vmatprep.subr.mxu0 0.0
  %1720 = vmatpush1.msra.mxu0 0.0
  %1721 = vmatprep.subr.mxu0 0.0
  %1722 = vmatpush1.msra.mxu0 0.0
  %1723 = vmatprep.subr.mxu0 0.0
  %1724 = vmatpush1.msra.mxu0 0.0
  %1725 = vmatprep.subr.mxu0 0.0
  %1726 = vmatpush1.msra.mxu0 0.0
  %1727 = vmatprep.subr.mxu0 0.0
  %1728 = vmatpush1.msra.mxu0 0.0
  %1729 = vmatprep.subr.mxu0 0.0
  %1730 = vmatpush1.msra.mxu0 0.0
  %1731 = vmatprep.subr.mxu0 0.0
  %1732 = vmatpush1.msra.mxu0 0.0
  %1733 = vmatprep.subr.mxu0 0.0
  %1734 = vmatpush1.msra.mxu0 0.0
  %1735 = vmatprep.subr.mxu0 0.0
  %1736 = vmatpush1.msra.mxu0 0.0
  %1737 = vmatprep.subr.mxu0 0.0
  %1738 = vmatpush1.msra.mxu0 0.0
  %1739 = vmatprep.subr.mxu0 0.0
  %1740 = vmatpush1.msra.mxu0 0.0
  %1741 = vmatprep.subr.mxu0 0.0
  %1742 = vmatpush1.msra.mxu0 0.0
  %1743 = vmatprep.subr.mxu0 0.0
  %1744 = vmatpush1.msra.mxu0 0.0
  %1745 = vmatprep.subr.mxu0 0.0
  %1746 = vmatpush1.msra.mxu0 0.0
  %1747 = vmatprep.subr.mxu0 0.0
  %1748 = vmatpush1.msra.mxu0 0.0
  %1749 = vmatprep.subr.mxu0 0.0
  %1750 = vmatpush1.msra.mxu0 0.0
  %1751 = vmatprep.subr.mxu0 0.0
  %1752 = vmatpush1.msra.mxu0 0.0
  %1753 = vmatprep.subr.mxu0 0.0
  %1754 = vmatpush1.msra.mxu0 0.0
  %1755 = vmatprep.subr.mxu0 0.0
  %1756 = vmatpush1.msra.mxu0 0.0
  %1757 = vmatprep.subr.mxu0 0.0
  %1758 = vmatpush1.msra.mxu0 0.0
  %1759 = vmatprep.subr.mxu0 0.0
  %1760 = vmatpush1.msra.mxu0 0.0
  %1761 = vmatprep.subr.mxu0 0.0
  %1762 = vmatpush1.msra.mxu0 0.0
  %1763 = vmatprep.subr.mxu0 0.0
  %1764 = vmatpush1.msra.mxu0 0.0
  %1765 = vmatprep.subr.mxu0 0.0
  %1766 = vmatpush1.msra.mxu0 0.0
  %1767 = vmatprep.subr.mxu0 0.0
  %1768 = vmatpush1.msra.mxu0 0.0
  %1769 = vmatprep.subr.mxu0 0.0
  %1770 = vmatpush1.msra.mxu0 0.0
  %1771 = vmatprep.subr.mxu0 0.0
  %1772 = vmatpush1.msra.mxu0 0.0
  %1773 = vmatprep.mubr.f32.mxu0 0.0
  %1774 = vmatmul.mubr.f32.gmra.mrb[0].mxu0 %v1704
  %v1775 = vpop.f32.mrb[0].mxu0
  %v1776 = vadd.f32 %v1701, %v1775
  %v1777 = vpop.f32.mrb[0].mxu0
  %1778 = vmatprep.mubr.f32.mxu0 0.0
  %1779 = vmatmul.mubr.f32.gmra.mrb[0].mxu0 %v1707
  %v1780 = vpop.f32.mrb[0].mxu0
  %v1781 = vadd.f32 %v1701, %v1780
  %v1782 = vpop.f32.mrb[0].mxu0
  %1783 = vdwg.mxu0
  %v1784 = vadd.f32 %v62, %v1776
  %v1785 = vadd.f32 %v63, %v1781
  %v1786 = vsel %vm108, %v1784, 0.0
  %1787 = vadd.xlane.f32.xlu0 %v1786
  %v1788 = vpop.xlane.xlu0 %1787
  %v1789 = vsel %vm108, %v1785, 0.0
  %1790 = vadd.xlane.f32.xlu0 %v1789
  %v1791 = vpop.xlane.xlu0 %1790
  %v1792 = vrcp.pop 32.0
  %v1793 = vmul.f32 %v1788, %v1792
  %v1794 = vmul.f32 %v1791, %v1792
  %v1795 = vsub.f32 %v1784, %v1793
  %v1796 = vsub.f32 %v1785, %v1794
  %v1797 = vmul.f32 %v1795, %v1795
  %v1798 = vmul.f32 %v1796, %v1796
  %v1799 = vsel %vm108, %v1797, 0.0
  %1800 = vadd.xlane.f32.xlu0 %v1799
  %v1801 = vpop.xlane.xlu0 %1800
  %v1802 = vsel %vm108, %v1798, 0.0
  %1803 = vadd.xlane.f32.xlu0 %v1802
  %v1804 = vpop.xlane.xlu0 %1803
  %v1805 = vmul.f32 %v1801, %v1792
  %v1806 = vmul.f32 %v1804, %v1792
  %v1807 = vadd.f32 %v1805, 1e-05
  %v1808 = vadd.f32 %v1806, 1e-05
  %v1809 = vrsqrt.pop %v1807
  %v1810 = vrsqrt.pop %v1808
  %v1811 = vmul.f32 %v1795, %v1809
  %v1812 = vmul.f32 %v1796, %v1810
  %v1814 = vlaneseq
  %v1815 = vshrl.u32 %v1814, 7
  %v1816 = vsub.s32 0, %v1815
  %v1817 = vrot.slane %v98, %v1816
  %v1819 = vmul.f32 %v1811, %v1817
  %v1820 = vmul.f32 %v1812, %v1817
  %v1822 = vlaneseq
  %v1823 = vshrl.u32 %v1822, 7
  %v1824 = vsub.s32 0, %v1823
  %v1825 = vrot.slane %v99, %v1824
  %v1827 = vadd.f32 %v1819, %v1825
  %v1828 = vadd.f32 %v1820, %v1825
  %v1830 = vlaneseq
  %v1831 = vshrl.u32 %v1830, 7
  %v1832 = vsub.s32 0, %v1831
  %v1833 = vrot.slane %v96, %v1832
  %v1836 = vsel %vm108, %v1827, 0
  %v1839 = vsel %vm108, %v1828, 0
  %1841 = vmatprep.subr.mxu0 0.0
  %1842 = vmatpush1.msra.mxu0 %v80
  %1843 = vmatprep.subr.mxu0 0.0
  %1844 = vmatpush1.msra.mxu0 %v81
  %1845 = vmatprep.subr.mxu0 0.0
  %1846 = vmatpush1.msra.mxu0 %v82
  %1847 = vmatprep.subr.mxu0 0.0
  %1848 = vmatpush1.msra.mxu0 %v83
  %1849 = vmatprep.subr.mxu0 0.0
  %1850 = vmatpush1.msra.mxu0 0.0
  %1851 = vmatprep.subr.mxu0 0.0
  %1852 = vmatpush1.msra.mxu0 0.0
  %1853 = vmatprep.subr.mxu0 0.0
  %1854 = vmatpush1.msra.mxu0 0.0
  %1855 = vmatprep.subr.mxu0 0.0
  %1856 = vmatpush1.msra.mxu0 0.0
  %1857 = vmatprep.subr.mxu0 0.0
  %1858 = vmatpush1.msra.mxu0 0.0
  %1859 = vmatprep.subr.mxu0 0.0
  %1860 = vmatpush1.msra.mxu0 0.0
  %1861 = vmatprep.subr.mxu0 0.0
  %1862 = vmatpush1.msra.mxu0 0.0
  %1863 = vmatprep.subr.mxu0 0.0
  %1864 = vmatpush1.msra.mxu0 0.0
  %1865 = vmatprep.subr.mxu0 0.0
  %1866 = vmatpush1.msra.mxu0 0.0
  %1867 = vmatprep.subr.mxu0 0.0
  %1868 = vmatpush1.msra.mxu0 0.0
  %1869 = vmatprep.subr.mxu0 0.0
  %1870 = vmatpush1.msra.mxu0 0.0
  %1871 = vmatprep.subr.mxu0 0.0
  %1872 = vmatpush1.msra.mxu0 0.0
  %1873 = vmatprep.subr.mxu0 0.0
  %1874 = vmatpush1.msra.mxu0 0.0
  %1875 = vmatprep.subr.mxu0 0.0
  %1876 = vmatpush1.msra.mxu0 0.0
  %1877 = vmatprep.subr.mxu0 0.0
  %1878 = vmatpush1.msra.mxu0 0.0
  %1879 = vmatprep.subr.mxu0 0.0
  %1880 = vmatpush1.msra.mxu0 0.0
  %1881 = vmatprep.subr.mxu0 0.0
  %1882 = vmatpush1.msra.mxu0 0.0
  %1883 = vmatprep.subr.mxu0 0.0
  %1884 = vmatpush1.msra.mxu0 0.0
  %1885 = vmatprep.subr.mxu0 0.0
  %1886 = vmatpush1.msra.mxu0 0.0
  %1887 = vmatprep.subr.mxu0 0.0
  %1888 = vmatpush1.msra.mxu0 0.0
  %1889 = vmatprep.subr.mxu0 0.0
  %1890 = vmatpush1.msra.mxu0 0.0
  %1891 = vmatprep.subr.mxu0 0.0
  %1892 = vmatpush1.msra.mxu0 0.0
  %1893 = vmatprep.subr.mxu0 0.0
  %1894 = vmatpush1.msra.mxu0 0.0
  %1895 = vmatprep.subr.mxu0 0.0
  %1896 = vmatpush1.msra.mxu0 0.0
  %1897 = vmatprep.subr.mxu0 0.0
  %1898 = vmatpush1.msra.mxu0 0.0
  %1899 = vmatprep.subr.mxu0 0.0
  %1900 = vmatpush1.msra.mxu0 0.0
  %1901 = vmatprep.subr.mxu0 0.0
  %1902 = vmatpush1.msra.mxu0 0.0
  %1903 = vmatprep.subr.mxu0 0.0
  %1904 = vmatpush1.msra.mxu0 0.0
  %1905 = vmatprep.mubr.f32.mxu0 0.0
  %1906 = vmatmul.mubr.f32.gmra.mrb[0].mxu0 %v1836
  %v1907 = vpop.f32.mrb[0].mxu0
  %v1908 = vadd.f32 %v1833, %v1907
  %v1909 = vpop.f32.mrb[0].mxu0
  %1910 = vmatprep.mubr.f32.mxu0 0.0
  %1911 = vmatmul.mubr.f32.gmra.mrb[0].mxu0 %v1839
  %v1912 = vpop.f32.mrb[0].mxu0
  %v1913 = vadd.f32 %v1833, %v1912
  %v1914 = vpop.f32.mrb[0].mxu0
  %1915 = vdwg.mxu0
  %v1916 = vmax.f32 %v1908, 0.0
  %v1917 = vmax.f32 %v1913, 0.0
  %v1919 = vlaneseq
  %v1920 = vshrl.u32 %v1919, 7
  %v1921 = vsub.s32 0, %v1920
  %v1922 = vrot.slane %v97, %v1921
  %vm1924 = vcmask 523264
  %v1926 = vsel %vm1924, %v1916, 0
  %v1929 = vsel %vm1924, %v1917, 0
  %1931 = vmatprep.subr.mxu0 0.0
  %1932 = vmatpush1.msra.mxu0 %v84
  %1933 = vmatprep.subr.mxu0 0.0
  %1934 = vmatpush1.msra.mxu0 %v85
  %1935 = vmatprep.subr.mxu0 0.0
  %1936 = vmatpush1.msra.mxu0 %v86
  %1937 = vmatprep.subr.mxu0 0.0
  %1938 = vmatpush1.msra.mxu0 %v87
  %1939 = vmatprep.subr.mxu0 0.0
  %1940 = vmatpush1.msra.mxu0 %v88
  %1941 = vmatprep.subr.mxu0 0.0
  %1942 = vmatpush1.msra.mxu0 %v89
  %1943 = vmatprep.subr.mxu0 0.0
  %1944 = vmatpush1.msra.mxu0 %v90
  %1945 = vmatprep.subr.mxu0 0.0
  %1946 = vmatpush1.msra.mxu0 %v91
  %1947 = vmatprep.subr.mxu0 0.0
  %1948 = vmatpush1.msra.mxu0 0.0
  %1949 = vmatprep.subr.mxu0 0.0
  %1950 = vmatpush1.msra.mxu0 0.0
  %1951 = vmatprep.subr.mxu0 0.0
  %1952 = vmatpush1.msra.mxu0 0.0
  %1953 = vmatprep.subr.mxu0 0.0
  %1954 = vmatpush1.msra.mxu0 0.0
  %1955 = vmatprep.subr.mxu0 0.0
  %1956 = vmatpush1.msra.mxu0 0.0
  %1957 = vmatprep.subr.mxu0 0.0
  %1958 = vmatpush1.msra.mxu0 0.0
  %1959 = vmatprep.subr.mxu0 0.0
  %1960 = vmatpush1.msra.mxu0 0.0
  %1961 = vmatprep.subr.mxu0 0.0
  %1962 = vmatpush1.msra.mxu0 0.0
  %1963 = vmatprep.subr.mxu0 0.0
  %1964 = vmatpush1.msra.mxu0 0.0
  %1965 = vmatprep.subr.mxu0 0.0
  %1966 = vmatpush1.msra.mxu0 0.0
  %1967 = vmatprep.subr.mxu0 0.0
  %1968 = vmatpush1.msra.mxu0 0.0
  %1969 = vmatprep.subr.mxu0 0.0
  %1970 = vmatpush1.msra.mxu0 0.0
  %1971 = vmatprep.subr.mxu0 0.0
  %1972 = vmatpush1.msra.mxu0 0.0
  %1973 = vmatprep.subr.mxu0 0.0
  %1974 = vmatpush1.msra.mxu0 0.0
  %1975 = vmatprep.subr.mxu0 0.0
  %1976 = vmatpush1.msra.mxu0 0.0
  %1977 = vmatprep.subr.mxu0 0.0
  %1978 = vmatpush1.msra.mxu0 0.0
  %1979 = vmatprep.subr.mxu0 0.0
  %1980 = vmatpush1.msra.mxu0 0.0
  %1981 = vmatprep.subr.mxu0 0.0
  %1982 = vmatpush1.msra.mxu0 0.0
  %1983 = vmatprep.subr.mxu0 0.0
  %1984 = vmatpush1.msra.mxu0 0.0
  %1985 = vmatprep.subr.mxu0 0.0
  %1986 = vmatpush1.msra.mxu0 0.0
  %1987 = vmatprep.subr.mxu0 0.0
  %1988 = vmatpush1.msra.mxu0 0.0
  %1989 = vmatprep.subr.mxu0 0.0
  %1990 = vmatpush1.msra.mxu0 0.0
  %1991 = vmatprep.subr.mxu0 0.0
  %1992 = vmatpush1.msra.mxu0 0.0
  %1993 = vmatprep.subr.mxu0 0.0
  %1994 = vmatpush1.msra.mxu0 0.0
  %1995 = vmatprep.mubr.f32.mxu0 0.0
  %1996 = vmatmul.mubr.f32.gmra.mrb[0].mxu0 %v1926
  %v1997 = vpop.f32.mrb[0].mxu0
  %v1998 = vadd.f32 %v1922, %v1997
  %v1999 = vpop.f32.mrb[0].mxu0
  %2000 = vmatprep.mubr.f32.mxu0 0.0
  %2001 = vmatmul.mubr.f32.gmra.mrb[0].mxu0 %v1929
  %v2002 = vpop.f32.mrb[0].mxu0
  %v2003 = vadd.f32 %v1922, %v2002
  %v2004 = vpop.f32.mrb[0].mxu0
  %2005 = vdwg.mxu0
  %v2006 = vadd.f32 %v1827, %v1998
  %v2007 = vadd.f32 %v1828, %v2003
  %v2008 = vsel %vm108, %v2006, 0.0
  %2009 = vadd.xlane.f32.xlu0 %v2008
  %v2010 = vpop.xlane.xlu0 %2009
  %v2011 = vsel %vm108, %v2007, 0.0
  %2012 = vadd.xlane.f32.xlu0 %v2011
  %v2013 = vpop.xlane.xlu0 %2012
  %v2014 = vmul.f32 %v2010, %v1792
  %v2015 = vmul.f32 %v2013, %v1792
  %v2016 = vsub.f32 %v2006, %v2014
  %v2017 = vsub.f32 %v2007, %v2015
  %v2018 = vmul.f32 %v2016, %v2016
  %v2019 = vmul.f32 %v2017, %v2017
  %v2020 = vsel %vm108, %v2018, 0.0
  %2021 = vadd.xlane.f32.xlu0 %v2020
  %v2022 = vpop.xlane.xlu0 %2021
  %v2023 = vsel %vm108, %v2019, 0.0
  %2024 = vadd.xlane.f32.xlu0 %v2023
  %v2025 = vpop.xlane.xlu0 %2024
  %v2026 = vmul.f32 %v2022, %v1792
  %v2027 = vmul.f32 %v2025, %v1792
  %v2028 = vadd.f32 %v2026, 1e-05
  %v2029 = vadd.f32 %v2027, 1e-05
  %v2030 = vrsqrt.pop %v2028
  %v2031 = vrsqrt.pop %v2029
  %v2032 = vmul.f32 %v2016, %v2030
  %v2033 = vmul.f32 %v2017, %v2031
  %v2035 = vlaneseq
  %v2036 = vshrl.u32 %v2035, 7
  %v2037 = vsub.s32 0, %v2036
  %v2038 = vrot.slane %v100, %v2037
  %v2040 = vmul.f32 %v2032, %v2038
  %v2041 = vmul.f32 %v2033, %v2038
  %v2043 = vlaneseq
  %v2044 = vshrl.u32 %v2043, 7
  %v2045 = vsub.s32 0, %v2044
  %v2046 = vrot.slane %v101, %v2045
  %v2048 = vadd.f32 %v2040, %v2046
  %v2049 = vadd.f32 %v2041, %v2046
  %v2051 = vsel %vm108, %v2048, 0
  %v2054 = vsel %vm108, %v2049, 0
  %2056 = vmatprep.subr.mxu0 0.0
  %2057 = vmatpush1.msra.mxu0 %v64
  %2058 = vmatprep.subr.mxu0 0.0
  %2059 = vmatpush1.msra.mxu0 %v65
  %2060 = vmatprep.subr.mxu0 0.0
  %2061 = vmatpush1.msra.mxu0 %v66
  %2062 = vmatprep.subr.mxu0 0.0
  %2063 = vmatpush1.msra.mxu0 %v67
  %2064 = vmatprep.subr.mxu0 0.0
  %2065 = vmatpush1.msra.mxu0 0.0
  %2066 = vmatprep.subr.mxu0 0.0
  %2067 = vmatpush1.msra.mxu0 0.0
  %2068 = vmatprep.subr.mxu0 0.0
  %2069 = vmatpush1.msra.mxu0 0.0
  %2070 = vmatprep.subr.mxu0 0.0
  %2071 = vmatpush1.msra.mxu0 0.0
  %2072 = vmatprep.subr.mxu0 0.0
  %2073 = vmatpush1.msra.mxu0 0.0
  %2074 = vmatprep.subr.mxu0 0.0
  %2075 = vmatpush1.msra.mxu0 0.0
  %2076 = vmatprep.subr.mxu0 0.0
  %2077 = vmatpush1.msra.mxu0 0.0
  %2078 = vmatprep.subr.mxu0 0.0
  %2079 = vmatpush1.msra.mxu0 0.0
  %2080 = vmatprep.subr.mxu0 0.0
  %2081 = vmatpush1.msra.mxu0 0.0
  %2082 = vmatprep.subr.mxu0 0.0
  %2083 = vmatpush1.msra.mxu0 0.0
  %2084 = vmatprep.subr.mxu0 0.0
  %2085 = vmatpush1.msra.mxu0 0.0
  %2086 = vmatprep.subr.mxu0 0.0
  %2087 = vmatpush1.msra.mxu0 0.0
  %2088 = vmatprep.subr.mxu0 0.0
  %2089 = vmatpush1.msra.mxu0 0.0
  %2090 = vmatprep.subr.mxu0 0.0
  %2091 = vmatpush1.msra.mxu0 0.0
  %2092 = vmatprep.subr.mxu0 0.0
  %2093 = vmatpush1.msra.mxu0 0.0
  %2094 = vmatprep.subr.mxu0 0.0
  %2095 = vmatpush1.msra.mxu0 0.0
  %2096 = vmatprep.subr.mxu0 0.0
  %2097 = vmatpush1.msra.mxu0 0.0
  %2098 = vmatprep.subr.mxu0 0.0
  %2099 = vmatpush1.msra.mxu0 0.0
  %2100 = vmatprep.subr.mxu0 0.0
  %2101 = vmatpush1.msra.mxu0 0.0
  %2102 = vmatprep.subr.mxu0 0.0
  %2103 = vmatpush1.msra.mxu0 0.0
  %2104 = vmatprep.subr.mxu0 0.0
  %2105 = vmatpush1.msra.mxu0 0.0
  %2106 = vmatprep.subr.mxu0 0.0
  %2107 = vmatpush1.msra.mxu0 0.0
  %2108 = vmatprep.subr.mxu0 0.0
  %2109 = vmatpush1.msra.mxu0 0.0
  %2110 = vmatprep.subr.mxu0 0.0
  %2111 = vmatpush1.msra.mxu0 0.0
  %2112 = vmatprep.subr.mxu0 0.0
  %2113 = vmatpush1.msra.mxu0 0.0
  %2114 = vmatprep.subr.mxu0 0.0
  %2115 = vmatpush1.msra.mxu0 0.0
  %2116 = vmatprep.subr.mxu0 0.0
  %2117 = vmatpush1.msra.mxu0 0.0
  %2118 = vmatprep.subr.mxu0 0.0
  %2119 = vmatpush1.msra.mxu0 0.0
  %2120 = vmatprep.mubr.f32.mxu0 0.0
  %2121 = vmatmul.mubr.f32.gmra.mrb[0].mxu0 %v2051
  %v2122 = vpop.f32.mrb[0].mxu0
  %v2123 = vadd.f32 %v106, %v2122
  %v2124 = vpop.f32.mrb[0].mxu0
  %2125 = vmatprep.mubr.f32.mxu0 0.0
  %2126 = vmatmul.mubr.f32.gmra.mrb[0].mxu0 %v2054
  %v2127 = vpop.f32.mrb[0].mxu0
  %v2128 = vadd.f32 %v106, %v2127
  %v2129 = vpop.f32.mrb[0].mxu0
  %2130 = vdwg.mxu0
  %2131 = vmatprep.subr.mxu0 0.0
  %2132 = vmatpush1.msra.mxu0 %v68
  %2133 = vmatprep.subr.mxu0 0.0
  %2134 = vmatpush1.msra.mxu0 %v69
  %2135 = vmatprep.subr.mxu0 0.0
  %2136 = vmatpush1.msra.mxu0 %v70
  %2137 = vmatprep.subr.mxu0 0.0
  %2138 = vmatpush1.msra.mxu0 %v71
  %2139 = vmatprep.subr.mxu0 0.0
  %2140 = vmatpush1.msra.mxu0 0.0
  %2141 = vmatprep.subr.mxu0 0.0
  %2142 = vmatpush1.msra.mxu0 0.0
  %2143 = vmatprep.subr.mxu0 0.0
  %2144 = vmatpush1.msra.mxu0 0.0
  %2145 = vmatprep.subr.mxu0 0.0
  %2146 = vmatpush1.msra.mxu0 0.0
  %2147 = vmatprep.subr.mxu0 0.0
  %2148 = vmatpush1.msra.mxu0 0.0
  %2149 = vmatprep.subr.mxu0 0.0
  %2150 = vmatpush1.msra.mxu0 0.0
  %2151 = vmatprep.subr.mxu0 0.0
  %2152 = vmatpush1.msra.mxu0 0.0
  %2153 = vmatprep.subr.mxu0 0.0
  %2154 = vmatpush1.msra.mxu0 0.0
  %2155 = vmatprep.subr.mxu0 0.0
  %2156 = vmatpush1.msra.mxu0 0.0
  %2157 = vmatprep.subr.mxu0 0.0
  %2158 = vmatpush1.msra.mxu0 0.0
  %2159 = vmatprep.subr.mxu0 0.0
  %2160 = vmatpush1.msra.mxu0 0.0
  %2161 = vmatprep.subr.mxu0 0.0
  %2162 = vmatpush1.msra.mxu0 0.0
  %2163 = vmatprep.subr.mxu0 0.0
  %2164 = vmatpush1.msra.mxu0 0.0
  %2165 = vmatprep.subr.mxu0 0.0
  %2166 = vmatpush1.msra.mxu0 0.0
  %2167 = vmatprep.subr.mxu0 0.0
  %2168 = vmatpush1.msra.mxu0 0.0
  %2169 = vmatprep.subr.mxu0 0.0
  %2170 = vmatpush1.msra.mxu0 0.0
  %2171 = vmatprep.subr.mxu0 0.0
  %2172 = vmatpush1.msra.mxu0 0.0
  %2173 = vmatprep.subr.mxu0 0.0
  %2174 = vmatpush1.msra.mxu0 0.0
  %2175 = vmatprep.subr.mxu0 0.0
  %2176 = vmatpush1.msra.mxu0 0.0
  %2177 = vmatprep.subr.mxu0 0.0
  %2178 = vmatpush1.msra.mxu0 0.0
  %2179 = vmatprep.subr.mxu0 0.0
  %2180 = vmatpush1.msra.mxu0 0.0
  %2181 = vmatprep.subr.mxu0 0.0
  %2182 = vmatpush1.msra.mxu0 0.0
  %2183 = vmatprep.subr.mxu0 0.0
  %2184 = vmatpush1.msra.mxu0 0.0
  %2185 = vmatprep.subr.mxu0 0.0
  %2186 = vmatpush1.msra.mxu0 0.0
  %2187 = vmatprep.subr.mxu0 0.0
  %2188 = vmatpush1.msra.mxu0 0.0
  %2189 = vmatprep.subr.mxu0 0.0
  %2190 = vmatpush1.msra.mxu0 0.0
  %2191 = vmatprep.subr.mxu0 0.0
  %2192 = vmatpush1.msra.mxu0 0.0
  %2193 = vmatprep.subr.mxu0 0.0
  %2194 = vmatpush1.msra.mxu0 0.0
  %2195 = vmatprep.mubr.f32.mxu0 0.0
  %2196 = vmatmul.mubr.f32.gmra.mrb[0].mxu0 %v2051
  %v2197 = vpop.f32.mrb[0].mxu0
  %v2198 = vadd.f32 %v194, %v2197
  %v2199 = vpop.f32.mrb[0].mxu0
  %2200 = vmatprep.mubr.f32.mxu0 0.0
  %2201 = vmatmul.mubr.f32.gmra.mrb[0].mxu0 %v2054
  %v2202 = vpop.f32.mrb[0].mxu0
  %v2203 = vadd.f32 %v194, %v2202
  %v2204 = vpop.f32.mrb[0].mxu0
  %2205 = vdwg.mxu0
  %2206 = vmatprep.subr.mxu0 0.0
  %2207 = vmatpush1.msra.mxu0 %v72
  %2208 = vmatprep.subr.mxu0 0.0
  %2209 = vmatpush1.msra.mxu0 %v73
  %2210 = vmatprep.subr.mxu0 0.0
  %2211 = vmatpush1.msra.mxu0 %v74
  %2212 = vmatprep.subr.mxu0 0.0
  %2213 = vmatpush1.msra.mxu0 %v75
  %2214 = vmatprep.subr.mxu0 0.0
  %2215 = vmatpush1.msra.mxu0 0.0
  %2216 = vmatprep.subr.mxu0 0.0
  %2217 = vmatpush1.msra.mxu0 0.0
  %2218 = vmatprep.subr.mxu0 0.0
  %2219 = vmatpush1.msra.mxu0 0.0
  %2220 = vmatprep.subr.mxu0 0.0
  %2221 = vmatpush1.msra.mxu0 0.0
  %2222 = vmatprep.subr.mxu0 0.0
  %2223 = vmatpush1.msra.mxu0 0.0
  %2224 = vmatprep.subr.mxu0 0.0
  %2225 = vmatpush1.msra.mxu0 0.0
  %2226 = vmatprep.subr.mxu0 0.0
  %2227 = vmatpush1.msra.mxu0 0.0
  %2228 = vmatprep.subr.mxu0 0.0
  %2229 = vmatpush1.msra.mxu0 0.0
  %2230 = vmatprep.subr.mxu0 0.0
  %2231 = vmatpush1.msra.mxu0 0.0
  %2232 = vmatprep.subr.mxu0 0.0
  %2233 = vmatpush1.msra.mxu0 0.0
  %2234 = vmatprep.subr.mxu0 0.0
  %2235 = vmatpush1.msra.mxu0 0.0
  %2236 = vmatprep.subr.mxu0 0.0
  %2237 = vmatpush1.msra.mxu0 0.0
  %2238 = vmatprep.subr.mxu0 0.0
  %2239 = vmatpush1.msra.mxu0 0.0
  %2240 = vmatprep.subr.mxu0 0.0
  %2241 = vmatpush1.msra.mxu0 0.0
  %2242 = vmatprep.subr.mxu0 0.0
  %2243 = vmatpush1.msra.mxu0 0.0
  %2244 = vmatprep.subr.mxu0 0.0
  %2245 = vmatpush1.msra.mxu0 0.0
  %2246 = vmatprep.subr.mxu0 0.0
  %2247 = vmatpush1.msra.mxu0 0.0
  %2248 = vmatprep.subr.mxu0 0.0
  %2249 = vmatpush1.msra.mxu0 0.0
  %2250 = vmatprep.subr.mxu0 0.0
  %2251 = vmatpush1.msra.mxu0 0.0
  %2252 = vmatprep.subr.mxu0 0.0
  %2253 = vmatpush1.msra.mxu0 0.0
  %2254 = vmatprep.subr.mxu0 0.0
  %2255 = vmatpush1.msra.mxu0 0.0
  %2256 = vmatprep.subr.mxu0 0.0
  %2257 = vmatpush1.msra.mxu0 0.0
  %2258 = vmatprep.subr.mxu0 0.0
  %2259 = vmatpush1.msra.mxu0 0.0
  %2260 = vmatprep.subr.mxu0 0.0
  %2261 = vmatpush1.msra.mxu0 0.0
  %2262 = vmatprep.subr.mxu0 0.0
  %2263 = vmatpush1.msra.mxu0 0.0
  %2264 = vmatprep.subr.mxu0 0.0
  %2265 = vmatpush1.msra.mxu0 0.0
  %2266 = vmatprep.subr.mxu0 0.0
  %2267 = vmatpush1.msra.mxu0 0.0
  %2268 = vmatprep.subr.mxu0 0.0
  %2269 = vmatpush1.msra.mxu0 0.0
  %2270 = vmatprep.mubr.f32.mxu0 0.0
  %2271 = vmatmul.mubr.f32.gmra.mrb[0].mxu0 %v2051
  %v2272 = vpop.f32.mrb[0].mxu0
  %v2273 = vadd.f32 %v275, %v2272
  %v2274 = vpop.f32.mrb[0].mxu0
  %2275 = vmatprep.mubr.f32.mxu0 0.0
  %2276 = vmatmul.mubr.f32.gmra.mrb[0].mxu0 %v2054
  %v2277 = vpop.f32.mrb[0].mxu0
  %v2278 = vadd.f32 %v275, %v2277
  %v2279 = vpop.f32.mrb[0].mxu0
  %2280 = vdwg.mxu0
  %v2282 = vsel %vm352, %v2123, 0
  %v2285 = vsel %vm352, %v2198, 0
  %2287 = vmatprep.subr.mxu0 0.0
  %2288 = vmatpush1.xpose.msra.mxu0 %v2285
  %2289 = vmatprep.subr.mxu0 0.0
  %2290 = vmatpush1.xpose.msra.mxu0 0.0
  %2291 = vmatprep.subr.mxu0 0.0
  %2292 = vmatpush1.xpose.msra.mxu0 0.0
  %2293 = vmatprep.subr.mxu0 0.0
  %2294 = vmatpush1.xpose.msra.mxu0 0.0
  %2295 = vmatprep.subr.mxu0 0.0
  %2296 = vmatpush1.xpose.msra.mxu0 0.0
  %2297 = vmatprep.subr.mxu0 0.0
  %2298 = vmatpush1.xpose.msra.mxu0 0.0
  %2299 = vmatprep.subr.mxu0 0.0
  %2300 = vmatpush1.xpose.msra.mxu0 0.0
  %2301 = vmatprep.subr.mxu0 0.0
  %2302 = vmatpush1.xpose.msra.mxu0 0.0
  %2303 = vmatprep.subr.mxu0 0.0
  %2304 = vmatpush1.xpose.msra.mxu0 0.0
  %2305 = vmatprep.subr.mxu0 0.0
  %2306 = vmatpush1.xpose.msra.mxu0 0.0
  %2307 = vmatprep.subr.mxu0 0.0
  %2308 = vmatpush1.xpose.msra.mxu0 0.0
  %2309 = vmatprep.subr.mxu0 0.0
  %2310 = vmatpush1.xpose.msra.mxu0 0.0
  %2311 = vmatprep.subr.mxu0 0.0
  %2312 = vmatpush1.xpose.msra.mxu0 0.0
  %2313 = vmatprep.subr.mxu0 0.0
  %2314 = vmatpush1.xpose.msra.mxu0 0.0
  %2315 = vmatprep.subr.mxu0 0.0
  %2316 = vmatpush1.xpose.msra.mxu0 0.0
  %2317 = vmatprep.subr.mxu0 0.0
  %2318 = vmatpush1.xpose.msra.mxu0 0.0
  %2319 = vmatprep.subr.mxu0 0.0
  %2320 = vmatpush1.xpose.msra.mxu0 0.0
  %2321 = vmatprep.subr.mxu0 0.0
  %2322 = vmatpush1.xpose.msra.mxu0 0.0
  %2323 = vmatprep.subr.mxu0 0.0
  %2324 = vmatpush1.xpose.msra.mxu0 0.0
  %2325 = vmatprep.subr.mxu0 0.0
  %2326 = vmatpush1.xpose.msra.mxu0 0.0
  %2327 = vmatprep.subr.mxu0 0.0
  %2328 = vmatpush1.xpose.msra.mxu0 0.0
  %2329 = vmatprep.subr.mxu0 0.0
  %2330 = vmatpush1.xpose.msra.mxu0 0.0
  %2331 = vmatprep.subr.mxu0 0.0
  %2332 = vmatpush1.xpose.msra.mxu0 0.0
  %2333 = vmatprep.subr.mxu0 0.0
  %2334 = vmatpush1.xpose.msra.mxu0 0.0
  %2335 = vmatprep.subr.mxu0 0.0
  %2336 = vmatpush1.xpose.msra.mxu0 0.0
  %2337 = vmatprep.subr.mxu0 0.0
  %2338 = vmatpush1.xpose.msra.mxu0 0.0
  %2339 = vmatprep.subr.mxu0 0.0
  %2340 = vmatpush1.xpose.msra.mxu0 0.0
  %2341 = vmatprep.subr.mxu0 0.0
  %2342 = vmatpush1.xpose.msra.mxu0 0.0
  %2343 = vmatprep.subr.mxu0 0.0
  %2344 = vmatpush1.xpose.msra.mxu0 0.0
  %2345 = vmatprep.subr.mxu0 0.0
  %2346 = vmatpush1.xpose.msra.mxu0 0.0
  %2347 = vmatprep.subr.mxu0 0.0
  %2348 = vmatpush1.xpose.msra.mxu0 0.0
  %2349 = vmatprep.subr.mxu0 0.0
  %2350 = vmatpush1.xpose.msra.mxu0 0.0
  %2351 = vmatprep.mubr.f32.mxu0 0.0
  %2352 = vmatmul.mubr.f32.gmra.mrb[0].mxu0 %v2282
  %v2353 = vpop.f32.mrb[0].mxu0
  %v2354 = vadd.f32 0.0, %v2353
  %v2355 = vpop.f32.mrb[0].mxu0
  %2356 = vdwg.mxu0
  %v2358 = vsel %vm352, %v2128, 0
  %v2361 = vsel %vm352, %v2203, 0
  %2363 = vmatprep.subr.mxu0 0.0
  %2364 = vmatpush1.xpose.msra.mxu0 %v2361
  %2365 = vmatprep.subr.mxu0 0.0
  %2366 = vmatpush1.xpose.msra.mxu0 0.0
  %2367 = vmatprep.subr.mxu0 0.0
  %2368 = vmatpush1.xpose.msra.mxu0 0.0
  %2369 = vmatprep.subr.mxu0 0.0
  %2370 = vmatpush1.xpose.msra.mxu0 0.0
  %2371 = vmatprep.subr.mxu0 0.0
  %2372 = vmatpush1.xpose.msra.mxu0 0.0
  %2373 = vmatprep.subr.mxu0 0.0
  %2374 = vmatpush1.xpose.msra.mxu0 0.0
  %2375 = vmatprep.subr.mxu0 0.0
  %2376 = vmatpush1.xpose.msra.mxu0 0.0
  %2377 = vmatprep.subr.mxu0 0.0
  %2378 = vmatpush1.xpose.msra.mxu0 0.0
  %2379 = vmatprep.subr.mxu0 0.0
  %2380 = vmatpush1.xpose.msra.mxu0 0.0
  %2381 = vmatprep.subr.mxu0 0.0
  %2382 = vmatpush1.xpose.msra.mxu0 0.0
  %2383 = vmatprep.subr.mxu0 0.0
  %2384 = vmatpush1.xpose.msra.mxu0 0.0
  %2385 = vmatprep.subr.mxu0 0.0
  %2386 = vmatpush1.xpose.msra.mxu0 0.0
  %2387 = vmatprep.subr.mxu0 0.0
  %2388 = vmatpush1.xpose.msra.mxu0 0.0
  %2389 = vmatprep.subr.mxu0 0.0
  %2390 = vmatpush1.xpose.msra.mxu0 0.0
  %2391 = vmatprep.subr.mxu0 0.0
  %2392 = vmatpush1.xpose.msra.mxu0 0.0
  %2393 = vmatprep.subr.mxu0 0.0
  %2394 = vmatpush1.xpose.msra.mxu0 0.0
  %2395 = vmatprep.subr.mxu0 0.0
  %2396 = vmatpush1.xpose.msra.mxu0 0.0
  %2397 = vmatprep.subr.mxu0 0.0
  %2398 = vmatpush1.xpose.msra.mxu0 0.0
  %2399 = vmatprep.subr.mxu0 0.0
  %2400 = vmatpush1.xpose.msra.mxu0 0.0
  %2401 = vmatprep.subr.mxu0 0.0
  %2402 = vmatpush1.xpose.msra.mxu0 0.0
  %2403 = vmatprep.subr.mxu0 0.0
  %2404 = vmatpush1.xpose.msra.mxu0 0.0
  %2405 = vmatprep.subr.mxu0 0.0
  %2406 = vmatpush1.xpose.msra.mxu0 0.0
  %2407 = vmatprep.subr.mxu0 0.0
  %2408 = vmatpush1.xpose.msra.mxu0 0.0
  %2409 = vmatprep.subr.mxu0 0.0
  %2410 = vmatpush1.xpose.msra.mxu0 0.0
  %2411 = vmatprep.subr.mxu0 0.0
  %2412 = vmatpush1.xpose.msra.mxu0 0.0
  %2413 = vmatprep.subr.mxu0 0.0
  %2414 = vmatpush1.xpose.msra.mxu0 0.0
  %2415 = vmatprep.subr.mxu0 0.0
  %2416 = vmatpush1.xpose.msra.mxu0 0.0
  %2417 = vmatprep.subr.mxu0 0.0
  %2418 = vmatpush1.xpose.msra.mxu0 0.0
  %2419 = vmatprep.subr.mxu0 0.0
  %2420 = vmatpush1.xpose.msra.mxu0 0.0
  %2421 = vmatprep.subr.mxu0 0.0
  %2422 = vmatpush1.xpose.msra.mxu0 0.0
  %2423 = vmatprep.subr.mxu0 0.0
  %2424 = vmatpush1.xpose.msra.mxu0 0.0
  %2425 = vmatprep.subr.mxu0 0.0
  %2426 = vmatpush1.xpose.msra.mxu0 0.0
  %2427 = vmatprep.mubr.f32.mxu0 0.0
  %2428 = vmatmul.mubr.f32.gmra.mrb[0].mxu0 %v2358
  %v2429 = vpop.f32.mrb[0].mxu0
  %v2430 = vadd.f32 0.0, %v2429
  %v2431 = vpop.f32.mrb[0].mxu0
  %2432 = vdwg.mxu0
  %v2433 = vsel %vm352, %v2354, -inf
  %2434 = vmax.xlane.f32.xlu0 %v2433
  %v2435 = vpop.xlane.xlu0 %2434
  %v2436 = vsel %vm352, %v2430, -inf
  %2437 = vmax.xlane.f32.xlu0 %v2436
  %v2438 = vpop.xlane.xlu0 %2437
  %v2439 = vsub.f32 %v2354, %v2435
  %v2440 = vsub.f32 %v2430, %v2438
  %v2441 = vmul.f32 %v2439, 1.442695
  %v2442 = vpow.pop %v2441
  %v2443 = vmul.f32 %v2440, 1.442695
  %v2444 = vpow.pop %v2443
  %v2445 = vsel %vm352, %v2442, 0.0
  %2446 = vadd.xlane.f32.xlu0 %v2445
  %v2447 = vpop.xlane.xlu0 %2446
  %v2448 = vsel %vm352, %v2444, 0.0
  %2449 = vadd.xlane.f32.xlu0 %v2448
  %v2450 = vpop.xlane.xlu0 %2449
  %v2451 = vrcp.pop %v2447
  %v2452 = vmul.f32 %v2442, %v2451
  %v2453 = vrcp.pop %v2450
  %v2454 = vmul.f32 %v2444, %v2453
  %v2456 = vsel %vm352, %v2452, 0
  %2458 = vmatprep.subr.mxu0 0.0
  %2459 = vmatpush1.msra.mxu0 %v2273
  %2460 = vmatprep.subr.mxu0 0.0
  %2461 = vmatpush1.msra.mxu0 0.0
  %2462 = vmatprep.subr.mxu0 0.0
  %2463 = vmatpush1.msra.mxu0 0.0
  %2464 = vmatprep.subr.mxu0 0.0
  %2465 = vmatpush1.msra.mxu0 0.0
  %2466 = vmatprep.subr.mxu0 0.0
  %2467 = vmatpush1.msra.mxu0 0.0
  %2468 = vmatprep.subr.mxu0 0.0
  %2469 = vmatpush1.msra.mxu0 0.0
  %2470 = vmatprep.subr.mxu0 0.0
  %2471 = vmatpush1.msra.mxu0 0.0
  %2472 = vmatprep.subr.mxu0 0.0
  %2473 = vmatpush1.msra.mxu0 0.0
  %2474 = vmatprep.subr.mxu0 0.0
  %2475 = vmatpush1.msra.mxu0 0.0
  %2476 = vmatprep.subr.mxu0 0.0
  %2477 = vmatpush1.msra.mxu0 0.0
  %2478 = vmatprep.subr.mxu0 0.0
  %2479 = vmatpush1.msra.mxu0 0.0
  %2480 = vmatprep.subr.mxu0 0.0
  %2481 = vmatpush1.msra.mxu0 0.0
  %2482 = vmatprep.subr.mxu0 0.0
  %2483 = vmatpush1.msra.mxu0 0.0
  %2484 = vmatprep.subr.mxu0 0.0
  %2485 = vmatpush1.msra.mxu0 0.0
  %2486 = vmatprep.subr.mxu0 0.0
  %2487 = vmatpush1.msra.mxu0 0.0
  %2488 = vmatprep.subr.mxu0 0.0
  %2489 = vmatpush1.msra.mxu0 0.0
  %2490 = vmatprep.subr.mxu0 0.0
  %2491 = vmatpush1.msra.mxu0 0.0
  %2492 = vmatprep.subr.mxu0 0.0
  %2493 = vmatpush1.msra.mxu0 0.0
  %2494 = vmatprep.subr.mxu0 0.0
  %2495 = vmatpush1.msra.mxu0 0.0
  %2496 = vmatprep.subr.mxu0 0.0
  %2497 = vmatpush1.msra.mxu0 0.0
  %2498 = vmatprep.subr.mxu0 0.0
  %2499 = vmatpush1.msra.mxu0 0.0
  %2500 = vmatprep.subr.mxu0 0.0
  %2501 = vmatpush1.msra.mxu0 0.0
  %2502 = vmatprep.subr.mxu0 0.0
  %2503 = vmatpush1.msra.mxu0 0.0
  %2504 = vmatprep.subr.mxu0 0.0
  %2505 = vmatpush1.msra.mxu0 0.0
  %2506 = vmatprep.subr.mxu0 0.0
  %2507 = vmatpush1.msra.mxu0 0.0
  %2508 = vmatprep.subr.mxu0 0.0
  %2509 = vmatpush1.msra.mxu0 0.0
  %2510 = vmatprep.subr.mxu0 0.0
  %2511 = vmatpush1.msra.mxu0 0.0
  %2512 = vmatprep.subr.mxu0 0.0
  %2513 = vmatpush1.msra.mxu0 0.0
  %2514 = vmatprep.subr.mxu0 0.0
  %2515 = vmatpush1.msra.mxu0 0.0
  %2516 = vmatprep.subr.mxu0 0.0
  %2517 = vmatpush1.msra.mxu0 0.0
  %2518 = vmatprep.subr.mxu0 0.0
  %2519 = vmatpush1.msra.mxu0 0.0
  %2520 = vmatprep.subr.mxu0 0.0
  %2521 = vmatpush1.msra.mxu0 0.0
  %2522 = vmatprep.mubr.f32.mxu0 0.0
  %2523 = vmatmul.mubr.f32.gmra.mrb[0].mxu0 %v2456
  %v2524 = vpop.f32.mrb[0].mxu0
  %v2525 = vadd.f32 0.0, %v2524
  %v2526 = vpop.f32.mrb[0].mxu0
  %2527 = vdwg.mxu0
  %v2529 = vsel %vm352, %v2454, 0
  %2531 = vmatprep.subr.mxu0 0.0
  %2532 = vmatpush1.msra.mxu0 %v2278
  %2533 = vmatprep.subr.mxu0 0.0
  %2534 = vmatpush1.msra.mxu0 0.0
  %2535 = vmatprep.subr.mxu0 0.0
  %2536 = vmatpush1.msra.mxu0 0.0
  %2537 = vmatprep.subr.mxu0 0.0
  %2538 = vmatpush1.msra.mxu0 0.0
  %2539 = vmatprep.subr.mxu0 0.0
  %2540 = vmatpush1.msra.mxu0 0.0
  %2541 = vmatprep.subr.mxu0 0.0
  %2542 = vmatpush1.msra.mxu0 0.0
  %2543 = vmatprep.subr.mxu0 0.0
  %2544 = vmatpush1.msra.mxu0 0.0
  %2545 = vmatprep.subr.mxu0 0.0
  %2546 = vmatpush1.msra.mxu0 0.0
  %2547 = vmatprep.subr.mxu0 0.0
  %2548 = vmatpush1.msra.mxu0 0.0
  %2549 = vmatprep.subr.mxu0 0.0
  %2550 = vmatpush1.msra.mxu0 0.0
  %2551 = vmatprep.subr.mxu0 0.0
  %2552 = vmatpush1.msra.mxu0 0.0
  %2553 = vmatprep.subr.mxu0 0.0
  %2554 = vmatpush1.msra.mxu0 0.0
  %2555 = vmatprep.subr.mxu0 0.0
  %2556 = vmatpush1.msra.mxu0 0.0
  %2557 = vmatprep.subr.mxu0 0.0
  %2558 = vmatpush1.msra.mxu0 0.0
  %2559 = vmatprep.subr.mxu0 0.0
  %2560 = vmatpush1.msra.mxu0 0.0
  %2561 = vmatprep.subr.mxu0 0.0
  %2562 = vmatpush1.msra.mxu0 0.0
  %2563 = vmatprep.subr.mxu0 0.0
  %2564 = vmatpush1.msra.mxu0 0.0
  %2565 = vmatprep.subr.mxu0 0.0
  %2566 = vmatpush1.msra.mxu0 0.0
  %2567 = vmatprep.subr.mxu0 0.0
  %2568 = vmatpush1.msra.mxu0 0.0
  %2569 = vmatprep.subr.mxu0 0.0
  %2570 = vmatpush1.msra.mxu0 0.0
  %2571 = vmatprep.subr.mxu0 0.0
  %2572 = vmatpush1.msra.mxu0 0.0
  %2573 = vmatprep.subr.mxu0 0.0
  %2574 = vmatpush1.msra.mxu0 0.0
  %2575 = vmatprep.subr.mxu0 0.0
  %2576 = vmatpush1.msra.mxu0 0.0
  %2577 = vmatprep.subr.mxu0 0.0
  %2578 = vmatpush1.msra.mxu0 0.0
  %2579 = vmatprep.subr.mxu0 0.0
  %2580 = vmatpush1.msra.mxu0 0.0
  %2581 = vmatprep.subr.mxu0 0.0
  %2582 = vmatpush1.msra.mxu0 0.0
  %2583 = vmatprep.subr.mxu0 0.0
  %2584 = vmatpush1.msra.mxu0 0.0
  %2585 = vmatprep.subr.mxu0 0.0
  %2586 = vmatpush1.msra.mxu0 0.0
  %2587 = vmatprep.subr.mxu0 0.0
  %2588 = vmatpush1.msra.mxu0 0.0
  %2589 = vmatprep.subr.mxu0 0.0
  %2590 = vmatpush1.msra.mxu0 0.0
  %2591 = vmatprep.subr.mxu0 0.0
  %2592 = vmatpush1.msra.mxu0 0.0
  %2593 = vmatprep.subr.mxu0 0.0
  %2594 = vmatpush1.msra.mxu0 0.0
  %2595 = vmatprep.mubr.f32.mxu0 0.0
  %2596 = vmatmul.mubr.f32.gmra.mrb[0].mxu0 %v2529
  %v2597 = vpop.f32.mrb[0].mxu0
  %v2598 = vadd.f32 0.0, %v2597
  %v2599 = vpop.f32.mrb[0].mxu0
  %2600 = vdwg.mxu0
  %2601 = vrot.lane.b32.xlu0 %v2123, 120
  %v2602 = vpop.permute.xlu0 %2601
  %2603 = vrot.lane.b32.xlu0 %v2198, 120
  %v2604 = vpop.permute.xlu0 %2603
  %v2605 = vsel %vm352, %v2602, 0
  %v2607 = vsel %vm352, %v2604, 0
  %2609 = vmatprep.subr.mxu0 0.0
  %2610 = vmatpush1.xpose.msra.mxu0 %v2607
  %2611 = vmatprep.subr.mxu0 0.0
  %2612 = vmatpush1.xpose.msra.mxu0 0.0
  %2613 = vmatprep.subr.mxu0 0.0
  %2614 = vmatpush1.xpose.msra.mxu0 0.0
  %2615 = vmatprep.subr.mxu0 0.0
  %2616 = vmatpush1.xpose.msra.mxu0 0.0
  %2617 = vmatprep.subr.mxu0 0.0
  %2618 = vmatpush1.xpose.msra.mxu0 0.0
  %2619 = vmatprep.subr.mxu0 0.0
  %2620 = vmatpush1.xpose.msra.mxu0 0.0
  %2621 = vmatprep.subr.mxu0 0.0
  %2622 = vmatpush1.xpose.msra.mxu0 0.0
  %2623 = vmatprep.subr.mxu0 0.0
  %2624 = vmatpush1.xpose.msra.mxu0 0.0
  %2625 = vmatprep.subr.mxu0 0.0
  %2626 = vmatpush1.xpose.msra.mxu0 0.0
  %2627 = vmatprep.subr.mxu0 0.0
  %2628 = vmatpush1.xpose.msra.mxu0 0.0
  %2629 = vmatprep.subr.mxu0 0.0
  %2630 = vmatpush1.xpose.msra.mxu0 0.0
  %2631 = vmatprep.subr.mxu0 0.0
  %2632 = vmatpush1.xpose.msra.mxu0 0.0
  %2633 = vmatprep.subr.mxu0 0.0
  %2634 = vmatpush1.xpose.msra.mxu0 0.0
  %2635 = vmatprep.subr.mxu0 0.0
  %2636 = vmatpush1.xpose.msra.mxu0 0.0
  %2637 = vmatprep.subr.mxu0 0.0
  %2638 = vmatpush1.xpose.msra.mxu0 0.0
  %2639 = vmatprep.subr.mxu0 0.0
  %2640 = vmatpush1.xpose.msra.mxu0 0.0
  %2641 = vmatprep.subr.mxu0 0.0
  %2642 = vmatpush1.xpose.msra.mxu0 0.0
  %2643 = vmatprep.subr.mxu0 0.0
  %2644 = vmatpush1.xpose.msra.mxu0 0.0
  %2645 = vmatprep.subr.mxu0 0.0
  %2646 = vmatpush1.xpose.msra.mxu0 0.0
  %2647 = vmatprep.subr.mxu0 0.0
  %2648 = vmatpush1.xpose.msra.mxu0 0.0
  %2649 = vmatprep.subr.mxu0 0.0
  %2650 = vmatpush1.xpose.msra.mxu0 0.0
  %2651 = vmatprep.subr.mxu0 0.0
  %2652 = vmatpush1.xpose.msra.mxu0 0.0
  %2653 = vmatprep.subr.mxu0 0.0
  %2654 = vmatpush1.xpose.msra.mxu0 0.0
  %2655 = vmatprep.subr.mxu0 0.0
  %2656 = vmatpush1.xpose.msra.mxu0 0.0
  %2657 = vmatprep.subr.mxu0 0.0
  %2658 = vmatpush1.xpose.msra.mxu0 0.0
  %2659 = vmatprep.subr.mxu0 0.0
  %2660 = vmatpush1.xpose.msra.mxu0 0.0
  %2661 = vmatprep.subr.mxu0 0.0
  %2662 = vmatpush1.xpose.msra.mxu0 0.0
  %2663 = vmatprep.subr.mxu0 0.0
  %2664 = vmatpush1.xpose.msra.mxu0 0.0
  %2665 = vmatprep.subr.mxu0 0.0
  %2666 = vmatpush1.xpose.msra.mxu0 0.0
  %2667 = vmatprep.subr.mxu0 0.0
  %2668 = vmatpush1.xpose.msra.mxu0 0.0
  %2669 = vmatprep.subr.mxu0 0.0
  %2670 = vmatpush1.xpose.msra.mxu0 0.0
  %2671 = vmatprep.subr.mxu0 0.0
  %2672 = vmatpush1.xpose.msra.mxu0 0.0
  %2673 = vmatprep.mubr.f32.mxu0 0.0
  %2674 = vmatmul.mubr.f32.gmra.mrb[0].mxu0 %v2605
  %v2675 = vpop.f32.mrb[0].mxu0
  %v2676 = vadd.f32 0.0, %v2675
  %v2677 = vpop.f32.mrb[0].mxu0
  %2678 = vdwg.mxu0
  %2679 = vrot.lane.b32.xlu0 %v2128, 120
  %v2680 = vpop.permute.xlu0 %2679
  %2681 = vrot.lane.b32.xlu0 %v2203, 120
  %v2682 = vpop.permute.xlu0 %2681
  %v2683 = vsel %vm352, %v2680, 0
  %v2685 = vsel %vm352, %v2682, 0
  %2687 = vmatprep.subr.mxu0 0.0
  %2688 = vmatpush1.xpose.msra.mxu0 %v2685
  %2689 = vmatprep.subr.mxu0 0.0
  %2690 = vmatpush1.xpose.msra.mxu0 0.0
  %2691 = vmatprep.subr.mxu0 0.0
  %2692 = vmatpush1.xpose.msra.mxu0 0.0
  %2693 = vmatprep.subr.mxu0 0.0
  %2694 = vmatpush1.xpose.msra.mxu0 0.0
  %2695 = vmatprep.subr.mxu0 0.0
  %2696 = vmatpush1.xpose.msra.mxu0 0.0
  %2697 = vmatprep.subr.mxu0 0.0
  %2698 = vmatpush1.xpose.msra.mxu0 0.0
  %2699 = vmatprep.subr.mxu0 0.0
  %2700 = vmatpush1.xpose.msra.mxu0 0.0
  %2701 = vmatprep.subr.mxu0 0.0
  %2702 = vmatpush1.xpose.msra.mxu0 0.0
  %2703 = vmatprep.subr.mxu0 0.0
  %2704 = vmatpush1.xpose.msra.mxu0 0.0
  %2705 = vmatprep.subr.mxu0 0.0
  %2706 = vmatpush1.xpose.msra.mxu0 0.0
  %2707 = vmatprep.subr.mxu0 0.0
  %2708 = vmatpush1.xpose.msra.mxu0 0.0
  %2709 = vmatprep.subr.mxu0 0.0
  %2710 = vmatpush1.xpose.msra.mxu0 0.0
  %2711 = vmatprep.subr.mxu0 0.0
  %2712 = vmatpush1.xpose.msra.mxu0 0.0
  %2713 = vmatprep.subr.mxu0 0.0
  %2714 = vmatpush1.xpose.msra.mxu0 0.0
  %2715 = vmatprep.subr.mxu0 0.0
  %2716 = vmatpush1.xpose.msra.mxu0 0.0
  %2717 = vmatprep.subr.mxu0 0.0
  %2718 = vmatpush1.xpose.msra.mxu0 0.0
  %2719 = vmatprep.subr.mxu0 0.0
  %2720 = vmatpush1.xpose.msra.mxu0 0.0
  %2721 = vmatprep.subr.mxu0 0.0
  %2722 = vmatpush1.xpose.msra.mxu0 0.0
  %2723 = vmatprep.subr.mxu0 0.0
  %2724 = vmatpush1.xpose.msra.mxu0 0.0
  %2725 = vmatprep.subr.mxu0 0.0
  %2726 = vmatpush1.xpose.msra.mxu0 0.0
  %2727 = vmatprep.subr.mxu0 0.0
  %2728 = vmatpush1.xpose.msra.mxu0 0.0
  %2729 = vmatprep.subr.mxu0 0.0
  %2730 = vmatpush1.xpose.msra.mxu0 0.0
  %2731 = vmatprep.subr.mxu0 0.0
  %2732 = vmatpush1.xpose.msra.mxu0 0.0
  %2733 = vmatprep.subr.mxu0 0.0
  %2734 = vmatpush1.xpose.msra.mxu0 0.0
  %2735 = vmatprep.subr.mxu0 0.0
  %2736 = vmatpush1.xpose.msra.mxu0 0.0
  %2737 = vmatprep.subr.mxu0 0.0
  %2738 = vmatpush1.xpose.msra.mxu0 0.0
  %2739 = vmatprep.subr.mxu0 0.0
  %2740 = vmatpush1.xpose.msra.mxu0 0.0
  %2741 = vmatprep.subr.mxu0 0.0
  %2742 = vmatpush1.xpose.msra.mxu0 0.0
  %2743 = vmatprep.subr.mxu0 0.0
  %2744 = vmatpush1.xpose.msra.mxu0 0.0
  %2745 = vmatprep.subr.mxu0 0.0
  %2746 = vmatpush1.xpose.msra.mxu0 0.0
  %2747 = vmatprep.subr.mxu0 0.0
  %2748 = vmatpush1.xpose.msra.mxu0 0.0
  %2749 = vmatprep.subr.mxu0 0.0
  %2750 = vmatpush1.xpose.msra.mxu0 0.0
  %2751 = vmatprep.mubr.f32.mxu0 0.0
  %2752 = vmatmul.mubr.f32.gmra.mrb[0].mxu0 %v2683
  %v2753 = vpop.f32.mrb[0].mxu0
  %v2754 = vadd.f32 0.0, %v2753
  %v2755 = vpop.f32.mrb[0].mxu0
  %2756 = vdwg.mxu0
  %v2757 = vsel %vm352, %v2676, -inf
  %2758 = vmax.xlane.f32.xlu0 %v2757
  %v2759 = vpop.xlane.xlu0 %2758
  %v2760 = vsel %vm352, %v2754, -inf
  %2761 = vmax.xlane.f32.xlu0 %v2760
  %v2762 = vpop.xlane.xlu0 %2761
  %v2763 = vsub.f32 %v2676, %v2759
  %v2764 = vsub.f32 %v2754, %v2762
  %v2765 = vmul.f32 %v2763, 1.442695
  %v2766 = vpow.pop %v2765
  %v2767 = vmul.f32 %v2764, 1.442695
  %v2768 = vpow.pop %v2767
  %v2769 = vsel %vm352, %v2766, 0.0
  %2770 = vadd.xlane.f32.xlu0 %v2769
  %v2771 = vpop.xlane.xlu0 %2770
  %v2772 = vsel %vm352, %v2768, 0.0
  %2773 = vadd.xlane.f32.xlu0 %v2772
  %v2774 = vpop.xlane.xlu0 %2773
  %v2775 = vrcp.pop %v2771
  %v2776 = vmul.f32 %v2766, %v2775
  %v2777 = vrcp.pop %v2774
  %v2778 = vmul.f32 %v2768, %v2777
  %2780 = vrot.lane.b32.xlu0 %v2273, 120
  %v2781 = vpop.permute.xlu0 %2780
  %v2784 = vsel %vm352, %v2776, 0
  %2786 = vmatprep.subr.mxu0 0.0
  %2787 = vmatpush1.msra.mxu0 %v2781
  %2788 = vmatprep.subr.mxu0 0.0
  %2789 = vmatpush1.msra.mxu0 0.0
  %2790 = vmatprep.subr.mxu0 0.0
  %2791 = vmatpush1.msra.mxu0 0.0
  %2792 = vmatprep.subr.mxu0 0.0
  %2793 = vmatpush1.msra.mxu0 0.0
  %2794 = vmatprep.subr.mxu0 0.0
  %2795 = vmatpush1.msra.mxu0 0.0
  %2796 = vmatprep.subr.mxu0 0.0
  %2797 = vmatpush1.msra.mxu0 0.0
  %2798 = vmatprep.subr.mxu0 0.0
  %2799 = vmatpush1.msra.mxu0 0.0
  %2800 = vmatprep.subr.mxu0 0.0
  %2801 = vmatpush1.msra.mxu0 0.0
  %2802 = vmatprep.subr.mxu0 0.0
  %2803 = vmatpush1.msra.mxu0 0.0
  %2804 = vmatprep.subr.mxu0 0.0
  %2805 = vmatpush1.msra.mxu0 0.0
  %2806 = vmatprep.subr.mxu0 0.0
  %2807 = vmatpush1.msra.mxu0 0.0
  %2808 = vmatprep.subr.mxu0 0.0
  %2809 = vmatpush1.msra.mxu0 0.0
  %2810 = vmatprep.subr.mxu0 0.0
  %2811 = vmatpush1.msra.mxu0 0.0
  %2812 = vmatprep.subr.mxu0 0.0
  %2813 = vmatpush1.msra.mxu0 0.0
  %2814 = vmatprep.subr.mxu0 0.0
  %2815 = vmatpush1.msra.mxu0 0.0
  %2816 = vmatprep.subr.mxu0 0.0
  %2817 = vmatpush1.msra.mxu0 0.0
  %2818 = vmatprep.subr.mxu0 0.0
  %2819 = vmatpush1.msra.mxu0 0.0
  %2820 = vmatprep.subr.mxu0 0.0
  %2821 = vmatpush1.msra.mxu0 0.0
  %2822 = vmatprep.subr.mxu0 0.0
  %2823 = vmatpush1.msra.mxu0 0.0
  %2824 = vmatprep.subr.mxu0 0.0
  %2825 = vmatpush1.msra.mxu0 0.0
  %2826 = vmatprep.subr.mxu0 0.0
  %2827 = vmatpush1.msra.mxu0 0.0
  %2828 = vmatprep.subr.mxu0 0.0
  %2829 = vmatpush1.msra.mxu0 0.0
  %2830 = vmatprep.subr.mxu0 0.0
  %2831 = vmatpush1.msra.mxu0 0.0
  %2832 = vmatprep.subr.mxu0 0.0
  %2833 = vmatpush1.msra.mxu0 0.0
  %2834 = vmatprep.subr.mxu0 0.0
  %2835 = vmatpush1.msra.mxu0 0.0
  %2836 = vmatprep.subr.mxu0 0.0
  %2837 = vmatpush1.msra.mxu0 0.0
  %2838 = vmatprep.subr.mxu0 0.0
  %2839 = vmatpush1.msra.mxu0 0.0
  %2840 = vmatprep.subr.mxu0 0.0
  %2841 = vmatpush1.msra.mxu0 0.0
  %2842 = vmatprep.subr.mxu0 0.0
  %2843 = vmatpush1.msra.mxu0 0.0
  %2844 = vmatprep.subr.mxu0 0.0
  %2845 = vmatpush1.msra.mxu0 0.0
  %2846 = vmatprep.subr.mxu0 0.0
  %2847 = vmatpush1.msra.mxu0 0.0
  %2848 = vmatprep.subr.mxu0 0.0
  %2849 = vmatpush1.msra.mxu0 0.0
  %2850 = vmatprep.mubr.f32.mxu0 0.0
  %2851 = vmatmul.mubr.f32.gmra.mrb[0].mxu0 %v2784
  %v2852 = vpop.f32.mrb[0].mxu0
  %v2853 = vadd.f32 0.0, %v2852
  %v2854 = vpop.f32.mrb[0].mxu0
  %2855 = vdwg.mxu0
  %2857 = vrot.lane.b32.xlu0 %v2278, 120
  %v2858 = vpop.permute.xlu0 %2857
  %v2861 = vsel %vm352, %v2778, 0
  %2863 = vmatprep.subr.mxu0 0.0
  %2864 = vmatpush1.msra.mxu0 %v2858
  %2865 = vmatprep.subr.mxu0 0.0
  %2866 = vmatpush1.msra.mxu0 0.0
  %2867 = vmatprep.subr.mxu0 0.0
  %2868 = vmatpush1.msra.mxu0 0.0
  %2869 = vmatprep.subr.mxu0 0.0
  %2870 = vmatpush1.msra.mxu0 0.0
  %2871 = vmatprep.subr.mxu0 0.0
  %2872 = vmatpush1.msra.mxu0 0.0
  %2873 = vmatprep.subr.mxu0 0.0
  %2874 = vmatpush1.msra.mxu0 0.0
  %2875 = vmatprep.subr.mxu0 0.0
  %2876 = vmatpush1.msra.mxu0 0.0
  %2877 = vmatprep.subr.mxu0 0.0
  %2878 = vmatpush1.msra.mxu0 0.0
  %2879 = vmatprep.subr.mxu0 0.0
  %2880 = vmatpush1.msra.mxu0 0.0
  %2881 = vmatprep.subr.mxu0 0.0
  %2882 = vmatpush1.msra.mxu0 0.0
  %2883 = vmatprep.subr.mxu0 0.0
  %2884 = vmatpush1.msra.mxu0 0.0
  %2885 = vmatprep.subr.mxu0 0.0
  %2886 = vmatpush1.msra.mxu0 0.0
  %2887 = vmatprep.subr.mxu0 0.0
  %2888 = vmatpush1.msra.mxu0 0.0
  %2889 = vmatprep.subr.mxu0 0.0
  %2890 = vmatpush1.msra.mxu0 0.0
  %2891 = vmatprep.subr.mxu0 0.0
  %2892 = vmatpush1.msra.mxu0 0.0
  %2893 = vmatprep.subr.mxu0 0.0
  %2894 = vmatpush1.msra.mxu0 0.0
  %2895 = vmatprep.subr.mxu0 0.0
  %2896 = vmatpush1.msra.mxu0 0.0
  %2897 = vmatprep.subr.mxu0 0.0
  %2898 = vmatpush1.msra.mxu0 0.0
  %2899 = vmatprep.subr.mxu0 0.0
  %2900 = vmatpush1.msra.mxu0 0.0
  %2901 = vmatprep.subr.mxu0 0.0
  %2902 = vmatpush1.msra.mxu0 0.0
  %2903 = vmatprep.subr.mxu0 0.0
  %2904 = vmatpush1.msra.mxu0 0.0
  %2905 = vmatprep.subr.mxu0 0.0
  %2906 = vmatpush1.msra.mxu0 0.0
  %2907 = vmatprep.subr.mxu0 0.0
  %2908 = vmatpush1.msra.mxu0 0.0
  %2909 = vmatprep.subr.mxu0 0.0
  %2910 = vmatpush1.msra.mxu0 0.0
  %2911 = vmatprep.subr.mxu0 0.0
  %2912 = vmatpush1.msra.mxu0 0.0
  %2913 = vmatprep.subr.mxu0 0.0
  %2914 = vmatpush1.msra.mxu0 0.0
  %2915 = vmatprep.subr.mxu0 0.0
  %2916 = vmatpush1.msra.mxu0 0.0
  %2917 = vmatprep.subr.mxu0 0.0
  %2918 = vmatpush1.msra.mxu0 0.0
  %2919 = vmatprep.subr.mxu0 0.0
  %2920 = vmatpush1.msra.mxu0 0.0
  %2921 = vmatprep.subr.mxu0 0.0
  %2922 = vmatpush1.msra.mxu0 0.0
  %2923 = vmatprep.subr.mxu0 0.0
  %2924 = vmatpush1.msra.mxu0 0.0
  %2925 = vmatprep.subr.mxu0 0.0
  %2926 = vmatpush1.msra.mxu0 0.0
  %2927 = vmatprep.mubr.f32.mxu0 0.0
  %2928 = vmatmul.mubr.f32.gmra.mrb[0].mxu0 %v2861
  %v2929 = vpop.f32.mrb[0].mxu0
  %v2930 = vadd.f32 0.0, %v2929
  %v2931 = vpop.f32.mrb[0].mxu0
  %2932 = vdwg.mxu0
  %2933 = vrot.lane.b32.xlu0 %v2123, 112
  %v2934 = vpop.permute.xlu0 %2933
  %2935 = vrot.lane.b32.xlu0 %v2198, 112
  %v2936 = vpop.permute.xlu0 %2935
  %v2937 = vsel %vm352, %v2934, 0
  %v2939 = vsel %vm352, %v2936, 0
  %2941 = vmatprep.subr.mxu0 0.0
  %2942 = vmatpush1.xpose.msra.mxu0 %v2939
  %2943 = vmatprep.subr.mxu0 0.0
  %2944 = vmatpush1.xpose.msra.mxu0 0.0
  %2945 = vmatprep.subr.mxu0 0.0
  %2946 = vmatpush1.xpose.msra.mxu0 0.0
  %2947 = vmatprep.subr.mxu0 0.0
  %2948 = vmatpush1.xpose.msra.mxu0 0.0
  %2949 = vmatprep.subr.mxu0 0.0
  %2950 = vmatpush1.xpose.msra.mxu0 0.0
  %2951 = vmatprep.subr.mxu0 0.0
  %2952 = vmatpush1.xpose.msra.mxu0 0.0
  %2953 = vmatprep.subr.mxu0 0.0
  %2954 = vmatpush1.xpose.msra.mxu0 0.0
  %2955 = vmatprep.subr.mxu0 0.0
  %2956 = vmatpush1.xpose.msra.mxu0 0.0
  %2957 = vmatprep.subr.mxu0 0.0
  %2958 = vmatpush1.xpose.msra.mxu0 0.0
  %2959 = vmatprep.subr.mxu0 0.0
  %2960 = vmatpush1.xpose.msra.mxu0 0.0
  %2961 = vmatprep.subr.mxu0 0.0
  %2962 = vmatpush1.xpose.msra.mxu0 0.0
  %2963 = vmatprep.subr.mxu0 0.0
  %2964 = vmatpush1.xpose.msra.mxu0 0.0
  %2965 = vmatprep.subr.mxu0 0.0
  %2966 = vmatpush1.xpose.msra.mxu0 0.0
  %2967 = vmatprep.subr.mxu0 0.0
  %2968 = vmatpush1.xpose.msra.mxu0 0.0
  %2969 = vmatprep.subr.mxu0 0.0
  %2970 = vmatpush1.xpose.msra.mxu0 0.0
  %2971 = vmatprep.subr.mxu0 0.0
  %2972 = vmatpush1.xpose.msra.mxu0 0.0
  %2973 = vmatprep.subr.mxu0 0.0
  %2974 = vmatpush1.xpose.msra.mxu0 0.0
  %2975 = vmatprep.subr.mxu0 0.0
  %2976 = vmatpush1.xpose.msra.mxu0 0.0
  %2977 = vmatprep.subr.mxu0 0.0
  %2978 = vmatpush1.xpose.msra.mxu0 0.0
  %2979 = vmatprep.subr.mxu0 0.0
  %2980 = vmatpush1.xpose.msra.mxu0 0.0
  %2981 = vmatprep.subr.mxu0 0.0
  %2982 = vmatpush1.xpose.msra.mxu0 0.0
  %2983 = vmatprep.subr.mxu0 0.0
  %2984 = vmatpush1.xpose.msra.mxu0 0.0
  %2985 = vmatprep.subr.mxu0 0.0
  %2986 = vmatpush1.xpose.msra.mxu0 0.0
  %2987 = vmatprep.subr.mxu0 0.0
  %2988 = vmatpush1.xpose.msra.mxu0 0.0
  %2989 = vmatprep.subr.mxu0 0.0
  %2990 = vmatpush1.xpose.msra.mxu0 0.0
  %2991 = vmatprep.subr.mxu0 0.0
  %2992 = vmatpush1.xpose.msra.mxu0 0.0
  %2993 = vmatprep.subr.mxu0 0.0
  %2994 = vmatpush1.xpose.msra.mxu0 0.0
  %2995 = vmatprep.subr.mxu0 0.0
  %2996 = vmatpush1.xpose.msra.mxu0 0.0
  %2997 = vmatprep.subr.mxu0 0.0
  %2998 = vmatpush1.xpose.msra.mxu0 0.0
  %2999 = vmatprep.subr.mxu0 0.0
  %3000 = vmatpush1.xpose.msra.mxu0 0.0
  %3001 = vmatprep.subr.mxu0 0.0
  %3002 = vmatpush1.xpose.msra.mxu0 0.0
  %3003 = vmatprep.subr.mxu0 0.0
  %3004 = vmatpush1.xpose.msra.mxu0 0.0
  %3005 = vmatprep.mubr.f32.mxu0 0.0
  %3006 = vmatmul.mubr.f32.gmra.mrb[0].mxu0 %v2937
  %v3007 = vpop.f32.mrb[0].mxu0
  %v3008 = vadd.f32 0.0, %v3007
  %v3009 = vpop.f32.mrb[0].mxu0
  %3010 = vdwg.mxu0
  %3011 = vrot.lane.b32.xlu0 %v2128, 112
  %v3012 = vpop.permute.xlu0 %3011
  %3013 = vrot.lane.b32.xlu0 %v2203, 112
  %v3014 = vpop.permute.xlu0 %3013
  %v3015 = vsel %vm352, %v3012, 0
  %v3017 = vsel %vm352, %v3014, 0
  %3019 = vmatprep.subr.mxu0 0.0
  %3020 = vmatpush1.xpose.msra.mxu0 %v3017
  %3021 = vmatprep.subr.mxu0 0.0
  %3022 = vmatpush1.xpose.msra.mxu0 0.0
  %3023 = vmatprep.subr.mxu0 0.0
  %3024 = vmatpush1.xpose.msra.mxu0 0.0
  %3025 = vmatprep.subr.mxu0 0.0
  %3026 = vmatpush1.xpose.msra.mxu0 0.0
  %3027 = vmatprep.subr.mxu0 0.0
  %3028 = vmatpush1.xpose.msra.mxu0 0.0
  %3029 = vmatprep.subr.mxu0 0.0
  %3030 = vmatpush1.xpose.msra.mxu0 0.0
  %3031 = vmatprep.subr.mxu0 0.0
  %3032 = vmatpush1.xpose.msra.mxu0 0.0
  %3033 = vmatprep.subr.mxu0 0.0
  %3034 = vmatpush1.xpose.msra.mxu0 0.0
  %3035 = vmatprep.subr.mxu0 0.0
  %3036 = vmatpush1.xpose.msra.mxu0 0.0
  %3037 = vmatprep.subr.mxu0 0.0
  %3038 = vmatpush1.xpose.msra.mxu0 0.0
  %3039 = vmatprep.subr.mxu0 0.0
  %3040 = vmatpush1.xpose.msra.mxu0 0.0
  %3041 = vmatprep.subr.mxu0 0.0
  %3042 = vmatpush1.xpose.msra.mxu0 0.0
  %3043 = vmatprep.subr.mxu0 0.0
  %3044 = vmatpush1.xpose.msra.mxu0 0.0
  %3045 = vmatprep.subr.mxu0 0.0
  %3046 = vmatpush1.xpose.msra.mxu0 0.0
  %3047 = vmatprep.subr.mxu0 0.0
  %3048 = vmatpush1.xpose.msra.mxu0 0.0
  %3049 = vmatprep.subr.mxu0 0.0
  %3050 = vmatpush1.xpose.msra.mxu0 0.0
  %3051 = vmatprep.subr.mxu0 0.0
  %3052 = vmatpush1.xpose.msra.mxu0 0.0
  %3053 = vmatprep.subr.mxu0 0.0
  %3054 = vmatpush1.xpose.msra.mxu0 0.0
  %3055 = vmatprep.subr.mxu0 0.0
  %3056 = vmatpush1.xpose.msra.mxu0 0.0
  %3057 = vmatprep.subr.mxu0 0.0
  %3058 = vmatpush1.xpose.msra.mxu0 0.0
  %3059 = vmatprep.subr.mxu0 0.0
  %3060 = vmatpush1.xpose.msra.mxu0 0.0
  %3061 = vmatprep.subr.mxu0 0.0
  %3062 = vmatpush1.xpose.msra.mxu0 0.0
  %3063 = vmatprep.subr.mxu0 0.0
  %3064 = vmatpush1.xpose.msra.mxu0 0.0
  %3065 = vmatprep.subr.mxu0 0.0
  %3066 = vmatpush1.xpose.msra.mxu0 0.0
  %3067 = vmatprep.subr.mxu0 0.0
  %3068 = vmatpush1.xpose.msra.mxu0 0.0
  %3069 = vmatprep.subr.mxu0 0.0
  %3070 = vmatpush1.xpose.msra.mxu0 0.0
  %3071 = vmatprep.subr.mxu0 0.0
  %3072 = vmatpush1.xpose.msra.mxu0 0.0
  %3073 = vmatprep.subr.mxu0 0.0
  %3074 = vmatpush1.xpose.msra.mxu0 0.0
  %3075 = vmatprep.subr.mxu0 0.0
  %3076 = vmatpush1.xpose.msra.mxu0 0.0
  %3077 = vmatprep.subr.mxu0 0.0
  %3078 = vmatpush1.xpose.msra.mxu0 0.0
  %3079 = vmatprep.subr.mxu0 0.0
  %3080 = vmatpush1.xpose.msra.mxu0 0.0
  %3081 = vmatprep.subr.mxu0 0.0
  %3082 = vmatpush1.xpose.msra.mxu0 0.0
  %3083 = vmatprep.mubr.f32.mxu0 0.0
  %3084 = vmatmul.mubr.f32.gmra.mrb[0].mxu0 %v3015
  %v3085 = vpop.f32.mrb[0].mxu0
  %v3086 = vadd.f32 0.0, %v3085
  %v3087 = vpop.f32.mrb[0].mxu0
  %3088 = vdwg.mxu0
  %v3089 = vsel %vm352, %v3008, -inf
  %3090 = vmax.xlane.f32.xlu0 %v3089
  %v3091 = vpop.xlane.xlu0 %3090
  %v3092 = vsel %vm352, %v3086, -inf
  %3093 = vmax.xlane.f32.xlu0 %v3092
  %v3094 = vpop.xlane.xlu0 %3093
  %v3095 = vsub.f32 %v3008, %v3091
  %v3096 = vsub.f32 %v3086, %v3094
  %v3097 = vmul.f32 %v3095, 1.442695
  %v3098 = vpow.pop %v3097
  %v3099 = vmul.f32 %v3096, 1.442695
  %v3100 = vpow.pop %v3099
  %v3101 = vsel %vm352, %v3098, 0.0
  %3102 = vadd.xlane.f32.xlu0 %v3101
  %v3103 = vpop.xlane.xlu0 %3102
  %v3104 = vsel %vm352, %v3100, 0.0
  %3105 = vadd.xlane.f32.xlu0 %v3104
  %v3106 = vpop.xlane.xlu0 %3105
  %v3107 = vrcp.pop %v3103
  %v3108 = vmul.f32 %v3098, %v3107
  %v3109 = vrcp.pop %v3106
  %v3110 = vmul.f32 %v3100, %v3109
  %3111 = vrot.lane.b32.xlu0 %v2273, 112
  %v3112 = vpop.permute.xlu0 %3111
  %v3115 = vsel %vm352, %v3108, 0
  %3117 = vmatprep.subr.mxu0 0.0
  %3118 = vmatpush1.msra.mxu0 %v3112
  %3119 = vmatprep.subr.mxu0 0.0
  %3120 = vmatpush1.msra.mxu0 0.0
  %3121 = vmatprep.subr.mxu0 0.0
  %3122 = vmatpush1.msra.mxu0 0.0
  %3123 = vmatprep.subr.mxu0 0.0
  %3124 = vmatpush1.msra.mxu0 0.0
  %3125 = vmatprep.subr.mxu0 0.0
  %3126 = vmatpush1.msra.mxu0 0.0
  %3127 = vmatprep.subr.mxu0 0.0
  %3128 = vmatpush1.msra.mxu0 0.0
  %3129 = vmatprep.subr.mxu0 0.0
  %3130 = vmatpush1.msra.mxu0 0.0
  %3131 = vmatprep.subr.mxu0 0.0
  %3132 = vmatpush1.msra.mxu0 0.0
  %3133 = vmatprep.subr.mxu0 0.0
  %3134 = vmatpush1.msra.mxu0 0.0
  %3135 = vmatprep.subr.mxu0 0.0
  %3136 = vmatpush1.msra.mxu0 0.0
  %3137 = vmatprep.subr.mxu0 0.0
  %3138 = vmatpush1.msra.mxu0 0.0
  %3139 = vmatprep.subr.mxu0 0.0
  %3140 = vmatpush1.msra.mxu0 0.0
  %3141 = vmatprep.subr.mxu0 0.0
  %3142 = vmatpush1.msra.mxu0 0.0
  %3143 = vmatprep.subr.mxu0 0.0
  %3144 = vmatpush1.msra.mxu0 0.0
  %3145 = vmatprep.subr.mxu0 0.0
  %3146 = vmatpush1.msra.mxu0 0.0
  %3147 = vmatprep.subr.mxu0 0.0
  %3148 = vmatpush1.msra.mxu0 0.0
  %3149 = vmatprep.subr.mxu0 0.0
  %3150 = vmatpush1.msra.mxu0 0.0
  %3151 = vmatprep.subr.mxu0 0.0
  %3152 = vmatpush1.msra.mxu0 0.0
  %3153 = vmatprep.subr.mxu0 0.0
  %3154 = vmatpush1.msra.mxu0 0.0
  %3155 = vmatprep.subr.mxu0 0.0
  %3156 = vmatpush1.msra.mxu0 0.0
  %3157 = vmatprep.subr.mxu0 0.0
  %3158 = vmatpush1.msra.mxu0 0.0
  %3159 = vmatprep.subr.mxu0 0.0
  %3160 = vmatpush1.msra.mxu0 0.0
  %3161 = vmatprep.subr.mxu0 0.0
  %3162 = vmatpush1.msra.mxu0 0.0
  %3163 = vmatprep.subr.mxu0 0.0
  %3164 = vmatpush1.msra.mxu0 0.0
  %3165 = vmatprep.subr.mxu0 0.0
  %3166 = vmatpush1.msra.mxu0 0.0
  %3167 = vmatprep.subr.mxu0 0.0
  %3168 = vmatpush1.msra.mxu0 0.0
  %3169 = vmatprep.subr.mxu0 0.0
  %3170 = vmatpush1.msra.mxu0 0.0
  %3171 = vmatprep.subr.mxu0 0.0
  %3172 = vmatpush1.msra.mxu0 0.0
  %3173 = vmatprep.subr.mxu0 0.0
  %3174 = vmatpush1.msra.mxu0 0.0
  %3175 = vmatprep.subr.mxu0 0.0
  %3176 = vmatpush1.msra.mxu0 0.0
  %3177 = vmatprep.subr.mxu0 0.0
  %3178 = vmatpush1.msra.mxu0 0.0
  %3179 = vmatprep.subr.mxu0 0.0
  %3180 = vmatpush1.msra.mxu0 0.0
  %3181 = vmatprep.mubr.f32.mxu0 0.0
  %3182 = vmatmul.mubr.f32.gmra.mrb[0].mxu0 %v3115
  %v3183 = vpop.f32.mrb[0].mxu0
  %v3184 = vadd.f32 0.0, %v3183
  %v3185 = vpop.f32.mrb[0].mxu0
  %3186 = vdwg.mxu0
  %3187 = vrot.lane.b32.xlu0 %v2278, 112
  %v3188 = vpop.permute.xlu0 %3187
  %v3191 = vsel %vm352, %v3110, 0
  %3193 = vmatprep.subr.mxu0 0.0
  %3194 = vmatpush1.msra.mxu0 %v3188
  %3195 = vmatprep.subr.mxu0 0.0
  %3196 = vmatpush1.msra.mxu0 0.0
  %3197 = vmatprep.subr.mxu0 0.0
  %3198 = vmatpush1.msra.mxu0 0.0
  %3199 = vmatprep.subr.mxu0 0.0
  %3200 = vmatpush1.msra.mxu0 0.0
  %3201 = vmatprep.subr.mxu0 0.0
  %3202 = vmatpush1.msra.mxu0 0.0
  %3203 = vmatprep.subr.mxu0 0.0
  %3204 = vmatpush1.msra.mxu0 0.0
  %3205 = vmatprep.subr.mxu0 0.0
  %3206 = vmatpush1.msra.mxu0 0.0
  %3207 = vmatprep.subr.mxu0 0.0
  %3208 = vmatpush1.msra.mxu0 0.0
  %3209 = vmatprep.subr.mxu0 0.0
  %3210 = vmatpush1.msra.mxu0 0.0
  %3211 = vmatprep.subr.mxu0 0.0
  %3212 = vmatpush1.msra.mxu0 0.0
  %3213 = vmatprep.subr.mxu0 0.0
  %3214 = vmatpush1.msra.mxu0 0.0
  %3215 = vmatprep.subr.mxu0 0.0
  %3216 = vmatpush1.msra.mxu0 0.0
  %3217 = vmatprep.subr.mxu0 0.0
  %3218 = vmatpush1.msra.mxu0 0.0
  %3219 = vmatprep.subr.mxu0 0.0
  %3220 = vmatpush1.msra.mxu0 0.0
  %3221 = vmatprep.subr.mxu0 0.0
  %3222 = vmatpush1.msra.mxu0 0.0
  %3223 = vmatprep.subr.mxu0 0.0
  %3224 = vmatpush1.msra.mxu0 0.0
  %3225 = vmatprep.subr.mxu0 0.0
  %3226 = vmatpush1.msra.mxu0 0.0
  %3227 = vmatprep.subr.mxu0 0.0
  %3228 = vmatpush1.msra.mxu0 0.0
  %3229 = vmatprep.subr.mxu0 0.0
  %3230 = vmatpush1.msra.mxu0 0.0
  %3231 = vmatprep.subr.mxu0 0.0
  %3232 = vmatpush1.msra.mxu0 0.0
  %3233 = vmatprep.subr.mxu0 0.0
  %3234 = vmatpush1.msra.mxu0 0.0
  %3235 = vmatprep.subr.mxu0 0.0
  %3236 = vmatpush1.msra.mxu0 0.0
  %3237 = vmatprep.subr.mxu0 0.0
  %3238 = vmatpush1.msra.mxu0 0.0
  %3239 = vmatprep.subr.mxu0 0.0
  %3240 = vmatpush1.msra.mxu0 0.0
  %3241 = vmatprep.subr.mxu0 0.0
  %3242 = vmatpush1.msra.mxu0 0.0
  %3243 = vmatprep.subr.mxu0 0.0
  %3244 = vmatpush1.msra.mxu0 0.0
  %3245 = vmatprep.subr.mxu0 0.0
  %3246 = vmatpush1.msra.mxu0 0.0
  %3247 = vmatprep.subr.mxu0 0.0
  %3248 = vmatpush1.msra.mxu0 0.0
  %3249 = vmatprep.subr.mxu0 0.0
  %3250 = vmatpush1.msra.mxu0 0.0
  %3251 = vmatprep.subr.mxu0 0.0
  %3252 = vmatpush1.msra.mxu0 0.0
  %3253 = vmatprep.subr.mxu0 0.0
  %3254 = vmatpush1.msra.mxu0 0.0
  %3255 = vmatprep.subr.mxu0 0.0
  %3256 = vmatpush1.msra.mxu0 0.0
  %3257 = vmatprep.mubr.f32.mxu0 0.0
  %3258 = vmatmul.mubr.f32.gmra.mrb[0].mxu0 %v3191
  %v3259 = vpop.f32.mrb[0].mxu0
  %v3260 = vadd.f32 0.0, %v3259
  %v3261 = vpop.f32.mrb[0].mxu0
  %3262 = vdwg.mxu0
  %3263 = vrot.lane.b32.xlu0 %v2123, 104
  %v3264 = vpop.permute.xlu0 %3263
  %3265 = vrot.lane.b32.xlu0 %v2198, 104
  %v3266 = vpop.permute.xlu0 %3265
  %v3267 = vsel %vm352, %v3264, 0
  %v3269 = vsel %vm352, %v3266, 0
  %3271 = vmatprep.subr.mxu0 0.0
  %3272 = vmatpush1.xpose.msra.mxu0 %v3269
  %3273 = vmatprep.subr.mxu0 0.0
  %3274 = vmatpush1.xpose.msra.mxu0 0.0
  %3275 = vmatprep.subr.mxu0 0.0
  %3276 = vmatpush1.xpose.msra.mxu0 0.0
  %3277 = vmatprep.subr.mxu0 0.0
  %3278 = vmatpush1.xpose.msra.mxu0 0.0
  %3279 = vmatprep.subr.mxu0 0.0
  %3280 = vmatpush1.xpose.msra.mxu0 0.0
  %3281 = vmatprep.subr.mxu0 0.0
  %3282 = vmatpush1.xpose.msra.mxu0 0.0
  %3283 = vmatprep.subr.mxu0 0.0
  %3284 = vmatpush1.xpose.msra.mxu0 0.0
  %3285 = vmatprep.subr.mxu0 0.0
  %3286 = vmatpush1.xpose.msra.mxu0 0.0
  %3287 = vmatprep.subr.mxu0 0.0
  %3288 = vmatpush1.xpose.msra.mxu0 0.0
  %3289 = vmatprep.subr.mxu0 0.0
  %3290 = vmatpush1.xpose.msra.mxu0 0.0
  %3291 = vmatprep.subr.mxu0 0.0
  %3292 = vmatpush1.xpose.msra.mxu0 0.0
  %3293 = vmatprep.subr.mxu0 0.0
  %3294 = vmatpush1.xpose.msra.mxu0 0.0
  %3295 = vmatprep.subr.mxu0 0.0
  %3296 = vmatpush1.xpose.msra.mxu0 0.0
  %3297 = vmatprep.subr.mxu0 0.0
  %3298 = vmatpush1.xpose.msra.mxu0 0.0
  %3299 = vmatprep.subr.mxu0 0.0
  %3300 = vmatpush1.xpose.msra.mxu0 0.0
  %3301 = vmatprep.subr.mxu0 0.0
  %3302 = vmatpush1.xpose.msra.mxu0 0.0
  %3303 = vmatprep.subr.mxu0 0.0
  %3304 = vmatpush1.xpose.msra.mxu0 0.0
  %3305 = vmatprep.subr.mxu0 0.0
  %3306 = vmatpush1.xpose.msra.mxu0 0.0
  %3307 = vmatprep.subr.mxu0 0.0
  %3308 = vmatpush1.xpose.msra.mxu0 0.0
  %3309 = vmatprep.subr.mxu0 0.0
  %3310 = vmatpush1.xpose.msra.mxu0 0.0
  %3311 = vmatprep.subr.mxu0 0.0
  %3312 = vmatpush1.xpose.msra.mxu0 0.0
  %3313 = vmatprep.subr.mxu0 0.0
  %3314 = vmatpush1.xpose.msra.mxu0 0.0
  %3315 = vmatprep.subr.mxu0 0.0
  %3316 = vmatpush1.xpose.msra.mxu0 0.0
  %3317 = vmatprep.subr.mxu0 0.0
  %3318 = vmatpush1.xpose.msra.mxu0 0.0
  %3319 = vmatprep.subr.mxu0 0.0
  %3320 = vmatpush1.xpose.msra.mxu0 0.0
  %3321 = vmatprep.subr.mxu0 0.0
  %3322 = vmatpush1.xpose.msra.mxu0 0.0
  %3323 = vmatprep.subr.mxu0 0.0
  %3324 = vmatpush1.xpose.msra.mxu0 0.0
  %3325 = vmatprep.subr.mxu0 0.0
  %3326 = vmatpush1.xpose.msra.mxu0 0.0
  %3327 = vmatprep.subr.mxu0 0.0
  %3328 = vmatpush1.xpose.msra.mxu0 0.0
  %3329 = vmatprep.subr.mxu0 0.0
  %3330 = vmatpush1.xpose.msra.mxu0 0.0
  %3331 = vmatprep.subr.mxu0 0.0
  %3332 = vmatpush1.xpose.msra.mxu0 0.0
  %3333 = vmatprep.subr.mxu0 0.0
  %3334 = vmatpush1.xpose.msra.mxu0 0.0
  %3335 = vmatprep.mubr.f32.mxu0 0.0
  %3336 = vmatmul.mubr.f32.gmra.mrb[0].mxu0 %v3267
  %v3337 = vpop.f32.mrb[0].mxu0
  %v3338 = vadd.f32 0.0, %v3337
  %v3339 = vpop.f32.mrb[0].mxu0
  %3340 = vdwg.mxu0
  %3341 = vrot.lane.b32.xlu0 %v2128, 104
  %v3342 = vpop.permute.xlu0 %3341
  %3343 = vrot.lane.b32.xlu0 %v2203, 104
  %v3344 = vpop.permute.xlu0 %3343
  %v3345 = vsel %vm352, %v3342, 0
  %v3347 = vsel %vm352, %v3344, 0
  %3349 = vmatprep.subr.mxu0 0.0
  %3350 = vmatpush1.xpose.msra.mxu0 %v3347
  %3351 = vmatprep.subr.mxu0 0.0
  %3352 = vmatpush1.xpose.msra.mxu0 0.0
  %3353 = vmatprep.subr.mxu0 0.0
  %3354 = vmatpush1.xpose.msra.mxu0 0.0
  %3355 = vmatprep.subr.mxu0 0.0
  %3356 = vmatpush1.xpose.msra.mxu0 0.0
  %3357 = vmatprep.subr.mxu0 0.0
  %3358 = vmatpush1.xpose.msra.mxu0 0.0
  %3359 = vmatprep.subr.mxu0 0.0
  %3360 = vmatpush1.xpose.msra.mxu0 0.0
  %3361 = vmatprep.subr.mxu0 0.0
  %3362 = vmatpush1.xpose.msra.mxu0 0.0
  %3363 = vmatprep.subr.mxu0 0.0
  %3364 = vmatpush1.xpose.msra.mxu0 0.0
  %3365 = vmatprep.subr.mxu0 0.0
  %3366 = vmatpush1.xpose.msra.mxu0 0.0
  %3367 = vmatprep.subr.mxu0 0.0
  %3368 = vmatpush1.xpose.msra.mxu0 0.0
  %3369 = vmatprep.subr.mxu0 0.0
  %3370 = vmatpush1.xpose.msra.mxu0 0.0
  %3371 = vmatprep.subr.mxu0 0.0
  %3372 = vmatpush1.xpose.msra.mxu0 0.0
  %3373 = vmatprep.subr.mxu0 0.0
  %3374 = vmatpush1.xpose.msra.mxu0 0.0
  %3375 = vmatprep.subr.mxu0 0.0
  %3376 = vmatpush1.xpose.msra.mxu0 0.0
  %3377 = vmatprep.subr.mxu0 0.0
  %3378 = vmatpush1.xpose.msra.mxu0 0.0
  %3379 = vmatprep.subr.mxu0 0.0
  %3380 = vmatpush1.xpose.msra.mxu0 0.0
  %3381 = vmatprep.subr.mxu0 0.0
  %3382 = vmatpush1.xpose.msra.mxu0 0.0
  %3383 = vmatprep.subr.mxu0 0.0
  %3384 = vmatpush1.xpose.msra.mxu0 0.0
  %3385 = vmatprep.subr.mxu0 0.0
  %3386 = vmatpush1.xpose.msra.mxu0 0.0
  %3387 = vmatprep.subr.mxu0 0.0
  %3388 = vmatpush1.xpose.msra.mxu0 0.0
  %3389 = vmatprep.subr.mxu0 0.0
  %3390 = vmatpush1.xpose.msra.mxu0 0.0
  %3391 = vmatprep.subr.mxu0 0.0
  %3392 = vmatpush1.xpose.msra.mxu0 0.0
  %3393 = vmatprep.subr.mxu0 0.0
  %3394 = vmatpush1.xpose.msra.mxu0 0.0
  %3395 = vmatprep.subr.mxu0 0.0
  %3396 = vmatpush1.xpose.msra.mxu0 0.0
  %3397 = vmatprep.subr.mxu0 0.0
  %3398 = vmatpush1.xpose.msra.mxu0 0.0
  %3399 = vmatprep.subr.mxu0 0.0
  %3400 = vmatpush1.xpose.msra.mxu0 0.0
  %3401 = vmatprep.subr.mxu0 0.0
  %3402 = vmatpush1.xpose.msra.mxu0 0.0
  %3403 = vmatprep.subr.mxu0 0.0
  %3404 = vmatpush1.xpose.msra.mxu0 0.0
  %3405 = vmatprep.subr.mxu0 0.0
  %3406 = vmatpush1.xpose.msra.mxu0 0.0
  %3407 = vmatprep.subr.mxu0 0.0
  %3408 = vmatpush1.xpose.msra.mxu0 0.0
  %3409 = vmatprep.subr.mxu0 0.0
  %3410 = vmatpush1.xpose.msra.mxu0 0.0
  %3411 = vmatprep.subr.mxu0 0.0
  %3412 = vmatpush1.xpose.msra.mxu0 0.0
  %3413 = vmatprep.mubr.f32.mxu0 0.0
  %3414 = vmatmul.mubr.f32.gmra.mrb[0].mxu0 %v3345
  %v3415 = vpop.f32.mrb[0].mxu0
  %v3416 = vadd.f32 0.0, %v3415
  %v3417 = vpop.f32.mrb[0].mxu0
  %3418 = vdwg.mxu0
  %v3419 = vsel %vm352, %v3338, -inf
  %3420 = vmax.xlane.f32.xlu0 %v3419
  %v3421 = vpop.xlane.xlu0 %3420
  %v3422 = vsel %vm352, %v3416, -inf
  %3423 = vmax.xlane.f32.xlu0 %v3422
  %v3424 = vpop.xlane.xlu0 %3423
  %v3425 = vsub.f32 %v3338, %v3421
  %v3426 = vsub.f32 %v3416, %v3424
  %v3427 = vmul.f32 %v3425, 1.442695
  %v3428 = vpow.pop %v3427
  %v3429 = vmul.f32 %v3426, 1.442695
  %v3430 = vpow.pop %v3429
  %v3431 = vsel %vm352, %v3428, 0.0
  %3432 = vadd.xlane.f32.xlu0 %v3431
  %v3433 = vpop.xlane.xlu0 %3432
  %v3434 = vsel %vm352, %v3430, 0.0
  %3435 = vadd.xlane.f32.xlu0 %v3434
  %v3436 = vpop.xlane.xlu0 %3435
  %v3437 = vrcp.pop %v3433
  %v3438 = vmul.f32 %v3428, %v3437
  %v3439 = vrcp.pop %v3436
  %v3440 = vmul.f32 %v3430, %v3439
  %3441 = vrot.lane.b32.xlu0 %v2273, 104
  %v3442 = vpop.permute.xlu0 %3441
  %v3445 = vsel %vm352, %v3438, 0
  %3447 = vmatprep.subr.mxu0 0.0
  %3448 = vmatpush1.msra.mxu0 %v3442
  %3449 = vmatprep.subr.mxu0 0.0
  %3450 = vmatpush1.msra.mxu0 0.0
  %3451 = vmatprep.subr.mxu0 0.0
  %3452 = vmatpush1.msra.mxu0 0.0
  %3453 = vmatprep.subr.mxu0 0.0
  %3454 = vmatpush1.msra.mxu0 0.0
  %3455 = vmatprep.subr.mxu0 0.0
  %3456 = vmatpush1.msra.mxu0 0.0
  %3457 = vmatprep.subr.mxu0 0.0
  %3458 = vmatpush1.msra.mxu0 0.0
  %3459 = vmatprep.subr.mxu0 0.0
  %3460 = vmatpush1.msra.mxu0 0.0
  %3461 = vmatprep.subr.mxu0 0.0
  %3462 = vmatpush1.msra.mxu0 0.0
  %3463 = vmatprep.subr.mxu0 0.0
  %3464 = vmatpush1.msra.mxu0 0.0
  %3465 = vmatprep.subr.mxu0 0.0
  %3466 = vmatpush1.msra.mxu0 0.0
  %3467 = vmatprep.subr.mxu0 0.0
  %3468 = vmatpush1.msra.mxu0 0.0
  %3469 = vmatprep.subr.mxu0 0.0
  %3470 = vmatpush1.msra.mxu0 0.0
  %3471 = vmatprep.subr.mxu0 0.0
  %3472 = vmatpush1.msra.mxu0 0.0
  %3473 = vmatprep.subr.mxu0 0.0
  %3474 = vmatpush1.msra.mxu0 0.0
  %3475 = vmatprep.subr.mxu0 0.0
  %3476 = vmatpush1.msra.mxu0 0.0
  %3477 = vmatprep.subr.mxu0 0.0
  %3478 = vmatpush1.msra.mxu0 0.0
  %3479 = vmatprep.subr.mxu0 0.0
  %3480 = vmatpush1.msra.mxu0 0.0
  %3481 = vmatprep.subr.mxu0 0.0
  %3482 = vmatpush1.msra.mxu0 0.0
  %3483 = vmatprep.subr.mxu0 0.0
  %3484 = vmatpush1.msra.mxu0 0.0
  %3485 = vmatprep.subr.mxu0 0.0
  %3486 = vmatpush1.msra.mxu0 0.0
  %3487 = vmatprep.subr.mxu0 0.0
  %3488 = vmatpush1.msra.mxu0 0.0
  %3489 = vmatprep.subr.mxu0 0.0
  %3490 = vmatpush1.msra.mxu0 0.0
  %3491 = vmatprep.subr.mxu0 0.0
  %3492 = vmatpush1.msra.mxu0 0.0
  %3493 = vmatprep.subr.mxu0 0.0
  %3494 = vmatpush1.msra.mxu0 0.0
  %3495 = vmatprep.subr.mxu0 0.0
  %3496 = vmatpush1.msra.mxu0 0.0
  %3497 = vmatprep.subr.mxu0 0.0
  %3498 = vmatpush1.msra.mxu0 0.0
  %3499 = vmatprep.subr.mxu0 0.0
  %3500 = vmatpush1.msra.mxu0 0.0
  %3501 = vmatprep.subr.mxu0 0.0
  %3502 = vmatpush1.msra.mxu0 0.0
  %3503 = vmatprep.subr.mxu0 0.0
  %3504 = vmatpush1.msra.mxu0 0.0
  %3505 = vmatprep.subr.mxu0 0.0
  %3506 = vmatpush1.msra.mxu0 0.0
  %3507 = vmatprep.subr.mxu0 0.0
  %3508 = vmatpush1.msra.mxu0 0.0
  %3509 = vmatprep.subr.mxu0 0.0
  %3510 = vmatpush1.msra.mxu0 0.0
  %3511 = vmatprep.mubr.f32.mxu0 0.0
  %3512 = vmatmul.mubr.f32.gmra.mrb[0].mxu0 %v3445
  %v3513 = vpop.f32.mrb[0].mxu0
  %v3514 = vadd.f32 0.0, %v3513
  %v3515 = vpop.f32.mrb[0].mxu0
  %3516 = vdwg.mxu0
  %3517 = vrot.lane.b32.xlu0 %v2278, 104
  %v3518 = vpop.permute.xlu0 %3517
  %v3521 = vsel %vm352, %v3440, 0
  %3523 = vmatprep.subr.mxu0 0.0
  %3524 = vmatpush1.msra.mxu0 %v3518
  %3525 = vmatprep.subr.mxu0 0.0
  %3526 = vmatpush1.msra.mxu0 0.0
  %3527 = vmatprep.subr.mxu0 0.0
  %3528 = vmatpush1.msra.mxu0 0.0
  %3529 = vmatprep.subr.mxu0 0.0
  %3530 = vmatpush1.msra.mxu0 0.0
  %3531 = vmatprep.subr.mxu0 0.0
  %3532 = vmatpush1.msra.mxu0 0.0
  %3533 = vmatprep.subr.mxu0 0.0
  %3534 = vmatpush1.msra.mxu0 0.0
  %3535 = vmatprep.subr.mxu0 0.0
  %3536 = vmatpush1.msra.mxu0 0.0
  %3537 = vmatprep.subr.mxu0 0.0
  %3538 = vmatpush1.msra.mxu0 0.0
  %3539 = vmatprep.subr.mxu0 0.0
  %3540 = vmatpush1.msra.mxu0 0.0
  %3541 = vmatprep.subr.mxu0 0.0
  %3542 = vmatpush1.msra.mxu0 0.0
  %3543 = vmatprep.subr.mxu0 0.0
  %3544 = vmatpush1.msra.mxu0 0.0
  %3545 = vmatprep.subr.mxu0 0.0
  %3546 = vmatpush1.msra.mxu0 0.0
  %3547 = vmatprep.subr.mxu0 0.0
  %3548 = vmatpush1.msra.mxu0 0.0
  %3549 = vmatprep.subr.mxu0 0.0
  %3550 = vmatpush1.msra.mxu0 0.0
  %3551 = vmatprep.subr.mxu0 0.0
  %3552 = vmatpush1.msra.mxu0 0.0
  %3553 = vmatprep.subr.mxu0 0.0
  %3554 = vmatpush1.msra.mxu0 0.0
  %3555 = vmatprep.subr.mxu0 0.0
  %3556 = vmatpush1.msra.mxu0 0.0
  %3557 = vmatprep.subr.mxu0 0.0
  %3558 = vmatpush1.msra.mxu0 0.0
  %3559 = vmatprep.subr.mxu0 0.0
  %3560 = vmatpush1.msra.mxu0 0.0
  %3561 = vmatprep.subr.mxu0 0.0
  %3562 = vmatpush1.msra.mxu0 0.0
  %3563 = vmatprep.subr.mxu0 0.0
  %3564 = vmatpush1.msra.mxu0 0.0
  %3565 = vmatprep.subr.mxu0 0.0
  %3566 = vmatpush1.msra.mxu0 0.0
  %3567 = vmatprep.subr.mxu0 0.0
  %3568 = vmatpush1.msra.mxu0 0.0
  %3569 = vmatprep.subr.mxu0 0.0
  %3570 = vmatpush1.msra.mxu0 0.0
  %3571 = vmatprep.subr.mxu0 0.0
  %3572 = vmatpush1.msra.mxu0 0.0
  %3573 = vmatprep.subr.mxu0 0.0
  %3574 = vmatpush1.msra.mxu0 0.0
  %3575 = vmatprep.subr.mxu0 0.0
  %3576 = vmatpush1.msra.mxu0 0.0
  %3577 = vmatprep.subr.mxu0 0.0
  %3578 = vmatpush1.msra.mxu0 0.0
  %3579 = vmatprep.subr.mxu0 0.0
  %3580 = vmatpush1.msra.mxu0 0.0
  %3581 = vmatprep.subr.mxu0 0.0
  %3582 = vmatpush1.msra.mxu0 0.0
  %3583 = vmatprep.subr.mxu0 0.0
  %3584 = vmatpush1.msra.mxu0 0.0
  %3585 = vmatprep.subr.mxu0 0.0
  %3586 = vmatpush1.msra.mxu0 0.0
  %3587 = vmatprep.mubr.f32.mxu0 0.0
  %3588 = vmatmul.mubr.f32.gmra.mrb[0].mxu0 %v3521
  %v3589 = vpop.f32.mrb[0].mxu0
  %v3590 = vadd.f32 0.0, %v3589
  %v3591 = vpop.f32.mrb[0].mxu0
  %3592 = vdwg.mxu0
  %3595 = vrot.lane.b32.xlu0 %v2853, 8
  %v3596 = vpop.permute.xlu0 %3595
  %3597 = vrot.lane.b32.xlu0 %v2930, 8
  %v3598 = vpop.permute.xlu0 %3597
  %3603 = vrot.lane.b32.xlu0 %v3184, 16
  %v3604 = vpop.permute.xlu0 %3603
  %3605 = vrot.lane.b32.xlu0 %v3260, 16
  %v3606 = vpop.permute.xlu0 %3605
  %3611 = vrot.lane.b32.xlu0 %v3514, 24
  %v3612 = vpop.permute.xlu0 %3611
  %3613 = vrot.lane.b32.xlu0 %v3590, 24
  %v3614 = vpop.permute.xlu0 %3613
  %v3617 = vsel %vm352, %v2525, %v3596
  %v3618 = vsel %vm352, %v2598, %v3598
  %v3619 = vsel %vm1691, %v3617, %v3604
  %v3620 = vsel %vm1691, %v3618, %v3606
  %v3621 = vsel %vm1694, %v3619, %v3612
  %v3622 = vsel %vm1694, %v3620, %v3614
  %v3624 = vsel %vm108, %v3621, 0
  %v3627 = vsel %vm108, %v3622, 0
  %3629 = vmatprep.subr.mxu0 0.0
  %3630 = vmatpush1.msra.mxu0 %v76
  %3631 = vmatprep.subr.mxu0 0.0
  %3632 = vmatpush1.msra.mxu0 %v77
  %3633 = vmatprep.subr.mxu0 0.0
  %3634 = vmatpush1.msra.mxu0 %v78
  %3635 = vmatprep.subr.mxu0 0.0
  %3636 = vmatpush1.msra.mxu0 %v79
  %3637 = vmatprep.subr.mxu0 0.0
  %3638 = vmatpush1.msra.mxu0 0.0
  %3639 = vmatprep.subr.mxu0 0.0
  %3640 = vmatpush1.msra.mxu0 0.0
  %3641 = vmatprep.subr.mxu0 0.0
  %3642 = vmatpush1.msra.mxu0 0.0
  %3643 = vmatprep.subr.mxu0 0.0
  %3644 = vmatpush1.msra.mxu0 0.0
  %3645 = vmatprep.subr.mxu0 0.0
  %3646 = vmatpush1.msra.mxu0 0.0
  %3647 = vmatprep.subr.mxu0 0.0
  %3648 = vmatpush1.msra.mxu0 0.0
  %3649 = vmatprep.subr.mxu0 0.0
  %3650 = vmatpush1.msra.mxu0 0.0
  %3651 = vmatprep.subr.mxu0 0.0
  %3652 = vmatpush1.msra.mxu0 0.0
  %3653 = vmatprep.subr.mxu0 0.0
  %3654 = vmatpush1.msra.mxu0 0.0
  %3655 = vmatprep.subr.mxu0 0.0
  %3656 = vmatpush1.msra.mxu0 0.0
  %3657 = vmatprep.subr.mxu0 0.0
  %3658 = vmatpush1.msra.mxu0 0.0
  %3659 = vmatprep.subr.mxu0 0.0
  %3660 = vmatpush1.msra.mxu0 0.0
  %3661 = vmatprep.subr.mxu0 0.0
  %3662 = vmatpush1.msra.mxu0 0.0
  %3663 = vmatprep.subr.mxu0 0.0
  %3664 = vmatpush1.msra.mxu0 0.0
  %3665 = vmatprep.subr.mxu0 0.0
  %3666 = vmatpush1.msra.mxu0 0.0
  %3667 = vmatprep.subr.mxu0 0.0
  %3668 = vmatpush1.msra.mxu0 0.0
  %3669 = vmatprep.subr.mxu0 0.0
  %3670 = vmatpush1.msra.mxu0 0.0
  %3671 = vmatprep.subr.mxu0 0.0
  %3672 = vmatpush1.msra.mxu0 0.0
  %3673 = vmatprep.subr.mxu0 0.0
  %3674 = vmatpush1.msra.mxu0 0.0
  %3675 = vmatprep.subr.mxu0 0.0
  %3676 = vmatpush1.msra.mxu0 0.0
  %3677 = vmatprep.subr.mxu0 0.0
  %3678 = vmatpush1.msra.mxu0 0.0
  %3679 = vmatprep.subr.mxu0 0.0
  %3680 = vmatpush1.msra.mxu0 0.0
  %3681 = vmatprep.subr.mxu0 0.0
  %3682 = vmatpush1.msra.mxu0 0.0
  %3683 = vmatprep.subr.mxu0 0.0
  %3684 = vmatpush1.msra.mxu0 0.0
  %3685 = vmatprep.subr.mxu0 0.0
  %3686 = vmatpush1.msra.mxu0 0.0
  %3687 = vmatprep.subr.mxu0 0.0
  %3688 = vmatpush1.msra.mxu0 0.0
  %3689 = vmatprep.subr.mxu0 0.0
  %3690 = vmatpush1.msra.mxu0 0.0
  %3691 = vmatprep.subr.mxu0 0.0
  %3692 = vmatpush1.msra.mxu0 0.0
  %3693 = vmatprep.mubr.f32.mxu0 0.0
  %3694 = vmatmul.mubr.f32.gmra.mrb[0].mxu0 %v3624
  %v3695 = vpop.f32.mrb[0].mxu0
  %v3696 = vadd.f32 %v1701, %v3695
  %v3697 = vpop.f32.mrb[0].mxu0
  %3698 = vmatprep.mubr.f32.mxu0 0.0
  %3699 = vmatmul.mubr.f32.gmra.mrb[0].mxu0 %v3627
  %v3700 = vpop.f32.mrb[0].mxu0
  %v3701 = vadd.f32 %v1701, %v3700
  %v3702 = vpop.f32.mrb[0].mxu0
  %3703 = vdwg.mxu0
  %v3704 = vadd.f32 %v2048, %v3696
  %v3705 = vadd.f32 %v2049, %v3701
  %v3706 = vsel %vm108, %v3704, 0.0
  %3707 = vadd.xlane.f32.xlu0 %v3706
  %v3708 = vpop.xlane.xlu0 %3707
  %v3709 = vsel %vm108, %v3705, 0.0
  %3710 = vadd.xlane.f32.xlu0 %v3709
  %v3711 = vpop.xlane.xlu0 %3710
  %v3712 = vmul.f32 %v3708, %v1792
  %v3713 = vmul.f32 %v3711, %v1792
  %v3714 = vsub.f32 %v3704, %v3712
  %v3715 = vsub.f32 %v3705, %v3713
  %v3716 = vmul.f32 %v3714, %v3714
  %v3717 = vmul.f32 %v3715, %v3715
  %v3718 = vsel %vm108, %v3716, 0.0
  %3719 = vadd.xlane.f32.xlu0 %v3718
  %v3720 = vpop.xlane.xlu0 %3719
  %v3721 = vsel %vm108, %v3717, 0.0
  %3722 = vadd.xlane.f32.xlu0 %v3721
  %v3723 = vpop.xlane.xlu0 %3722
  %v3724 = vmul.f32 %v3720, %v1792
  %v3725 = vmul.f32 %v3723, %v1792
  %v3726 = vadd.f32 %v3724, 1e-05
  %v3727 = vadd.f32 %v3725, 1e-05
  %v3728 = vrsqrt.pop %v3726
  %v3729 = vrsqrt.pop %v3727
  %v3730 = vmul.f32 %v3714, %v3728
  %v3731 = vmul.f32 %v3715, %v3729
  %v3732 = vmul.f32 %v3730, %v1817
  %v3733 = vmul.f32 %v3731, %v1817
  %v3734 = vadd.f32 %v3732, %v1825
  %v3735 = vadd.f32 %v3733, %v1825
  %v3737 = vsel %vm108, %v3734, 0
  %v3740 = vsel %vm108, %v3735, 0
  %3742 = vmatprep.subr.mxu0 0.0
  %3743 = vmatpush1.msra.mxu0 %v80
  %3744 = vmatprep.subr.mxu0 0.0
  %3745 = vmatpush1.msra.mxu0 %v81
  %3746 = vmatprep.subr.mxu0 0.0
  %3747 = vmatpush1.msra.mxu0 %v82
  %3748 = vmatprep.subr.mxu0 0.0
  %3749 = vmatpush1.msra.mxu0 %v83
  %3750 = vmatprep.subr.mxu0 0.0
  %3751 = vmatpush1.msra.mxu0 0.0
  %3752 = vmatprep.subr.mxu0 0.0
  %3753 = vmatpush1.msra.mxu0 0.0
  %3754 = vmatprep.subr.mxu0 0.0
  %3755 = vmatpush1.msra.mxu0 0.0
  %3756 = vmatprep.subr.mxu0 0.0
  %3757 = vmatpush1.msra.mxu0 0.0
  %3758 = vmatprep.subr.mxu0 0.0
  %3759 = vmatpush1.msra.mxu0 0.0
  %3760 = vmatprep.subr.mxu0 0.0
  %3761 = vmatpush1.msra.mxu0 0.0
  %3762 = vmatprep.subr.mxu0 0.0
  %3763 = vmatpush1.msra.mxu0 0.0
  %3764 = vmatprep.subr.mxu0 0.0
  %3765 = vmatpush1.msra.mxu0 0.0
  %3766 = vmatprep.subr.mxu0 0.0
  %3767 = vmatpush1.msra.mxu0 0.0
  %3768 = vmatprep.subr.mxu0 0.0
  %3769 = vmatpush1.msra.mxu0 0.0
  %3770 = vmatprep.subr.mxu0 0.0
  %3771 = vmatpush1.msra.mxu0 0.0
  %3772 = vmatprep.subr.mxu0 0.0
  %3773 = vmatpush1.msra.mxu0 0.0
  %3774 = vmatprep.subr.mxu0 0.0
  %3775 = vmatpush1.msra.mxu0 0.0
  %3776 = vmatprep.subr.mxu0 0.0
  %3777 = vmatpush1.msra.mxu0 0.0
  %3778 = vmatprep.subr.mxu0 0.0
  %3779 = vmatpush1.msra.mxu0 0.0
  %3780 = vmatprep.subr.mxu0 0.0
  %3781 = vmatpush1.msra.mxu0 0.0
  %3782 = vmatprep.subr.mxu0 0.0
  %3783 = vmatpush1.msra.mxu0 0.0
  %3784 = vmatprep.subr.mxu0 0.0
  %3785 = vmatpush1.msra.mxu0 0.0
  %3786 = vmatprep.subr.mxu0 0.0
  %3787 = vmatpush1.msra.mxu0 0.0
  %3788 = vmatprep.subr.mxu0 0.0
  %3789 = vmatpush1.msra.mxu0 0.0
  %3790 = vmatprep.subr.mxu0 0.0
  %3791 = vmatpush1.msra.mxu0 0.0
  %3792 = vmatprep.subr.mxu0 0.0
  %3793 = vmatpush1.msra.mxu0 0.0
  %3794 = vmatprep.subr.mxu0 0.0
  %3795 = vmatpush1.msra.mxu0 0.0
  %3796 = vmatprep.subr.mxu0 0.0
  %3797 = vmatpush1.msra.mxu0 0.0
  %3798 = vmatprep.subr.mxu0 0.0
  %3799 = vmatpush1.msra.mxu0 0.0
  %3800 = vmatprep.subr.mxu0 0.0
  %3801 = vmatpush1.msra.mxu0 0.0
  %3802 = vmatprep.subr.mxu0 0.0
  %3803 = vmatpush1.msra.mxu0 0.0
  %3804 = vmatprep.subr.mxu0 0.0
  %3805 = vmatpush1.msra.mxu0 0.0
  %3806 = vmatprep.mubr.f32.mxu0 0.0
  %3807 = vmatmul.mubr.f32.gmra.mrb[0].mxu0 %v3737
  %v3808 = vpop.f32.mrb[0].mxu0
  %v3809 = vadd.f32 %v1833, %v3808
  %v3810 = vpop.f32.mrb[0].mxu0
  %3811 = vmatprep.mubr.f32.mxu0 0.0
  %3812 = vmatmul.mubr.f32.gmra.mrb[0].mxu0 %v3740
  %v3813 = vpop.f32.mrb[0].mxu0
  %v3814 = vadd.f32 %v1833, %v3813
  %v3815 = vpop.f32.mrb[0].mxu0
  %3816 = vdwg.mxu0
  %v3817 = vmax.f32 %v3809, 0.0
  %v3818 = vmax.f32 %v3814, 0.0
  %v3820 = vsel %vm1924, %v3817, 0
  %v3823 = vsel %vm1924, %v3818, 0
  %3825 = vmatprep.subr.mxu0 0.0
  %3826 = vmatpush1.msra.mxu0 %v84
  %3827 = vmatprep.subr.mxu0 0.0
  %3828 = vmatpush1.msra.mxu0 %v85
  %3829 = vmatprep.subr.mxu0 0.0
  %3830 = vmatpush1.msra.mxu0 %v86
  %3831 = vmatprep.subr.mxu0 0.0
  %3832 = vmatpush1.msra.mxu0 %v87
  %3833 = vmatprep.subr.mxu0 0.0
  %3834 = vmatpush1.msra.mxu0 %v88
  %3835 = vmatprep.subr.mxu0 0.0
  %3836 = vmatpush1.msra.mxu0 %v89
  %3837 = vmatprep.subr.mxu0 0.0
  %3838 = vmatpush1.msra.mxu0 %v90
  %3839 = vmatprep.subr.mxu0 0.0
  %3840 = vmatpush1.msra.mxu0 %v91
  %3841 = vmatprep.subr.mxu0 0.0
  %3842 = vmatpush1.msra.mxu0 0.0
  %3843 = vmatprep.subr.mxu0 0.0
  %3844 = vmatpush1.msra.mxu0 0.0
  %3845 = vmatprep.subr.mxu0 0.0
  %3846 = vmatpush1.msra.mxu0 0.0
  %3847 = vmatprep.subr.mxu0 0.0
  %3848 = vmatpush1.msra.mxu0 0.0
  %3849 = vmatprep.subr.mxu0 0.0
  %3850 = vmatpush1.msra.mxu0 0.0
  %3851 = vmatprep.subr.mxu0 0.0
  %3852 = vmatpush1.msra.mxu0 0.0
  %3853 = vmatprep.subr.mxu0 0.0
  %3854 = vmatpush1.msra.mxu0 0.0
  %3855 = vmatprep.subr.mxu0 0.0
  %3856 = vmatpush1.msra.mxu0 0.0
  %3857 = vmatprep.subr.mxu0 0.0
  %3858 = vmatpush1.msra.mxu0 0.0
  %3859 = vmatprep.subr.mxu0 0.0
  %3860 = vmatpush1.msra.mxu0 0.0
  %3861 = vmatprep.subr.mxu0 0.0
  %3862 = vmatpush1.msra.mxu0 0.0
  %3863 = vmatprep.subr.mxu0 0.0
  %3864 = vmatpush1.msra.mxu0 0.0
  %3865 = vmatprep.subr.mxu0 0.0
  %3866 = vmatpush1.msra.mxu0 0.0
  %3867 = vmatprep.subr.mxu0 0.0
  %3868 = vmatpush1.msra.mxu0 0.0
  %3869 = vmatprep.subr.mxu0 0.0
  %3870 = vmatpush1.msra.mxu0 0.0
  %3871 = vmatprep.subr.mxu0 0.0
  %3872 = vmatpush1.msra.mxu0 0.0
  %3873 = vmatprep.subr.mxu0 0.0
  %3874 = vmatpush1.msra.mxu0 0.0
  %3875 = vmatprep.subr.mxu0 0.0
  %3876 = vmatpush1.msra.mxu0 0.0
  %3877 = vmatprep.subr.mxu0 0.0
  %3878 = vmatpush1.msra.mxu0 0.0
  %3879 = vmatprep.subr.mxu0 0.0
  %3880 = vmatpush1.msra.mxu0 0.0
  %3881 = vmatprep.subr.mxu0 0.0
  %3882 = vmatpush1.msra.mxu0 0.0
  %3883 = vmatprep.subr.mxu0 0.0
  %3884 = vmatpush1.msra.mxu0 0.0
  %3885 = vmatprep.subr.mxu0 0.0
  %3886 = vmatpush1.msra.mxu0 0.0
  %3887 = vmatprep.subr.mxu0 0.0
  %3888 = vmatpush1.msra.mxu0 0.0
  %3889 = vmatprep.mubr.f32.mxu0 0.0
  %3890 = vmatmul.mubr.f32.gmra.mrb[0].mxu0 %v3820
  %v3891 = vpop.f32.mrb[0].mxu0
  %v3892 = vadd.f32 %v1922, %v3891
  %v3893 = vpop.f32.mrb[0].mxu0
  %3894 = vmatprep.mubr.f32.mxu0 0.0
  %3895 = vmatmul.mubr.f32.gmra.mrb[0].mxu0 %v3823
  %v3896 = vpop.f32.mrb[0].mxu0
  %v3897 = vadd.f32 %v1922, %v3896
  %v3898 = vpop.f32.mrb[0].mxu0
  %3899 = vdwg.mxu0
  %v3900 = vadd.f32 %v3734, %v3892
  %v3901 = vadd.f32 %v3735, %v3897
  %v3902 = vsel %vm108, %v3900, 0.0
  %3903 = vadd.xlane.f32.xlu0 %v3902
  %v3904 = vpop.xlane.xlu0 %3903
  %v3905 = vsel %vm108, %v3901, 0.0
  %3906 = vadd.xlane.f32.xlu0 %v3905
  %v3907 = vpop.xlane.xlu0 %3906
  %v3908 = vmul.f32 %v3904, %v1792
  %v3909 = vmul.f32 %v3907, %v1792
  %v3910 = vsub.f32 %v3900, %v3908
  %v3911 = vsub.f32 %v3901, %v3909
  %v3912 = vmul.f32 %v3910, %v3910
  %v3913 = vmul.f32 %v3911, %v3911
  %v3914 = vsel %vm108, %v3912, 0.0
  %3915 = vadd.xlane.f32.xlu0 %v3914
  %v3916 = vpop.xlane.xlu0 %3915
  %v3917 = vsel %vm108, %v3913, 0.0
  %3918 = vadd.xlane.f32.xlu0 %v3917
  %v3919 = vpop.xlane.xlu0 %3918
  %v3920 = vmul.f32 %v3916, %v1792
  %v3921 = vmul.f32 %v3919, %v1792
  %v3922 = vadd.f32 %v3920, 1e-05
  %v3923 = vadd.f32 %v3921, 1e-05
  %v3924 = vrsqrt.pop %v3922
  %v3925 = vrsqrt.pop %v3923
  %v3926 = vmul.f32 %v3910, %v3924
  %v3927 = vmul.f32 %v3911, %v3925
  %v3928 = vmul.f32 %v3926, %v2038
  %v3929 = vmul.f32 %v3927, %v2038
  %v3930 = vadd.f32 %v3928, %v2046
  %v3931 = vadd.f32 %v3929, %v2046
  %3932 = vst.msk [vmem:[%s18] sm:$0xff] %vm108, %v3930
  %3933 = vst.msk [vmem:[%s18 + $0x8] sm:$0xff] %vm108, %v3931
  // Predicated region
  $region74: #{transformer_model_encoder.1} parent=0 // pred_check
    _
  $region75: #{transformer_model_encoder.1} parent=0 // pred_check_branch
    %3935 = sbr.rel (0) target = $region77
  $region76: #{transformer_model_encoder.1} parent=0 // pred_region
    _
  $region77: #{transformer_model_encoder.1} parent=0 // pred_fallthru
    _
  // Predicated region
  $region78: #{transformer_model_encoder.1} parent=0 // pred_check
    _
  $region79: #{transformer_model_encoder.1} parent=0 // pred_check_branch
    %3937 = sbr.rel (0) target = $region81
  $region80: #{transformer_model_encoder.1} parent=0 // pred_region
    _
  $region81: #{transformer_model_encoder.1} parent=0 // pred_fallthru
    _

</llo_original>
